<compile_context>
chip_gen: v5e
topology: v5e:2x2
jax: 0.10.0
libtpu: 0.0.40
codegen_flags: <defaults>
</compile_context>

<pallas_src>
import functools
import math

import jax
import jax.numpy as jnp
from jax.experimental import pallas as pl
from jax.experimental.pallas import tpu as pltpu


# ---------------------------------------------------------------------------
# Tiling helper: largest power-of-two fraction of `target` that divides `dim`
# (keeps blocks MXU/lane aligned); falls back to the full dim (the "equals full
# array dim" escape hatch of the (8,128) rule) for small demo shapes.
# ---------------------------------------------------------------------------
def _tile(dim, target, min_tile):
    t = target
    while t >= min_tile:
        if dim % t == 0:
            return t
        t //= 2
    return dim


# ---------------------------------------------------------------------------
# Exact-erf GELU, evaluated with the Abramowitz & Stegun 7.1.26 polynomial
# (max abs error ~1.5e-7) so it lowers in-kernel with exp/mul/add only.
# ---------------------------------------------------------------------------
def _erf_approx(x):
    a1, a2, a3, a4, a5 = 0.254829592, -0.284496736, 1.421413741, -1.453152027, 1.061405429
    p = 0.3275911
    ax = jnp.abs(x)
    t = 1.0 / (1.0 + p * ax)
    poly = ((((a5 * t + a4) * t + a3) * t + a2) * t + a1) * t
    y = 1.0 - poly * jnp.exp(-ax * ax)
    return jnp.where(x < 0.0, -y, y)


def _gelu_in_kernel(x):
    return x * 0.5 * (1.0 + _erf_approx(x * (1.0 / math.sqrt(2.0))))


# ---------------------------------------------------------------------------
# Fused dense: y = act(x @ W + b), bf16 MXU operands, f32 VMEM accumulator.
# ---------------------------------------------------------------------------
def _dense_kernel(x_ref, w_ref, b_ref, o_ref, acc_ref, *, activation):
    k = pl.program_id(2)

    @pl.when(k == 0)
    def _init():
        acc_ref[...] = jnp.zeros_like(acc_ref)

    acc_ref[...] += jnp.dot(x_ref[...].astype(jnp.bfloat16), w_ref[...],
                            preferred_element_type=jnp.float32)

    @pl.when(k == pl.num_programs(2) - 1)
    def _finalize():
        h = acc_ref[...] + b_ref[...]           # (1, tn) bias broadcasts over rows
        if activation == "tanh":
            h = jnp.tanh(h)
        elif activation == "gelu":
            h = _gelu_in_kernel(h)
        o_ref[...] = h.astype(o_ref.dtype)


def dense(x, w, b, activation=None, out_dtype=jnp.float32,
          *, tile_m=256, tile_n=256, tile_k=512):
    M, K = x.shape
    _, N = w.shape
    tm = _tile(M, tile_m, 8)
    tn = _tile(N, tile_n, 128)
    tk = _tile(K, tile_k, 128)
    kernel = functools.partial(_dense_kernel, activation=activation)
    return pl.pallas_call(
        kernel,
        out_shape=jax.ShapeDtypeStruct((M, N), out_dtype),
        grid=(M // tm, N // tn, K // tk),     # K innermost, "arbitrary" (see note above)
        in_specs=[
            pl.BlockSpec((tm, tk), lambda i, j, k: (i, k)),
            pl.BlockSpec((tk, tn), lambda i, j, k: (k, j)),
            pl.BlockSpec((1, tn), lambda i, j, k: (0, j)),
        ],
        out_specs=pl.BlockSpec((tm, tn), lambda i, j, k: (i, j)),
        scratch_shapes=[pltpu.VMEM((tm, tn), jnp.float32)],
        compiler_params=pltpu.CompilerParams(
            dimension_semantics=("parallel", "parallel", "arbitrary")),
    )(x, w.astype(jnp.bfloat16), b.reshape(1, -1).astype(jnp.float32))


# ---------------------------------------------------------------------------
# Fused dense + residual add + BERTLayerNorm (TF-style, eps inside the sqrt).
# N (hidden) is kept untiled so the row-wise LN reduction stays in one block.
# ---------------------------------------------------------------------------
def _dense_add_ln_kernel(x_ref, w_ref, b_ref, r_ref, g_ref, bb_ref, o_ref, acc_ref, *, eps):
    k = pl.program_id(1)

    @pl.when(k == 0)
    def _init():
        acc_ref[...] = jnp.zeros_like(acc_ref)

    acc_ref[...] += jnp.dot(x_ref[...].astype(jnp.bfloat16), w_ref[...],
                            preferred_element_type=jnp.float32)

    @pl.when(k == pl.num_programs(1) - 1)
    def _finalize():
        h = acc_ref[...] + b_ref[...] + r_ref[...].astype(jnp.float32)
        u = jnp.mean(h, axis=-1, keepdims=True)
        d = h - u
        var = jnp.mean(d * d, axis=-1, keepdims=True)
        o_ref[...] = (d * jax.lax.rsqrt(var + eps) * g_ref[...] + bb_ref[...]
                      ).astype(o_ref.dtype)


def dense_add_ln(x, w, b, residual, gamma, beta, *, eps=1e-12, tile_m=256, tile_k=512):
    M, K = x.shape
    _, N = w.shape
    tm = _tile(M, tile_m, 8)
    tk = _tile(K, tile_k, 128)
    kernel = functools.partial(_dense_add_ln_kernel, eps=eps)
    return pl.pallas_call(
        kernel,
        out_shape=jax.ShapeDtypeStruct((M, N), jnp.float32),
        grid=(M // tm, K // tk),
        in_specs=[
            pl.BlockSpec((tm, tk), lambda i, k: (i, k)),
            pl.BlockSpec((tk, N), lambda i, k: (k, 0)),
            pl.BlockSpec((1, N), lambda i, k: (0, 0)),
            pl.BlockSpec((tm, N), lambda i, k: (i, 0)),
            pl.BlockSpec((1, N), lambda i, k: (0, 0)),
            pl.BlockSpec((1, N), lambda i, k: (0, 0)),
        ],
        out_specs=pl.BlockSpec((tm, N), lambda i, k: (i, 0)),
        scratch_shapes=[pltpu.VMEM((tm, N), jnp.float32)],
        compiler_params=pltpu.CompilerParams(
            dimension_semantics=("parallel", "arbitrary")),
    )(x, w.astype(jnp.bfloat16), b.reshape(1, -1).astype(jnp.float32), residual,
      gamma.reshape(1, -1).astype(jnp.float32), beta.reshape(1, -1).astype(jnp.float32))


# ---------------------------------------------------------------------------
# Fused multi-head self-attention.
# Reads q/k/v as column blocks of the (B, S, 3H) QKV tensor (no head transpose),
# processes `hpb` heads per grid step (lane-dense 128-wide output block), writes
# ctx straight into (B, S, H) layout.
# ---------------------------------------------------------------------------
def _attn_kernel(q_ref, k_ref, v_ref, m_ref, o_ref, *, scale, hpb, dh):
    m = m_ref[...]                                       # (1, S) additive mask, f32
    q_all = q_ref[...]                                   # (S, hpb*dh) bf16
    k_all = k_ref[...]
    v_all = v_ref[...]
    for h in range(hpb):                                 # static loop over packed heads
        cs = h * dh
        q = q_all[:, cs:cs + dh]
        k = k_all[:, cs:cs + dh]
        v = v_all[:, cs:cs + dh]
        s = jax.lax.dot_general(q, k, (((1,), (1,)), ((), ())),
                                preferred_element_type=jnp.float32) * scale
        s = s + m
        s = s - jnp.max(s, axis=-1, keepdims=True)
        p = jnp.exp(s)
        p = p * pl.reciprocal(jnp.sum(p, axis=-1, keepdims=True), approx=True)
        # TODO(synk): attention_probs dropout (rate > 0) would need pltpu.prng_*; identity at eval.
        ctx = jnp.dot(p.astype(v.dtype), v, preferred_element_type=jnp.float32)
        o_ref[:, cs:cs + dh] = ctx.astype(o_ref.dtype)
    # TODO(synk): for long sequences, tile the query axis with online-softmax
    # accumulators (flash-style) instead of materializing the full (S, S) scores.


def _heads_per_block(num_heads, head_dim, max_width=512):
    for hpb in range(1, num_heads + 1):
        if num_heads % hpb == 0 and (hpb * head_dim) % 128 == 0 and hpb * head_dim <= max_width:
            return hpb
    return num_heads   # requires num_heads*head_dim % 128 == 0 in that case


def mha_attention(qkv, mask_add, *, num_heads, head_dim, scale):
    B, S, _ = qkv.shape
    H = num_heads * head_dim
    hpb = _heads_per_block(num_heads, head_dim)
    nHb = num_heads // hpb
    kernel = functools.partial(_attn_kernel, scale=scale, hpb=hpb, dh=head_dim)

    def qkv_spec(component):   # component: 0=Q, 1=K, 2=V (column regions of the fused QKV)
        return pl.BlockSpec((pl.Squeezed(), S, hpb * head_dim),
                            lambda b, hb, c=component: (b, 0, c * nHb + hb))

    return pl.pallas_call(
        kernel,
        out_shape=jax.ShapeDtypeStruct((B, S, H), jnp.bfloat16),
        grid=(B, nHb),
        in_specs=[
            qkv_spec(0), qkv_spec(1), qkv_spec(2),
            pl.BlockSpec((pl.Squeezed(), 1, S), lambda b, hb: (b, 0, 0)),
        ],
        out_specs=pl.BlockSpec((pl.Squeezed(), S, hpb * head_dim),
                               lambda b, hb: (b, 0, hb)),
        compiler_params=pltpu.CompilerParams(
            dimension_semantics=("parallel", "parallel")),
    )(qkv, qkv, qkv, mask_add)


# ---------------------------------------------------------------------------
# Fused elementwise add + BERTLayerNorm (used for the embedding sum).
# ---------------------------------------------------------------------------
def _add_ln_kernel(x_ref, r_ref, g_ref, b_ref, o_ref, *, eps):
    h = x_ref[...] + r_ref[...]
    u = jnp.mean(h, axis=-1, keepdims=True)
    d = h - u
    var = jnp.mean(d * d, axis=-1, keepdims=True)
    o_ref[...] = d * jax.lax.rsqrt(var + eps) * g_ref[...] + b_ref[...]


def add_layer_norm(x, res, gamma, beta, *, eps=1e-12, tile_m=256):
    M, H = x.shape
    tm = _tile(M, tile_m, 8)
    kernel = functools.partial(_add_ln_kernel, eps=eps)
    return pl.pallas_call(
        kernel,
        out_shape=jax.ShapeDtypeStruct((M, H), jnp.float32),
        grid=(M // tm,),
        in_specs=[
            pl.BlockSpec((tm, H), lambda i: (i, 0)),
            pl.BlockSpec((tm, H), lambda i: (i, 0)),
            pl.BlockSpec((1, H), lambda i: (0, 0)),
            pl.BlockSpec((1, H), lambda i: (0, 0)),
        ],
        out_specs=pl.BlockSpec((tm, H), lambda i: (i, 0)),
        compiler_params=pltpu.CompilerParams(dimension_semantics=("parallel",)),
    )(x, res, gamma.reshape(1, -1), beta.reshape(1, -1))


# ---------------------------------------------------------------------------
# Model glue
# ---------------------------------------------------------------------------
def prepare_params(params):
    """One-off inference prep: fuse Q/K/V weights and pre-cast matmul weights to bf16."""
    bf = lambda t: t.astype(jnp.bfloat16)
    prepped = {
        "word_emb": params["word_emb"], "pos_emb": params["pos_emb"],
        "type_emb": params["type_emb"], "speaker_emb": params["speaker_emb"],
        "emb_ln_g": params["emb_ln_g"], "emb_ln_b": params["emb_ln_b"],
        "pooler_w": bf(params["pooler_w"]), "pooler_b": params["pooler_b"],
        "layers": [],
    }
    for lp in params["layers"]:
        prepped["layers"].append({
            "qkv_w": bf(jnp.concatenate([lp["q_w"], lp["k_w"], lp["v_w"]], axis=1)),
            "qkv_b": jnp.concatenate([lp["q_b"], lp["k_b"], lp["v_b"]]),
            "ao_w": bf(lp["ao_w"]), "ao_b": lp["ao_b"],
            "ao_ln_g": lp["ao_ln_g"], "ao_ln_b": lp["ao_ln_b"],
            "i_w": bf(lp["i_w"]), "i_b": lp["i_b"],
            "o_w": bf(lp["o_w"]), "o_b": lp["o_b"],
            "o_ln_g": lp["o_ln_g"], "o_ln_b": lp["o_ln_b"],
        })
    return prepped


def bert_forward(params, input_ids, speaker_ids, token_type_ids, attention_mask, cfg):
    B, S = input_ids.shape
    H = cfg["hidden_size"]
    nH = cfg["num_attention_heads"]
    Dh = H // nH
    scale = 1.0 / math.sqrt(Dh)

    # ---- embeddings (table gathers stay in JAX; add + LayerNorm fused in Pallas)
    pos_ids = jnp.arange(S, dtype=jnp.int32)[None, :]
    we = jnp.take(params["word_emb"], input_ids, axis=0)          # (B, S, H)
    pe = jnp.take(params["pos_emb"], pos_ids, axis=0)             # (1, S, H)
    te = jnp.take(params["type_emb"], token_type_ids, axis=0)     # (B, S, H)
    se = jnp.take(params["speaker_emb"], speaker_ids, axis=0)     # (B, S, H)
    x = (we + pe + se).reshape(B * S, H)
    h = add_layer_norm(x, te.reshape(B * S, H),
                       params["emb_ln_g"], params["emb_ln_b"])
    # TODO(synk): hidden_dropout_prob > 0 would need pltpu.prng_*; identity at eval.

    # ---- extended attention mask: (1 - mask) * -10000, broadcast over heads/queries
    mask_add = ((1.0 - attention_mask.astype(jnp.float32)) * -10000.0).reshape(B, 1, S)

    # ---- encoder layers
    for lp in params["layers"]:
        qkv = dense(h, lp["qkv_w"], lp["qkv_b"], out_dtype=jnp.bfloat16)     # (B*S, 3H)
        ctx = mha_attention(qkv.reshape(B, S, 3 * H), mask_add,
                            num_heads=nH, head_dim=Dh, scale=scale)          # (B, S, H) bf16
        attn = dense_add_ln(ctx.reshape(B * S, H), lp["ao_w"], lp["ao_b"],
                            h, lp["ao_ln_g"], lp["ao_ln_b"])                 # (B*S, H) f32
        inter = dense(attn, lp["i_w"], lp["i_b"], activation="gelu",
                      out_dtype=jnp.bfloat16)                                # (B*S, I) bf16
        h = dense_add_ln(inter, lp["o_w"], lp["o_b"],
                         attn, lp["o_ln_g"], lp["o_ln_b"])                   # (B*S, H) f32

    sequence_output = h.reshape(B, S, H)
    pooled_output = dense(sequence_output[:, 0, :],
                          params["pooler_w"], params["pooler_b"],
                          activation="tanh", out_dtype=jnp.float32)
    return sequence_output, pooled_output


# ---------------------------------------------------------------------------
# Parameters + pure-JAX references for verification
# ---------------------------------------------------------------------------
def init_params(key, cfg):
    H, I = cfg["hidden_size"], cfg["intermediate_size"]
    L, std = cfg["num_hidden_layers"], cfg["initializer_range"]
    keys = jax.random.split(key, 5 + L)
    nrm = lambda k, shape: std * jax.random.normal(k, shape, jnp.float32)
    params = {
        "word_emb":    nrm(keys[0], (cfg["vocab_size"], H)),
        "pos_emb":     nrm(keys[1], (cfg["max_position_embeddings"], H)),
        "type_emb":    nrm(keys[2], (cfg["type_vocab_size"], H)),
        "speaker_emb": nrm(keys[3], (cfg["max_position_embeddings"], H)),
        "emb_ln_g": jnp.ones((H,), jnp.float32),
        "emb_ln_b": jnp.zeros((H,), jnp.float32),
        "pooler_w": nrm(keys[4], (H, H)),
        "pooler_b": jnp.zeros((H,), jnp.float32),
        "layers": [],
    }
    for l in range(L):
        lk = jax.random.split(keys[5 + l], 6)
        params["layers"].append({
            "q_w": nrm(lk[0], (H, H)),  "q_b": jnp.zeros((H,), jnp.float32),
            "k_w": nrm(lk[1], (H, H)),  "k_b": jnp.zeros((H,), jnp.float32),
            "v_w": nrm(lk[2], (H, H)),  "v_b": jnp.zeros((H,), jnp.float32),
            "ao_w": nrm(lk[3], (H, H)), "ao_b": jnp.zeros((H,), jnp.float32),
            "ao_ln_g": jnp.ones((H,), jnp.float32),
            "ao_ln_b": jnp.zeros((H,), jnp.float32),
            "i_w": nrm(lk[4], (H, I)),  "i_b": jnp.zeros((I,), jnp.float32),
            "o_w": nrm(lk[5], (I, H)),  "o_b": jnp.zeros((H,), jnp.float32),
            "o_ln_g": jnp.ones((H,), jnp.float32),
            "o_ln_b": jnp.zeros((H,), jnp.float32),
        })
    return params


def reference_forward(params, input_ids, speaker_ids, token_type_ids, attention_mask,
                      cfg, *, mirror_bf16):
    """Pure-JAX reference. mirror_bf16=True replays the kernels' bf16-operand /
    f32-accumulate precision choices; False is the exact float32 torch semantics."""
    B, S = input_ids.shape
    H, nH = cfg["hidden_size"], cfg["num_attention_heads"]
    Dh = H // nH
    cast = (lambda t: t.astype(jnp.bfloat16)) if mirror_bf16 else (lambda t: t)

    def mm(x, w):
        return jnp.matmul(cast(x), cast(w), preferred_element_type=jnp.float32)

    def ln(x, g, b, eps=1e-12):
        u = x.mean(-1, keepdims=True)
        s = ((x - u) ** 2).mean(-1, keepdims=True)
        return g * (x - u) / jnp.sqrt(s + eps) + b

    def gelu_exact(x):
        return x * 0.5 * (1.0 + jax.lax.erf(x / math.sqrt(2.0)))

    pos_ids = jnp.arange(S, dtype=jnp.int32)[None, :]
    x = (jnp.take(params["word_emb"], input_ids, axis=0)
         + jnp.take(params["pos_emb"], pos_ids, axis=0)
         + jnp.take(params["type_emb"], token_type_ids, axis=0)
         + jnp.take(params["speaker_emb"], speaker_ids, axis=0))
    h = ln(x, params["emb_ln_g"], params["emb_ln_b"]).reshape(B * S, H)
    mask4 = ((1.0 - attention_mask.astype(jnp.float32)) * -10000.0)[:, None, None, :]

    for lp in params["layers"]:
        def heads(t):
            return jnp.transpose(t.reshape(B, S, nH, Dh), (0, 2, 1, 3))
        q = heads(cast(mm(h, lp["q_w"]) + lp["q_b"]))
        k = heads(cast(mm(h, lp["k_w"]) + lp["k_b"]))
        v = heads(cast(mm(h, lp["v_w"]) + lp["v_b"]))
        s = jnp.einsum("bhqd,bhkd->bhqk", q, k,
                       preferred_element_type=jnp.float32) / math.sqrt(Dh) + mask4
        p = jax.nn.softmax(s, axis=-1)
        ctx = cast(jnp.einsum("bhqk,bhkd->bhqd", cast(p), v,
                              preferred_element_type=jnp.float32))
        ctx = jnp.transpose(ctx, (0, 2, 1, 3)).reshape(B * S, H)
        attn = ln(mm(ctx, lp["ao_w"]) + lp["ao_b"] + h, lp["ao_ln_g"], lp["ao_ln_b"])
        inter = cast(gelu_exact(mm(attn, lp["i_w"]) + lp["i_b"]))
        h = ln(mm(inter, lp["o_w"]) + lp["o_b"] + attn, lp["o_ln_g"], lp["o_ln_b"])

    seq = h.reshape(B, S, H)
    pooled = jnp.tanh(mm(seq[:, 0, :], params["pooler_w"]) + params["pooler_b"])
    return seq, pooled


if __name__ == "__main__":
    cfg = dict(
        vocab_size=128,
        hidden_size=128,            # lane-dense (multiple of 128)
        num_hidden_layers=2,
        num_attention_heads=4,      # head dim 32 -> 4 heads packed per attention block
        intermediate_size=256,      # lane-dense
        max_position_embeddings=64,
        type_vocab_size=2,
        initializer_range=0.02,
    )
    B, S = 2, 8

    key = jax.random.PRNGKey(0)
    kp, ki, ks, kt = jax.random.split(key, 4)
    params = init_params(kp, cfg)
    inference_params = prepare_params(params)

    input_ids = jax.random.randint(ki, (B, S), 0, cfg["vocab_size"], jnp.int32)
    speaker_ids = jax.random.randint(ks, (B, S), 0, cfg["max_position_embeddings"], jnp.int32)
    token_type_ids = jax.random.randint(kt, (B, S), 0, cfg["type_vocab_size"], jnp.int32)
    attention_mask = jnp.array([[1] * S, [1] * (S - 2) + [0, 0]], jnp.int32)

    fwd = jax.jit(functools.partial(bert_forward, cfg=cfg))
    seq_out, pooled = fwd(inference_params, input_ids, speaker_ids, token_type_ids,
                          attention_mask)
    seq_out, pooled = jax.block_until_ready((seq_out, pooled))

    # Tight check against a reference that mirrors the kernels' mixed precision.
    ref_seq_m, ref_pool_m = reference_forward(params, input_ids, speaker_ids,
                                              token_type_ids, attention_mask, cfg,
                                              mirror_bf16=True)
    # Loose sanity check against the exact float32 semantics of the torch module.
    ref_seq_f, ref_pool_f = reference_forward(params, input_ids, speaker_ids,
                                              token_type_ids, attention_mask, cfg,
                                              mirror_bf16=False)

    assert seq_out.shape == (B, S, cfg["hidden_size"])
    assert pooled.shape == (B, cfg["hidden_size"])
    assert jnp.allclose(seq_out, ref_seq_m, atol=1e-2, rtol=1e-2), "seq mismatch (bf16 ref)"
    assert jnp.allclose(pooled, ref_pool_m, atol=1e-2, rtol=1e-2), "pooled mismatch (bf16 ref)"
    assert jnp.allclose(seq_out, ref_seq_f, atol=1e-1, rtol=1e-1), "seq mismatch (f32 ref)"
    assert jnp.allclose(pooled, ref_pool_f, atol=1e-1, rtol=1e-1), "pooled mismatch (f32 ref)"
    print("KERNEL_OK")
</pallas_src>

<mosaic_0001>
module attributes {stable_mosaic.version = 11 : i64} {
  func.func @_add_ln_kernel(%arg0: i32, %arg1: memref<16x128xf32, #tpu.memory_space<vmem>>, %arg2: memref<16x128xf32, #tpu.memory_space<vmem>>, %arg3: memref<1x128xf32, #tpu.memory_space<vmem>>, %arg4: memref<1x128xf32, #tpu.memory_space<vmem>>, %arg5: memref<16x128xf32, #tpu.memory_space<vmem>>) attributes {dimension_semantics = [#tpu.dimension_semantics<parallel>], iteration_bounds = array<i64: 1>, scalar_prefetch = 0 : i64, scratch_operands = 0 : i64, tpu.core_type = #tpu.core_type<tc>, window_params = [{transform_indices = @transform_0, window_bounds = array<i64: 16, 128>}, {transform_indices = @transform_1, window_bounds = array<i64: 16, 128>}, {pipeline_mode = #tpu.pipeline_mode<synchronous>, transform_indices = @transform_2, window_bounds = array<i64: 1, 128>}, {pipeline_mode = #tpu.pipeline_mode<synchronous>, transform_indices = @transform_3, window_bounds = array<i64: 1, 128>}, {transform_indices = @transform_4, window_bounds = array<i64: 16, 128>}]} {
    %c0 = arith.constant 0 : index
    %c0_0 = arith.constant 0 : index
    %0 = vector.load %arg1[%c0, %c0_0] : memref<16x128xf32, #tpu.memory_space<vmem>>, vector<16x128xf32>
    %c0_1 = arith.constant 0 : index
    %c0_2 = arith.constant 0 : index
    %1 = vector.load %arg2[%c0_1, %c0_2] : memref<16x128xf32, #tpu.memory_space<vmem>>, vector<16x128xf32>
    %2 = arith.addf %0, %1 : vector<16x128xf32>
    %cst = arith.constant dense<0.000000e+00> : vector<16xf32>
    %3 = vector.multi_reduction <add>, %2, %cst [1] : vector<16x128xf32> to vector<16xf32>
    %4 = vector.shape_cast %3 : vector<16xf32> to vector<16x1xf32>
    %cst_3 = arith.constant 1.280000e+02 : f32
    %5 = vector.broadcast %cst_3 : f32 to vector<16x1xf32>
    %6 = arith.divf %4, %5 : vector<16x1xf32>
    %7 = vector.broadcast %6 : vector<16x1xf32> to vector<16x128xf32>
    %8 = arith.subf %2, %7 : vector<16x128xf32>
    %9 = arith.mulf %8, %8 : vector<16x128xf32>
    %cst_4 = arith.constant dense<0.000000e+00> : vector<16xf32>
    %10 = vector.multi_reduction <add>, %9, %cst_4 [1] : vector<16x128xf32> to vector<16xf32>
    %11 = vector.shape_cast %10 : vector<16xf32> to vector<16x1xf32>
    %cst_5 = arith.constant 1.280000e+02 : f32
    %12 = vector.broadcast %cst_5 : f32 to vector<16x1xf32>
    %13 = arith.divf %11, %12 : vector<16x1xf32>
    %cst_6 = arith.constant 9.99999996E-13 : f32
    %14 = vector.broadcast %cst_6 : f32 to vector<16x1xf32>
    %15 = arith.addf %13, %14 : vector<16x1xf32>
    %16 = math.rsqrt %15 : vector<16x1xf32>
    %17 = vector.broadcast %16 : vector<16x1xf32> to vector<16x128xf32>
    %18 = arith.mulf %8, %17 : vector<16x128xf32>
    %c0_7 = arith.constant 0 : index
    %c0_8 = arith.constant 0 : index
    %19 = vector.load %arg3[%c0_7, %c0_8] : memref<1x128xf32, #tpu.memory_space<vmem>>, vector<1x128xf32>
    %20 = vector.broadcast %19 : vector<1x128xf32> to vector<16x128xf32>
    %21 = arith.mulf %18, %20 : vector<16x128xf32>
    %c0_9 = arith.constant 0 : index
    %c0_10 = arith.constant 0 : index
    %22 = vector.load %arg4[%c0_9, %c0_10] : memref<1x128xf32, #tpu.memory_space<vmem>>, vector<1x128xf32>
    %23 = vector.broadcast %22 : vector<1x128xf32> to vector<16x128xf32>
    %24 = arith.addf %21, %23 : vector<16x128xf32>
    %c0_11 = arith.constant 0 : index
    %c0_12 = arith.constant 0 : index
    %25 = vector.load %arg5[%c0_11, %c0_12] : memref<16x128xf32, #tpu.memory_space<vmem>>, vector<16x128xf32>
    tpu.vector_store %arg5[%c0_11, %c0_12], %24 {strides = array<i32>} : memref<16x128xf32, #tpu.memory_space<vmem>>, vector<16x128xf32>,
    return
  }
  func.func @transform_0(%arg0: i32) -> (i32, i32) {
    %c0_i32 = arith.constant 0 : i32
    %c0_i32_0 = arith.constant 0 : i32
    return %arg0, %c0_i32 : i32, i32
  }
  func.func @transform_1(%arg0: i32) -> (i32, i32) {
    %c0_i32 = arith.constant 0 : i32
    %c0_i32_0 = arith.constant 0 : i32
    return %arg0, %c0_i32 : i32, i32
  }
  func.func @transform_2(%arg0: i32) -> (i32, i32) {
    %c0_i32 = arith.constant 0 : i32
    %c0_i32_0 = arith.constant 0 : i32
    %c0_i32_1 = arith.constant 0 : i32
    return %c0_i32, %c0_i32_0 : i32, i32
  }
  func.func @transform_3(%arg0: i32) -> (i32, i32) {
    %c0_i32 = arith.constant 0 : i32
    %c0_i32_0 = arith.constant 0 : i32
    %c0_i32_1 = arith.constant 0 : i32
    return %c0_i32, %c0_i32_0 : i32, i32
  }
  func.func @transform_4(%arg0: i32) -> (i32, i32) {
    %c0_i32 = arith.constant 0 : i32
    %c0_i32_0 = arith.constant 0 : i32
    return %arg0, %c0_i32 : i32, i32
  }
}

module attributes {stable_mosaic.version = 11 : i64} {
  func.func @_dense_kernel(%arg0: i32, %arg1: i32, %arg2: i32, %arg3: memref<16x128xf32, #tpu.memory_space<vmem>>, %arg4: memref<128x128xbf16, #tpu.memory_space<vmem>>, %arg5: memref<1x128xf32, #tpu.memory_space<vmem>>, %arg6: memref<16x128xbf16, #tpu.memory_space<vmem>>, %arg7: memref<16x128xf32, #tpu.memory_space<vmem>>) attributes {dimension_semantics = [#tpu.dimension_semantics<parallel>, #tpu.dimension_semantics<parallel>, #tpu.dimension_semantics<arbitrary>], iteration_bounds = array<i64: 1, 3, 1>, scalar_prefetch = 0 : i64, scratch_operands = 1 : i64, tpu.core_type = #tpu.core_type<tc>, window_params = [{transform_indices = @transform_0, window_bounds = array<i64: 16, 128>}, {transform_indices = @transform_1, window_bounds = array<i64: 128, 128>}, {transform_indices = @transform_2, window_bounds = array<i64: 1, 128>}, {transform_indices = @transform_3, window_bounds = array<i64: 16, 128>}]} {
    %c0_i32 = arith.constant 0 : i32
    %0 = arith.cmpi eq, %arg2, %c0_i32 : i32
    %1 = arith.extui %0 : i1 to i32
    %c0_i32_0 = arith.constant 0 : i32
    %2 = arith.cmpi ne, %1, %c0_i32_0 : i32
    scf.if %2 {
      %cst_10 = arith.constant 0.000000e+00 : f32
      %13 = vector.broadcast %cst_10 : f32 to vector<16x128xf32>
      %c0_11 = arith.constant 0 : index
      %c0_12 = arith.constant 0 : index
      %14 = vector.load %arg7[%c0_11, %c0_12] : memref<16x128xf32, #tpu.memory_space<vmem>>, vector<16x128xf32>
      tpu.vector_store %arg7[%c0_11, %c0_12], %13 {strides = array<i32>} : memref<16x128xf32, #tpu.memory_space<vmem>>, vector<16x128xf32>,
    } else {
    }
    %c0 = arith.constant 0 : index
    %c0_1 = arith.constant 0 : index
    %3 = vector.load %arg7[%c0, %c0_1] : memref<16x128xf32, #tpu.memory_space<vmem>>, vector<16x128xf32>
    %c0_2 = arith.constant 0 : index
    %c0_3 = arith.constant 0 : index
    %4 = vector.load %arg3[%c0_2, %c0_3] : memref<16x128xf32, #tpu.memory_space<vmem>>, vector<16x128xf32>
    %5 = arith.truncf %4 : vector<16x128xf32> to vector<16x128xbf16>
    %c0_4 = arith.constant 0 : index
    %c0_5 = arith.constant 0 : index
    %6 = vector.load %arg4[%c0_4, %c0_5] : memref<128x128xbf16, #tpu.memory_space<vmem>>, vector<128x128xbf16>
    %cst = arith.constant dense<0.000000e+00> : vector<16x128xf32>
    %7 = tpu.matmul %5, %6, %cst {dimension_numbers = #tpu.dot_dimension_numbers<[1], [0], [0], [1], [0, 0, 1, 1], [], []>} : vector<16x128xbf16>, vector<128x128xbf16>, vector<16x128xf32> -> vector<16x128xf32>
    %8 = arith.addf %3, %7 : vector<16x128xf32>
    %c0_6 = arith.constant 0 : index
    %c0_7 = arith.constant 0 : index
    %9 = vector.load %arg7[%c0_6, %c0_7] : memref<16x128xf32, #tpu.memory_space<vmem>>, vector<16x128xf32>
    tpu.vector_store %arg7[%c0_6, %c0_7], %8 {strides = array<i32>} : memref<16x128xf32, #tpu.memory_space<vmem>>, vector<16x128xf32>,
    %c0_i32_8 = arith.constant 0 : i32
    %10 = arith.cmpi eq, %arg2, %c0_i32_8 : i32
    %11 = arith.extui %10 : i1 to i32
    %c0_i32_9 = arith.constant 0 : i32
    %12 = arith.cmpi ne, %11, %c0_i32_9 : i32
    scf.if %12 {
      %c0_10 = arith.constant 0 : index
      %c0_11 = arith.constant 0 : index
      %13 = vector.load %arg7[%c0_10, %c0_11] : memref<16x128xf32, #tpu.memory_space<vmem>>, vector<16x128xf32>
      %c0_12 = arith.constant 0 : index
      %c0_13 = arith.constant 0 : index
      %14 = vector.load %arg5[%c0_12, %c0_13] : memref<1x128xf32, #tpu.memory_space<vmem>>, vector<1x128xf32>
      %15 = vector.broadcast %14 : vector<1x128xf32> to vector<16x128xf32>
      %16 = arith.addf %13, %15 : vector<16x128xf32>
      %17 = arith.truncf %16 : vector<16x128xf32> to vector<16x128xbf16>
      %c0_14 = arith.constant 0 : index
      %c0_15 = arith.constant 0 : index
      %18 = vector.load %arg6[%c0_14, %c0_15] : memref<16x128xbf16, #tpu.memory_space<vmem>>, vector<16x128xbf16>
      tpu.vector_store %arg6[%c0_14, %c0_15], %17 {strides = array<i32>} : memref<16x128xbf16, #tpu.memory_space<vmem>>, vector<16x128xbf16>,
    } else {
    }
    return
  }
  func.func @transform_0(%arg0: i32, %arg1: i32, %arg2: i32) -> (i32, i32) {
    %c0_i32 = arith.constant 0 : i32
    return %arg0, %arg2 : i32, i32
  }
  func.func @transform_1(%arg0: i32, %arg1: i32, %arg2: i32) -> (i32, i32) {
    %c0_i32 = arith.constant 0 : i32
    return %arg2, %arg1 : i32, i32
  }
  func.func @transform_2(%arg0: i32, %arg1: i32, %arg2: i32) -> (i32, i32) {
    %c0_i32 = arith.constant 0 : i32
    %c0_i32_0 = arith.constant 0 : i32
    return %c0_i32, %arg1 : i32, i32
  }
  func.func @transform_3(%arg0: i32, %arg1: i32, %arg2: i32) -> (i32, i32) {
    %c0_i32 = arith.constant 0 : i32
    return %arg0, %arg1 : i32, i32
  }
}

module attributes {stable_mosaic.version = 11 : i64} {
  func.func @_dense_add_ln_kernel(%arg0: i32, %arg1: i32, %arg2: memref<16x128xbf16, #tpu.memory_space<vmem>>, %arg3: memref<128x128xbf16, #tpu.memory_space<vmem>>, %arg4: memref<1x128xf32, #tpu.memory_space<vmem>>, %arg5: memref<16x128xf32, #tpu.memory_space<vmem>>, %arg6: memref<1x128xf32, #tpu.memory_space<vmem>>, %arg7: memref<1x128xf32, #tpu.memory_space<vmem>>, %arg8: memref<16x128xf32, #tpu.memory_space<vmem>>, %arg9: memref<16x128xf32, #tpu.memory_space<vmem>>) attributes {dimension_semantics = [#tpu.dimension_semantics<parallel>, #tpu.dimension_semantics<arbitrary>], iteration_bounds = array<i64: 1, 1>, scalar_prefetch = 0 : i64, scratch_operands = 1 : i64, tpu.core_type = #tpu.core_type<tc>, window_params = [{transform_indices = @transform_0, window_bounds = array<i64: 16, 128>}, {transform_indices = @transform_1, window_bounds = array<i64: 128, 128>}, {pipeline_mode = #tpu.pipeline_mode<synchronous>, transform_indices = @transform_2, window_bounds = array<i64: 1, 128>}, {transform_indices = @transform_3, window_bounds = array<i64: 16, 128>}, {pipeline_mode = #tpu.pipeline_mode<synchronous>, transform_indices = @transform_4, window_bounds = array<i64: 1, 128>}, {pipeline_mode = #tpu.pipeline_mode<synchronous>, transform_indices = @transform_5, window_bounds = array<i64: 1, 128>}, {transform_indices = @transform_6, window_bounds = array<i64: 16, 128>}]} {
    %c0_i32 = arith.constant 0 : i32
    %0 = arith.cmpi eq, %arg1, %c0_i32 : i32
    %1 = arith.extui %0 : i1 to i32
    %c0_i32_0 = arith.constant 0 : i32
    %2 = arith.cmpi ne, %1, %c0_i32_0 : i32
    scf.if %2 {
      %cst_10 = arith.constant 0.000000e+00 : f32
      %12 = vector.broadcast %cst_10 : f32 to vector<16x128xf32>
      %c0_11 = arith.constant 0 : index
      %c0_12 = arith.constant 0 : index
      %13 = vector.load %arg9[%c0_11, %c0_12] : memref<16x128xf32, #tpu.memory_space<vmem>>, vector<16x128xf32>
      tpu.vector_store %arg9[%c0_11, %c0_12], %12 {strides = array<i32>} : memref<16x128xf32, #tpu.memory_space<vmem>>, vector<16x128xf32>,
    } else {
    }
    %c0 = arith.constant 0 : index
    %c0_1 = arith.constant 0 : index
    %3 = vector.load %arg9[%c0, %c0_1] : memref<16x128xf32, #tpu.memory_space<vmem>>, vector<16x128xf32>
    %c0_2 = arith.constant 0 : index
    %c0_3 = arith.constant 0 : index
    %4 = vector.load %arg2[%c0_2, %c0_3] : memref<16x128xbf16, #tpu.memory_space<vmem>>, vector<16x128xbf16>
    %c0_4 = arith.constant 0 : index
    %c0_5 = arith.constant 0 : index
    %5 = vector.load %arg3[%c0_4, %c0_5] : memref<128x128xbf16, #tpu.memory_space<vmem>>, vector<128x128xbf16>
    %cst = arith.constant dense<0.000000e+00> : vector<16x128xf32>
    %6 = tpu.matmul %4, %5, %cst {dimension_numbers = #tpu.dot_dimension_numbers<[1], [0], [0], [1], [0, 0, 1, 1], [], []>} : vector<16x128xbf16>, vector<128x128xbf16>, vector<16x128xf32> -> vector<16x128xf32>
    %7 = arith.addf %3, %6 : vector<16x128xf32>
    %c0_6 = arith.constant 0 : index
    %c0_7 = arith.constant 0 : index
    %8 = vector.load %arg9[%c0_6, %c0_7] : memref<16x128xf32, #tpu.memory_space<vmem>>, vector<16x128xf32>
    tpu.vector_store %arg9[%c0_6, %c0_7], %7 {strides = array<i32>} : memref<16x128xf32, #tpu.memory_space<vmem>>, vector<16x128xf32>,
    %c0_i32_8 = arith.constant 0 : i32
    %9 = arith.cmpi eq, %arg1, %c0_i32_8 : i32
    %10 = arith.extui %9 : i1 to i32
    %c0_i32_9 = arith.constant 0 : i32
    %11 = arith.cmpi ne, %10, %c0_i32_9 : i32
    scf.if %11 {
      %c0_10 = arith.constant 0 : index
      %c0_11 = arith.constant 0 : index
      %12 = vector.load %arg9[%c0_10, %c0_11] : memref<16x128xf32, #tpu.memory_space<vmem>>, vector<16x128xf32>
      %c0_12 = arith.constant 0 : index
      %c0_13 = arith.constant 0 : index
      %13 = vector.load %arg4[%c0_12, %c0_13] : memref<1x128xf32, #tpu.memory_space<vmem>>, vector<1x128xf32>
      %14 = vector.broadcast %13 : vector<1x128xf32> to vector<16x128xf32>
      %15 = arith.addf %12, %14 : vector<16x128xf32>
      %c0_14 = arith.constant 0 : index
      %c0_15 = arith.constant 0 : index
      %16 = vector.load %arg5[%c0_14, %c0_15] : memref<16x128xf32, #tpu.memory_space<vmem>>, vector<16x128xf32>
      %17 = arith.addf %15, %16 : vector<16x128xf32>
      %cst_16 = arith.constant dense<0.000000e+00> : vector<16xf32>
      %18 = vector.multi_reduction <add>, %17, %cst_16 [1] : vector<16x128xf32> to vector<16xf32>
      %19 = vector.shape_cast %18 : vector<16xf32> to vector<16x1xf32>
      %cst_17 = arith.constant 1.280000e+02 : f32
      %20 = vector.broadcast %cst_17 : f32 to vector<16x1xf32>
      %21 = arith.divf %19, %20 : vector<16x1xf32>
      %22 = vector.broadcast %21 : vector<16x1xf32> to vector<16x128xf32>
      %23 = arith.subf %17, %22 : vector<16x128xf32>
      %24 = arith.mulf %23, %23 : vector<16x128xf32>
      %cst_18 = arith.constant dense<0.000000e+00> : vector<16xf32>
      %25 = vector.multi_reduction <add>, %24, %cst_18 [1] : vector<16x128xf32> to vector<16xf32>
      %26 = vector.shape_cast %25 : vector<16xf32> to vector<16x1xf32>
      %cst_19 = arith.constant 1.280000e+02 : f32
      %27 = vector.broadcast %cst_19 : f32 to vector<16x1xf32>
      %28 = arith.divf %26, %27 : vector<16x1xf32>
      %cst_20 = arith.constant 9.99999996E-13 : f32
      %29 = vector.broadcast %cst_20 : f32 to vector<16x1xf32>
      %30 = arith.addf %28, %29 : vector<16x1xf32>
      %31 = math.rsqrt %30 : vector<16x1xf32>
      %32 = vector.broadcast %31 : vector<16x1xf32> to vector<16x128xf32>
      %33 = arith.mulf %23, %32 : vector<16x128xf32>
      %c0_21 = arith.constant 0 : index
      %c0_22 = arith.constant 0 : index
      %34 = vector.load %arg6[%c0_21, %c0_22] : memref<1x128xf32, #tpu.memory_space<vmem>>, vector<1x128xf32>
      %35 = vector.broadcast %34 : vector<1x128xf32> to vector<16x128xf32>
      %36 = arith.mulf %33, %35 : vector<16x128xf32>
      %c0_23 = arith.constant 0 : index
      %c0_24 = arith.constant 0 : index
      %37 = vector.load %arg7[%c0_23, %c0_24] : memref<1x128xf32, #tpu.memory_space<vmem>>, vector<1x128xf32>
      %38 = vector.broadcast %37 : vector<1x128xf32> to vector<16x128xf32>
      %39 = arith.addf %36, %38 : vector<16x128xf32>
      %c0_25 = arith.constant 0 : index
      %c0_26 = arith.constant 0 : index
      %40 = vector.load %arg8[%c0_25, %c0_26] : memref<16x128xf32, #tpu.memory_space<vmem>>, vector<16x128xf32>
      tpu.vector_store %arg8[%c0_25, %c0_26], %39 {strides = array<i32>} : memref<16x128xf32, #tpu.memory_space<vmem>>, vector<16x128xf32>,
    } else {
    }
    return
  }
  func.func @transform_0(%arg0: i32, %arg1: i32) -> (i32, i32) {
    %c0_i32 = arith.constant 0 : i32
    return %arg0, %arg1 : i32, i32
  }
  func.func @transform_1(%arg0: i32, %arg1: i32) -> (i32, i32) {
    %c0_i32 = arith.constant 0 : i32
    %c0_i32_0 = arith.constant 0 : i32
    return %arg1, %c0_i32 : i32, i32
  }
  func.func @transform_2(%arg0: i32, %arg1: i32) -> (i32, i32) {
    %c0_i32 = arith.constant 0 : i32
    %c0_i32_0 = arith.constant 0 : i32
    %c0_i32_1 = arith.constant 0 : i32
    return %c0_i32, %c0_i32_0 : i32, i32
  }
  func.func @transform_3(%arg0: i32, %arg1: i32) -> (i32, i32) {
    %c0_i32 = arith.constant 0 : i32
    %c0_i32_0 = arith.constant 0 : i32
    return %arg0, %c0_i32 : i32, i32
  }
  func.func @transform_4(%arg0: i32, %arg1: i32) -> (i32, i32) {
    %c0_i32 = arith.constant 0 : i32
    %c0_i32_0 = arith.constant 0 : i32
    %c0_i32_1 = arith.constant 0 : i32
    return %c0_i32, %c0_i32_0 : i32, i32
  }
  func.func @transform_5(%arg0: i32, %arg1: i32) -> (i32, i32) {
    %c0_i32 = arith.constant 0 : i32
    %c0_i32_0 = arith.constant 0 : i32
    %c0_i32_1 = arith.constant 0 : i32
    return %c0_i32, %c0_i32_0 : i32, i32
  }
  func.func @transform_6(%arg0: i32, %arg1: i32) -> (i32, i32) {
    %c0_i32 = arith.constant 0 : i32
    %c0_i32_0 = arith.constant 0 : i32
    return %arg0, %c0_i32 : i32, i32
  }
}

module attributes {stable_mosaic.version = 11 : i64} {
  func.func @_attn_kernel(%arg0: i32, %arg1: i32, %arg2: memref<1x8x128xbf16, #tpu.memory_space<vmem>>, %arg3: memref<1x8x128xbf16, #tpu.memory_space<vmem>>, %arg4: memref<1x8x128xbf16, #tpu.memory_space<vmem>>, %arg5: memref<1x1x8xf32, #tpu.memory_space<vmem>>, %arg6: memref<1x8x128xbf16, #tpu.memory_space<vmem>>) attributes {dimension_semantics = [#tpu.dimension_semantics<parallel>, #tpu.dimension_semantics<parallel>], iteration_bounds = array<i64: 2, 1>, scalar_prefetch = 0 : i64, scratch_operands = 0 : i64, tpu.core_type = #tpu.core_type<tc>, window_params = [{transform_indices = @transform_0, window_bounds = array<i64: 1, 8, 128>}, {transform_indices = @transform_1, window_bounds = array<i64: 1, 8, 128>}, {transform_indices = @transform_2, window_bounds = array<i64: 1, 8, 128>}, {transform_indices = @transform_3, window_bounds = array<i64: 1, 1, 8>}, {transform_indices = @transform_4, window_bounds = array<i64: 1, 8, 128>}]} {
    %c0 = arith.constant 0 : index
    %c0_0 = arith.constant 0 : index
    %c0_1 = arith.constant 0 : index
    %0 = vector.load %arg5[%c0, %c0_0, %c0_1] : memref<1x1x8xf32, #tpu.memory_space<vmem>>, vector<1x1x8xf32>
    %1 = vector.shape_cast %0 : vector<1x1x8xf32> to vector<1x8xf32>
    %c0_2 = arith.constant 0 : index
    %c0_3 = arith.constant 0 : index
    %c0_4 = arith.constant 0 : index
    %2 = vector.load %arg2[%c0_2, %c0_3, %c0_4] : memref<1x8x128xbf16, #tpu.memory_space<vmem>>, vector<1x8x128xbf16>
    %3 = vector.shape_cast %2 : vector<1x8x128xbf16> to vector<8x128xbf16>
    %c0_5 = arith.constant 0 : index
    %c0_6 = arith.constant 0 : index
    %c0_7 = arith.constant 0 : index
    %4 = vector.load %arg3[%c0_5, %c0_6, %c0_7] : memref<1x8x128xbf16, #tpu.memory_space<vmem>>, vector<1x8x128xbf16>
    %5 = vector.shape_cast %4 : vector<1x8x128xbf16> to vector<8x128xbf16>
    %c0_8 = arith.constant 0 : index
    %c0_9 = arith.constant 0 : index
    %c0_10 = arith.constant 0 : index
    %6 = vector.load %arg4[%c0_8, %c0_9, %c0_10] : memref<1x8x128xbf16, #tpu.memory_space<vmem>>, vector<1x8x128xbf16>
    %7 = vector.shape_cast %6 : vector<1x8x128xbf16> to vector<8x128xbf16>
    %8 = vector.extract_strided_slice %3 {offsets = [0, 0], sizes = [8, 32], strides = [1, 1]} : vector<8x128xbf16> to vector<8x32xbf16>
    %9 = vector.extract_strided_slice %5 {offsets = [0, 0], sizes = [8, 32], strides = [1, 1]} : vector<8x128xbf16> to vector<8x32xbf16>
    %10 = vector.extract_strided_slice %7 {offsets = [0, 0], sizes = [8, 32], strides = [1, 1]} : vector<8x128xbf16> to vector<8x32xbf16>
    %cst = arith.constant dense<0.000000e+00> : vector<8x8xf32>
    %11 = tpu.matmul %8, %9, %cst {dimension_numbers = #tpu.dot_dimension_numbers<[1], [1], [0], [0], [0, 0, 1, 0], [], []>} : vector<8x32xbf16>, vector<8x32xbf16>, vector<8x8xf32> -> vector<8x8xf32>
    %cst_11 = arith.constant 0.176776692 : f32
    %12 = vector.broadcast %cst_11 : f32 to vector<8x8xf32>
    %13 = arith.mulf %11, %12 : vector<8x8xf32>
    %14 = vector.broadcast %1 : vector<1x8xf32> to vector<8x8xf32>
    %15 = arith.addf %13, %14 : vector<8x8xf32>
    %cst_12 = arith.constant dense<0xFF800000> : vector<8xf32>
    %16 = vector.multi_reduction <maximumf>, %15, %cst_12 [1] : vector<8x8xf32> to vector<8xf32>
    %17 = vector.shape_cast %16 : vector<8xf32> to vector<8x1xf32>
    %18 = vector.broadcast %17 : vector<8x1xf32> to vector<8x8xf32>
    %19 = arith.subf %15, %18 : vector<8x8xf32>
    %20 = math.exp %19 : vector<8x8xf32>
    %cst_13 = arith.constant dense<0.000000e+00> : vector<8xf32>
    %21 = vector.multi_reduction <add>, %20, %cst_13 [1] : vector<8x8xf32> to vector<8xf32>
    %22 = vector.shape_cast %21 : vector<8xf32> to vector<8x1xf32>
    %23 = tpu.reciprocal %22 {approx = true} : vector<8x1xf32> -> vector<8x1xf32>
    %24 = vector.broadcast %23 : vector<8x1xf32> to vector<8x8xf32>
    %25 = arith.mulf %20, %24 : vector<8x8xf32>
    %26 = arith.truncf %25 : vector<8x8xf32> to vector<8x8xbf16>
    %cst_14 = arith.constant dense<0.000000e+00> : vector<8x32xf32>
    %27 = tpu.matmul %26, %10, %cst_14 {dimension_numbers = #tpu.dot_dimension_numbers<[1], [0], [0], [1], [0, 0, 1, 1], [], []>} : vector<8x8xbf16>, vector<8x32xbf16>, vector<8x32xf32> -> vector<8x32xf32>
    %28 = arith.truncf %27 : vector<8x32xf32> to vector<8x32xbf16>
    %c0_15 = arith.constant 0 : index
    %c0_16 = arith.constant 0 : index
    %c0_17 = arith.constant 0 : index
    %29 = vector.load %arg6[%c0_15, %c0_16, %c0_17] : memref<1x8x128xbf16, #tpu.memory_space<vmem>>, vector<1x8x32xbf16>
    %30 = vector.shape_cast %29 : vector<1x8x32xbf16> to vector<8x32xbf16>
    %31 = vector.shape_cast %28 : vector<8x32xbf16> to vector<1x8x32xbf16>
    tpu.vector_store %arg6[%c0_15, %c0_16, %c0_17], %31 {strides = array<i32>} : memref<1x8x128xbf16, #tpu.memory_space<vmem>>, vector<1x8x32xbf16>,
    %32 = vector.extract_strided_slice %3 {offsets = [0, 32], sizes = [8, 32], strides = [1, 1]} : vector<8x128xbf16> to vector<8x32xbf16>
    %33 = vector.extract_strided_slice %5 {offsets = [0, 32], sizes = [8, 32], strides = [1, 1]} : vector<8x128xbf16> to vector<8x32xbf16>
    %34 = vector.extract_strided_slice %7 {offsets = [0, 32], sizes = [8, 32], strides = [1, 1]} : vector<8x128xbf16> to vector<8x32xbf16>
    %cst_18 = arith.constant dense<0.000000e+00> : vector<8x8xf32>
    %35 = tpu.matmul %32, %33, %cst_18 {dimension_numbers = #tpu.dot_dimension_numbers<[1], [1], [0], [0], [0, 0, 1, 0], [], []>} : vector<8x32xbf16>, vector<8x32xbf16>, vector<8x8xf32> -> vector<8x8xf32>
    %cst_19 = arith.constant 0.176776692 : f32
    %36 = vector.broadcast %cst_19 : f32 to vector<8x8xf32>
    %37 = arith.mulf %35, %36 : vector<8x8xf32>
    %38 = vector.broadcast %1 : vector<1x8xf32> to vector<8x8xf32>
    %39 = arith.addf %37, %38 : vector<8x8xf32>
    %cst_20 = arith.constant dense<0xFF800000> : vector<8xf32>
    %40 = vector.multi_reduction <maximumf>, %39, %cst_20 [1] : vector<8x8xf32> to vector<8xf32>
    %41 = vector.shape_cast %40 : vector<8xf32> to vector<8x1xf32>
    %42 = vector.broadcast %41 : vector<8x1xf32> to vector<8x8xf32>
    %43 = arith.subf %39, %42 : vector<8x8xf32>
    %44 = math.exp %43 : vector<8x8xf32>
    %cst_21 = arith.constant dense<0.000000e+00> : vector<8xf32>
    %45 = vector.multi_reduction <add>, %44, %cst_21 [1] : vector<8x8xf32> to vector<8xf32>
    %46 = vector.shape_cast %45 : vector<8xf32> to vector<8x1xf32>
    %47 = tpu.reciprocal %46 {approx = true} : vector<8x1xf32> -> vector<8x1xf32>
    %48 = vector.broadcast %47 : vector<8x1xf32> to vector<8x8xf32>
    %49 = arith.mulf %44, %48 : vector<8x8xf32>
    %50 = arith.truncf %49 : vector<8x8xf32> to vector<8x8xbf16>
    %cst_22 = arith.constant dense<0.000000e+00> : vector<8x32xf32>
    %51 = tpu.matmul %50, %34, %cst_22 {dimension_numbers = #tpu.dot_dimension_numbers<[1], [0], [0], [1], [0, 0, 1, 1], [], []>} : vector<8x8xbf16>, vector<8x32xbf16>, vector<8x32xf32> -> vector<8x32xf32>
    %52 = arith.truncf %51 : vector<8x32xf32> to vector<8x32xbf16>
    %c0_23 = arith.constant 0 : index
    %c0_24 = arith.constant 0 : index
    %c32 = arith.constant 32 : index
    %53 = vector.load %arg6[%c0_23, %c0_24, %c32] : memref<1x8x128xbf16, #tpu.memory_space<vmem>>, vector<1x8x32xbf16>
    %54 = vector.shape_cast %53 : vector<1x8x32xbf16> to vector<8x32xbf16>
    %55 = vector.shape_cast %52 : vector<8x32xbf16> to vector<1x8x32xbf16>
    tpu.vector_store %arg6[%c0_23, %c0_24, %c32], %55 {strides = array<i32>} : memref<1x8x128xbf16, #tpu.memory_space<vmem>>, vector<1x8x32xbf16>,
    %56 = vector.extract_strided_slice %3 {offsets = [0, 64], sizes = [8, 32], strides = [1, 1]} : vector<8x128xbf16> to vector<8x32xbf16>
    %57 = vector.extract_strided_slice %5 {offsets = [0, 64], sizes = [8, 32], strides = [1, 1]} : vector<8x128xbf16> to vector<8x32xbf16>
    %58 = vector.extract_strided_slice %7 {offsets = [0, 64], sizes = [8, 32], strides = [1, 1]} : vector<8x128xbf16> to vector<8x32xbf16>
    %cst_25 = arith.constant dense<0.000000e+00> : vector<8x8xf32>
    %59 = tpu.matmul %56, %57, %cst_25 {dimension_numbers = #tpu.dot_dimension_numbers<[1], [1], [0], [0], [0, 0, 1, 0], [], []>} : vector<8x32xbf16>, vector<8x32xbf16>, vector<8x8xf32> -> vector<8x8xf32>
    %cst_26 = arith.constant 0.176776692 : f32
    %60 = vector.broadcast %cst_26 : f32 to vector<8x8xf32>
    %61 = arith.mulf %59, %60 : vector<8x8xf32>
    %62 = vector.broadcast %1 : vector<1x8xf32> to vector<8x8xf32>
    %63 = arith.addf %61, %62 : vector<8x8xf32>
    %cst_27 = arith.constant dense<0xFF800000> : vector<8xf32>
    %64 = vector.multi_reduction <maximumf>, %63, %cst_27 [1] : vector<8x8xf32> to vector<8xf32>
    %65 = vector.shape_cast %64 : vector<8xf32> to vector<8x1xf32>
    %66 = vector.broadcast %65 : vector<8x1xf32> to vector<8x8xf32>
    %67 = arith.subf %63, %66 : vector<8x8xf32>
    %68 = math.exp %67 : vector<8x8xf32>
    %cst_28 = arith.constant dense<0.000000e+00> : vector<8xf32>
    %69 = vector.multi_reduction <add>, %68, %cst_28 [1] : vector<8x8xf32> to vector<8xf32>
    %70 = vector.shape_cast %69 : vector<8xf32> to vector<8x1xf32>
    %71 = tpu.reciprocal %70 {approx = true} : vector<8x1xf32> -> vector<8x1xf32>
    %72 = vector.broadcast %71 : vector<8x1xf32> to vector<8x8xf32>
    %73 = arith.mulf %68, %72 : vector<8x8xf32>
    %74 = arith.truncf %73 : vector<8x8xf32> to vector<8x8xbf16>
    %cst_29 = arith.constant dense<0.000000e+00> : vector<8x32xf32>
    %75 = tpu.matmul %74, %58, %cst_29 {dimension_numbers = #tpu.dot_dimension_numbers<[1], [0], [0], [1], [0, 0, 1, 1], [], []>} : vector<8x8xbf16>, vector<8x32xbf16>, vector<8x32xf32> -> vector<8x32xf32>
    %76 = arith.truncf %75 : vector<8x32xf32> to vector<8x32xbf16>
    %c0_30 = arith.constant 0 : index
    %c0_31 = arith.constant 0 : index
    %c64 = arith.constant 64 : index
    %77 = vector.load %arg6[%c0_30, %c0_31, %c64] : memref<1x8x128xbf16, #tpu.memory_space<vmem>>, vector<1x8x32xbf16>
    %78 = vector.shape_cast %77 : vector<1x8x32xbf16> to vector<8x32xbf16>
    %79 = vector.shape_cast %76 : vector<8x32xbf16> to vector<1x8x32xbf16>
    tpu.vector_store %arg6[%c0_30, %c0_31, %c64], %79 {strides = array<i32>} : memref<1x8x128xbf16, #tpu.memory_space<vmem>>, vector<1x8x32xbf16>,
    %80 = vector.extract_strided_slice %3 {offsets = [0, 96], sizes = [8, 32], strides = [1, 1]} : vector<8x128xbf16> to vector<8x32xbf16>
    %81 = vector.extract_strided_slice %5 {offsets = [0, 96], sizes = [8, 32], strides = [1, 1]} : vector<8x128xbf16> to vector<8x32xbf16>
    %82 = vector.extract_strided_slice %7 {offsets = [0, 96], sizes = [8, 32], strides = [1, 1]} : vector<8x128xbf16> to vector<8x32xbf16>
    %cst_32 = arith.constant dense<0.000000e+00> : vector<8x8xf32>
    %83 = tpu.matmul %80, %81, %cst_32 {dimension_numbers = #tpu.dot_dimension_numbers<[1], [1], [0], [0], [0, 0, 1, 0], [], []>} : vector<8x32xbf16>, vector<8x32xbf16>, vector<8x8xf32> -> vector<8x8xf32>
    %cst_33 = arith.constant 0.176776692 : f32
    %84 = vector.broadcast %cst_33 : f32 to vector<8x8xf32>
    %85 = arith.mulf %83, %84 : vector<8x8xf32>
    %86 = vector.broadcast %1 : vector<1x8xf32> to vector<8x8xf32>
    %87 = arith.addf %85, %86 : vector<8x8xf32>
    %cst_34 = arith.constant dense<0xFF800000> : vector<8xf32>
    %88 = vector.multi_reduction <maximumf>, %87, %cst_34 [1] : vector<8x8xf32> to vector<8xf32>
    %89 = vector.shape_cast %88 : vector<8xf32> to vector<8x1xf32>
    %90 = vector.broadcast %89 : vector<8x1xf32> to vector<8x8xf32>
    %91 = arith.subf %87, %90 : vector<8x8xf32>
    %92 = math.exp %91 : vector<8x8xf32>
    %cst_35 = arith.constant dense<0.000000e+00> : vector<8xf32>
    %93 = vector.multi_reduction <add>, %92, %cst_35 [1] : vector<8x8xf32> to vector<8xf32>
    %94 = vector.shape_cast %93 : vector<8xf32> to vector<8x1xf32>
    %95 = tpu.reciprocal %94 {approx = true} : vector<8x1xf32> -> vector<8x1xf32>
    %96 = vector.broadcast %95 : vector<8x1xf32> to vector<8x8xf32>
    %97 = arith.mulf %92, %96 : vector<8x8xf32>
    %98 = arith.truncf %97 : vector<8x8xf32> to vector<8x8xbf16>
    %cst_36 = arith.constant dense<0.000000e+00> : vector<8x32xf32>
    %99 = tpu.matmul %98, %82, %cst_36 {dimension_numbers = #tpu.dot_dimension_numbers<[1], [0], [0], [1], [0, 0, 1, 1], [], []>} : vector<8x8xbf16>, vector<8x32xbf16>, vector<8x32xf32> -> vector<8x32xf32>
    %100 = arith.truncf %99 : vector<8x32xf32> to vector<8x32xbf16>
    %c0_37 = arith.constant 0 : index
    %c0_38 = arith.constant 0 : index
    %c96 = arith.constant 96 : index
    %101 = vector.load %arg6[%c0_37, %c0_38, %c96] : memref<1x8x128xbf16, #tpu.memory_space<vmem>>, vector<1x8x32xbf16>
    %102 = vector.shape_cast %101 : vector<1x8x32xbf16> to vector<8x32xbf16>
    %103 = vector.shape_cast %100 : vector<8x32xbf16> to vector<1x8x32xbf16>
    tpu.vector_store %arg6[%c0_37, %c0_38, %c96], %103 {strides = array<i32>} : memref<1x8x128xbf16, #tpu.memory_space<vmem>>, vector<1x8x32xbf16>,
    return
  }
  func.func @transform_0(%arg0: i32, %arg1: i32) -> (i32, i32, i32) {
    %c0_i32 = arith.constant 0 : i32
    %0 = arith.addi %c0_i32, %arg1 : i32
    %c0_i32_0 = arith.constant 0 : i32
    %c0_i32_1 = arith.constant 0 : i32
    return %arg0, %c0_i32_0, %0 : i32, i32, i32
  }
  func.func @transform_1(%arg0: i32, %arg1: i32) -> (i32, i32, i32) {
    %c1_i32 = arith.constant 1 : i32
    %0 = arith.addi %c1_i32, %arg1 : i32
    %c0_i32 = arith.constant 0 : i32
    %c0_i32_0 = arith.constant 0 : i32
    return %arg0, %c0_i32, %0 : i32, i32, i32
  }
  func.func @transform_2(%arg0: i32, %arg1: i32) -> (i32, i32, i32) {
    %c2_i32 = arith.constant 2 : i32
    %0 = arith.addi %c2_i32, %arg1 : i32
    %c0_i32 = arith.constant 0 : i32
    %c0_i32_0 = arith.constant 0 : i32
    return %arg0, %c0_i32, %0 : i32, i32, i32
  }
  func.func @transform_3(%arg0: i32, %arg1: i32) -> (i32, i32, i32) {
    %c0_i32 = arith.constant 0 : i32
    %c0_i32_0 = arith.constant 0 : i32
    %c0_i32_1 = arith.constant 0 : i32
    return %arg0, %c0_i32, %c0_i32_0 : i32, i32, i32
  }
  func.func @transform_4(%arg0: i32, %arg1: i32) -> (i32, i32, i32) {
    %c0_i32 = arith.constant 0 : i32
    %c0_i32_0 = arith.constant 0 : i32
    return %arg0, %c0_i32, %arg1 : i32, i32, i32
  }
}

module attributes {stable_mosaic.version = 11 : i64} {
  func.func @_dense_kernel(%arg0: i32, %arg1: i32, %arg2: i32, %arg3: memref<16x128xf32, #tpu.memory_space<vmem>>, %arg4: memref<128x256xbf16, #tpu.memory_space<vmem>>, %arg5: memref<1x256xf32, #tpu.memory_space<vmem>>, %arg6: memref<16x256xbf16, #tpu.memory_space<vmem>>, %arg7: memref<16x256xf32, #tpu.memory_space<vmem>>) attributes {dimension_semantics = [#tpu.dimension_semantics<parallel>, #tpu.dimension_semantics<parallel>, #tpu.dimension_semantics<arbitrary>], iteration_bounds = array<i64: 1, 1, 1>, scalar_prefetch = 0 : i64, scratch_operands = 1 : i64, tpu.core_type = #tpu.core_type<tc>, window_params = [{transform_indices = @transform_0, window_bounds = array<i64: 16, 128>}, {transform_indices = @transform_1, window_bounds = array<i64: 128, 256>}, {transform_indices = @transform_2, window_bounds = array<i64: 1, 256>}, {transform_indices = @transform_3, window_bounds = array<i64: 16, 256>}]} {
    %c0_i32 = arith.constant 0 : i32
    %0 = arith.cmpi eq, %arg2, %c0_i32 : i32
    %1 = arith.extui %0 : i1 to i32
    %c0_i32_0 = arith.constant 0 : i32
    %2 = arith.cmpi ne, %1, %c0_i32_0 : i32
    scf.if %2 {
      %cst_10 = arith.constant 0.000000e+00 : f32
      %13 = vector.broadcast %cst_10 : f32 to vector<16x256xf32>
      %c0_11 = arith.constant 0 : index
      %c0_12 = arith.constant 0 : index
      %14 = vector.load %arg7[%c0_11, %c0_12] : memref<16x256xf32, #tpu.memory_space<vmem>>, vector<16x256xf32>
      tpu.vector_store %arg7[%c0_11, %c0_12], %13 {strides = array<i32>} : memref<16x256xf32, #tpu.memory_space<vmem>>, vector<16x256xf32>,
    } else {
    }
    %c0 = arith.constant 0 : index
    %c0_1 = arith.constant 0 : index
    %3 = vector.load %arg7[%c0, %c0_1] : memref<16x256xf32, #tpu.memory_space<vmem>>, vector<16x256xf32>
    %c0_2 = arith.constant 0 : index
    %c0_3 = arith.constant 0 : index
    %4 = vector.load %arg3[%c0_2, %c0_3] : memref<16x128xf32, #tpu.memory_space<vmem>>, vector<16x128xf32>
    %5 = arith.truncf %4 : vector<16x128xf32> to vector<16x128xbf16>
    %c0_4 = arith.constant 0 : index
    %c0_5 = arith.constant 0 : index
    %6 = vector.load %arg4[%c0_4, %c0_5] : memref<128x256xbf16, #tpu.memory_space<vmem>>, vector<128x256xbf16>
    %cst = arith.constant dense<0.000000e+00> : vector<16x256xf32>
    %7 = tpu.matmul %5, %6, %cst {dimension_numbers = #tpu.dot_dimension_numbers<[1], [0], [0], [1], [0, 0, 1, 1], [], []>} : vector<16x128xbf16>, vector<128x256xbf16>, vector<16x256xf32> -> vector<16x256xf32>
    %8 = arith.addf %3, %7 : vector<16x256xf32>
    %c0_6 = arith.constant 0 : index
    %c0_7 = arith.constant 0 : index
    %9 = vector.load %arg7[%c0_6, %c0_7] : memref<16x256xf32, #tpu.memory_space<vmem>>, vector<16x256xf32>
    tpu.vector_store %arg7[%c0_6, %c0_7], %8 {strides = array<i32>} : memref<16x256xf32, #tpu.memory_space<vmem>>, vector<16x256xf32>,
    %c0_i32_8 = arith.constant 0 : i32
    %10 = arith.cmpi eq, %arg2, %c0_i32_8 : i32
    %11 = arith.extui %10 : i1 to i32
    %c0_i32_9 = arith.constant 0 : i32
    %12 = arith.cmpi ne, %11, %c0_i32_9 : i32
    scf.if %12 {
      %c0_10 = arith.constant 0 : index
      %c0_11 = arith.constant 0 : index
      %13 = vector.load %arg7[%c0_10, %c0_11] : memref<16x256xf32, #tpu.memory_space<vmem>>, vector<16x256xf32>
      %c0_12 = arith.constant 0 : index
      %c0_13 = arith.constant 0 : index
      %14 = vector.load %arg5[%c0_12, %c0_13] : memref<1x256xf32, #tpu.memory_space<vmem>>, vector<1x256xf32>
      %15 = vector.broadcast %14 : vector<1x256xf32> to vector<16x256xf32>
      %16 = arith.addf %13, %15 : vector<16x256xf32>
      %cst_14 = arith.constant 5.000000e-01 : f32
      %17 = vector.broadcast %cst_14 : f32 to vector<16x256xf32>
      %18 = arith.mulf %16, %17 : vector<16x256xf32>
      %cst_15 = arith.constant 0.707106769 : f32
      %19 = vector.broadcast %cst_15 : f32 to vector<16x256xf32>
      %20 = arith.mulf %16, %19 : vector<16x256xf32>
      %21 = math.absf %20 : vector<16x256xf32>
      %cst_16 = arith.constant 0.327591091 : f32
      %22 = vector.broadcast %cst_16 : f32 to vector<16x256xf32>
      %23 = arith.mulf %22, %21 : vector<16x256xf32>
      %cst_17 = arith.constant 1.000000e+00 : f32
      %24 = vector.broadcast %cst_17 : f32 to vector<16x256xf32>
      %25 = arith.addf %24, %23 : vector<16x256xf32>
      %cst_18 = arith.constant 1.000000e+00 : f32
      %26 = vector.broadcast %cst_18 : f32 to vector<16x256xf32>
      %27 = arith.divf %26, %25 : vector<16x256xf32>
      %cst_19 = arith.constant 1.06140542 : f32
      %28 = vector.broadcast %cst_19 : f32 to vector<16x256xf32>
      %29 = arith.mulf %28, %27 : vector<16x256xf32>
      %cst_20 = arith.constant -1.45315206 : f32
      %30 = vector.broadcast %cst_20 : f32 to vector<16x256xf32>
      %31 = arith.addf %29, %30 : vector<16x256xf32>
      %32 = arith.mulf %31, %27 : vector<16x256xf32>
      %cst_21 = arith.constant 1.42141378 : f32
      %33 = vector.broadcast %cst_21 : f32 to vector<16x256xf32>
      %34 = arith.addf %32, %33 : vector<16x256xf32>
      %35 = arith.mulf %34, %27 : vector<16x256xf32>
      %cst_22 = arith.constant -0.284496725 : f32
      %36 = vector.broadcast %cst_22 : f32 to vector<16x256xf32>
      %37 = arith.addf %35, %36 : vector<16x256xf32>
      %38 = arith.mulf %37, %27 : vector<16x256xf32>
      %cst_23 = arith.constant 0.254829586 : f32
      %39 = vector.broadcast %cst_23 : f32 to vector<16x256xf32>
      %40 = arith.addf %38, %39 : vector<16x256xf32>
      %41 = arith.mulf %40, %27 : vector<16x256xf32>
      %cst_24 = arith.constant 0.000000e+00 : f32
      %42 = vector.broadcast %cst_24 : f32 to vector<16x256xf32>
      %43 = arith.subf %42, %21 : vector<16x256xf32>
      %44 = arith.mulf %43, %21 : vector<16x256xf32>
      %45 = math.exp %44 : vector<16x256xf32>
      %46 = arith.mulf %41, %45 : vector<16x256xf32>
      %cst_25 = arith.constant 1.000000e+00 : f32
      %47 = vector.broadcast %cst_25 : f32 to vector<16x256xf32>
      %48 = arith.subf %47, %46 : vector<16x256xf32>
      %cst_26 = arith.constant 0.000000e+00 : f32
      %49 = vector.broadcast %cst_26 : f32 to vector<16x256xf32>
      %50 = arith.cmpf olt, %20, %49 : vector<16x256xf32>
      %cst_27 = arith.constant 0.000000e+00 : f32
      %51 = vector.broadcast %cst_27 : f32 to vector<16x256xf32>
      %52 = arith.subf %51, %48 : vector<16x256xf32>
      %53 = arith.select %50, %52, %48 : vector<16x256xi1>, vector<16x256xf32>
      %cst_28 = arith.constant 1.000000e+00 : f32
      %54 = vector.broadcast %cst_28 : f32 to vector<16x256xf32>
      %55 = arith.addf %54, %53 : vector<16x256xf32>
      %56 = arith.mulf %18, %55 : vector<16x256xf32>
      %57 = arith.truncf %56 : vector<16x256xf32> to vector<16x256xbf16>
      %c0_29 = arith.constant 0 : index
      %c0_30 = arith.constant 0 : index
      %58 = vector.load %arg6[%c0_29, %c0_30] : memref<16x256xbf16, #tpu.memory_space<vmem>>, vector<16x256xbf16>
      tpu.vector_store %arg6[%c0_29, %c0_30], %57 {strides = array<i32>} : memref<16x256xbf16, #tpu.memory_space<vmem>>, vector<16x256xbf16>,
    } else {
    }
    return
  }
  func.func @transform_0(%arg0: i32, %arg1: i32, %arg2: i32) -> (i32, i32) {
    %c0_i32 = arith.constant 0 : i32
    return %arg0, %arg2 : i32, i32
  }
  func.func @transform_1(%arg0: i32, %arg1: i32, %arg2: i32) -> (i32, i32) {
    %c0_i32 = arith.constant 0 : i32
    return %arg2, %arg1 : i32, i32
  }
  func.func @transform_2(%arg0: i32, %arg1: i32, %arg2: i32) -> (i32, i32) {
    %c0_i32 = arith.constant 0 : i32
    %c0_i32_0 = arith.constant 0 : i32
    return %c0_i32, %arg1 : i32, i32
  }
  func.func @transform_3(%arg0: i32, %arg1: i32, %arg2: i32) -> (i32, i32) {
    %c0_i32 = arith.constant 0 : i32
    return %arg0, %arg1 : i32, i32
  }
}

module attributes {stable_mosaic.version = 11 : i64} {
  func.func @_dense_add_ln_kernel(%arg0: i32, %arg1: i32, %arg2: memref<16x256xbf16, #tpu.memory_space<vmem>>, %arg3: memref<256x128xbf16, #tpu.memory_space<vmem>>, %arg4: memref<1x128xf32, #tpu.memory_space<vmem>>, %arg5: memref<16x128xf32, #tpu.memory_space<vmem>>, %arg6: memref<1x128xf32, #tpu.memory_space<vmem>>, %arg7: memref<1x128xf32, #tpu.memory_space<vmem>>, %arg8: memref<16x128xf32, #tpu.memory_space<vmem>>, %arg9: memref<16x128xf32, #tpu.memory_space<vmem>>) attributes {dimension_semantics = [#tpu.dimension_semantics<parallel>, #tpu.dimension_semantics<arbitrary>], iteration_bounds = array<i64: 1, 1>, scalar_prefetch = 0 : i64, scratch_operands = 1 : i64, tpu.core_type = #tpu.core_type<tc>, window_params = [{transform_indices = @transform_0, window_bounds = array<i64: 16, 256>}, {transform_indices = @transform_1, window_bounds = array<i64: 256, 128>}, {pipeline_mode = #tpu.pipeline_mode<synchronous>, transform_indices = @transform_2, window_bounds = array<i64: 1, 128>}, {transform_indices = @transform_3, window_bounds = array<i64: 16, 128>}, {pipeline_mode = #tpu.pipeline_mode<synchronous>, transform_indices = @transform_4, window_bounds = array<i64: 1, 128>}, {pipeline_mode = #tpu.pipeline_mode<synchronous>, transform_indices = @transform_5, window_bounds = array<i64: 1, 128>}, {transform_indices = @transform_6, window_bounds = array<i64: 16, 128>}]} {
    %c0_i32 = arith.constant 0 : i32
    %0 = arith.cmpi eq, %arg1, %c0_i32 : i32
    %1 = arith.extui %0 : i1 to i32
    %c0_i32_0 = arith.constant 0 : i32
    %2 = arith.cmpi ne, %1, %c0_i32_0 : i32
    scf.if %2 {
      %cst_10 = arith.constant 0.000000e+00 : f32
      %12 = vector.broadcast %cst_10 : f32 to vector<16x128xf32>
      %c0_11 = arith.constant 0 : index
      %c0_12 = arith.constant 0 : index
      %13 = vector.load %arg9[%c0_11, %c0_12] : memref<16x128xf32, #tpu.memory_space<vmem>>, vector<16x128xf32>
      tpu.vector_store %arg9[%c0_11, %c0_12], %12 {strides = array<i32>} : memref<16x128xf32, #tpu.memory_space<vmem>>, vector<16x128xf32>,
    } else {
    }
    %c0 = arith.constant 0 : index
    %c0_1 = arith.constant 0 : index
    %3 = vector.load %arg9[%c0, %c0_1] : memref<16x128xf32, #tpu.memory_space<vmem>>, vector<16x128xf32>
    %c0_2 = arith.constant 0 : index
    %c0_3 = arith.constant 0 : index
    %4 = vector.load %arg2[%c0_2, %c0_3] : memref<16x256xbf16, #tpu.memory_space<vmem>>, vector<16x256xbf16>
    %c0_4 = arith.constant 0 : index
    %c0_5 = arith.constant 0 : index
    %5 = vector.load %arg3[%c0_4, %c0_5] : memref<256x128xbf16, #tpu.memory_space<vmem>>, vector<256x128xbf16>
    %cst = arith.constant dense<0.000000e+00> : vector<16x128xf32>
    %6 = tpu.matmul %4, %5, %cst {dimension_numbers = #tpu.dot_dimension_numbers<[1], [0], [0], [1], [0, 0, 1, 1], [], []>} : vector<16x256xbf16>, vector<256x128xbf16>, vector<16x128xf32> -> vector<16x128xf32>
    %7 = arith.addf %3, %6 : vector<16x128xf32>
    %c0_6 = arith.constant 0 : index
    %c0_7 = arith.constant 0 : index
    %8 = vector.load %arg9[%c0_6, %c0_7] : memref<16x128xf32, #tpu.memory_space<vmem>>, vector<16x128xf32>
    tpu.vector_store %arg9[%c0_6, %c0_7], %7 {strides = array<i32>} : memref<16x128xf32, #tpu.memory_space<vmem>>, vector<16x128xf32>,
    %c0_i32_8 = arith.constant 0 : i32
    %9 = arith.cmpi eq, %arg1, %c0_i32_8 : i32
    %10 = arith.extui %9 : i1 to i32
    %c0_i32_9 = arith.constant 0 : i32
    %11 = arith.cmpi ne, %10, %c0_i32_9 : i32
    scf.if %11 {
      %c0_10 = arith.constant 0 : index
      %c0_11 = arith.constant 0 : index
      %12 = vector.load %arg9[%c0_10, %c0_11] : memref<16x128xf32, #tpu.memory_space<vmem>>, vector<16x128xf32>
      %c0_12 = arith.constant 0 : index
      %c0_13 = arith.constant 0 : index
      %13 = vector.load %arg4[%c0_12, %c0_13] : memref<1x128xf32, #tpu.memory_space<vmem>>, vector<1x128xf32>
      %14 = vector.broadcast %13 : vector<1x128xf32> to vector<16x128xf32>
      %15 = arith.addf %12, %14 : vector<16x128xf32>
      %c0_14 = arith.constant 0 : index
      %c0_15 = arith.constant 0 : index
      %16 = vector.load %arg5[%c0_14, %c0_15] : memref<16x128xf32, #tpu.memory_space<vmem>>, vector<16x128xf32>
      %17 = arith.addf %15, %16 : vector<16x128xf32>
      %cst_16 = arith.constant dense<0.000000e+00> : vector<16xf32>
      %18 = vector.multi_reduction <add>, %17, %cst_16 [1] : vector<16x128xf32> to vector<16xf32>
      %19 = vector.shape_cast %18 : vector<16xf32> to vector<16x1xf32>
      %cst_17 = arith.constant 1.280000e+02 : f32
      %20 = vector.broadcast %cst_17 : f32 to vector<16x1xf32>
      %21 = arith.divf %19, %20 : vector<16x1xf32>
      %22 = vector.broadcast %21 : vector<16x1xf32> to vector<16x128xf32>
      %23 = arith.subf %17, %22 : vector<16x128xf32>
      %24 = arith.mulf %23, %23 : vector<16x128xf32>
      %cst_18 = arith.constant dense<0.000000e+00> : vector<16xf32>
      %25 = vector.multi_reduction <add>, %24, %cst_18 [1] : vector<16x128xf32> to vector<16xf32>
      %26 = vector.shape_cast %25 : vector<16xf32> to vector<16x1xf32>
      %cst_19 = arith.constant 1.280000e+02 : f32
      %27 = vector.broadcast %cst_19 : f32 to vector<16x1xf32>
      %28 = arith.divf %26, %27 : vector<16x1xf32>
      %cst_20 = arith.constant 9.99999996E-13 : f32
      %29 = vector.broadcast %cst_20 : f32 to vector<16x1xf32>
      %30 = arith.addf %28, %29 : vector<16x1xf32>
      %31 = math.rsqrt %30 : vector<16x1xf32>
      %32 = vector.broadcast %31 : vector<16x1xf32> to vector<16x128xf32>
      %33 = arith.mulf %23, %32 : vector<16x128xf32>
      %c0_21 = arith.constant 0 : index
      %c0_22 = arith.constant 0 : index
      %34 = vector.load %arg6[%c0_21, %c0_22] : memref<1x128xf32, #tpu.memory_space<vmem>>, vector<1x128xf32>
      %35 = vector.broadcast %34 : vector<1x128xf32> to vector<16x128xf32>
      %36 = arith.mulf %33, %35 : vector<16x128xf32>
      %c0_23 = arith.constant 0 : index
      %c0_24 = arith.constant 0 : index
      %37 = vector.load %arg7[%c0_23, %c0_24] : memref<1x128xf32, #tpu.memory_space<vmem>>, vector<1x128xf32>
      %38 = vector.broadcast %37 : vector<1x128xf32> to vector<16x128xf32>
      %39 = arith.addf %36, %38 : vector<16x128xf32>
      %c0_25 = arith.constant 0 : index
      %c0_26 = arith.constant 0 : index
      %40 = vector.load %arg8[%c0_25, %c0_26] : memref<16x128xf32, #tpu.memory_space<vmem>>, vector<16x128xf32>
      tpu.vector_store %arg8[%c0_25, %c0_26], %39 {strides = array<i32>} : memref<16x128xf32, #tpu.memory_space<vmem>>, vector<16x128xf32>,
    } else {
    }
    return
  }
  func.func @transform_0(%arg0: i32, %arg1: i32) -> (i32, i32) {
    %c0_i32 = arith.constant 0 : i32
    return %arg0, %arg1 : i32, i32
  }
  func.func @transform_1(%arg0: i32, %arg1: i32) -> (i32, i32) {
    %c0_i32 = arith.constant 0 : i32
    %c0_i32_0 = arith.constant 0 : i32
    return %arg1, %c0_i32 : i32, i32
  }
  func.func @transform_2(%arg0: i32, %arg1: i32) -> (i32, i32) {
    %c0_i32 = arith.constant 0 : i32
    %c0_i32_0 = arith.constant 0 : i32
    %c0_i32_1 = arith.constant 0 : i32
    return %c0_i32, %c0_i32_0 : i32, i32
  }
  func.func @transform_3(%arg0: i32, %arg1: i32) -> (i32, i32) {
    %c0_i32 = arith.constant 0 : i32
    %c0_i32_0 = arith.constant 0 : i32
    return %arg0, %c0_i32 : i32, i32
  }
  func.func @transform_4(%arg0: i32, %arg1: i32) -> (i32, i32) {
    %c0_i32 = arith.constant 0 : i32
    %c0_i32_0 = arith.constant 0 : i32
    %c0_i32_1 = arith.constant 0 : i32
    return %c0_i32, %c0_i32_0 : i32, i32
  }
  func.func @transform_5(%arg0: i32, %arg1: i32) -> (i32, i32) {
    %c0_i32 = arith.constant 0 : i32
    %c0_i32_0 = arith.constant 0 : i32
    %c0_i32_1 = arith.constant 0 : i32
    return %c0_i32, %c0_i32_0 : i32, i32
  }
  func.func @transform_6(%arg0: i32, %arg1: i32) -> (i32, i32) {
    %c0_i32 = arith.constant 0 : i32
    %c0_i32_0 = arith.constant 0 : i32
    return %arg0, %c0_i32 : i32, i32
  }
}

module attributes {stable_mosaic.version = 11 : i64} {
  func.func @_dense_kernel(%arg0: i32, %arg1: i32, %arg2: i32, %arg3: memref<16x128xf32, #tpu.memory_space<vmem>>, %arg4: memref<128x128xbf16, #tpu.memory_space<vmem>>, %arg5: memref<1x128xf32, #tpu.memory_space<vmem>>, %arg6: memref<16x128xbf16, #tpu.memory_space<vmem>>, %arg7: memref<16x128xf32, #tpu.memory_space<vmem>>) attributes {dimension_semantics = [#tpu.dimension_semantics<parallel>, #tpu.dimension_semantics<parallel>, #tpu.dimension_semantics<arbitrary>], iteration_bounds = array<i64: 1, 3, 1>, scalar_prefetch = 0 : i64, scratch_operands = 1 : i64, tpu.core_type = #tpu.core_type<tc>, window_params = [{transform_indices = @transform_0, window_bounds = array<i64: 16, 128>}, {transform_indices = @transform_1, window_bounds = array<i64: 128, 128>}, {transform_indices = @transform_2, window_bounds = array<i64: 1, 128>}, {transform_indices = @transform_3, window_bounds = array<i64: 16, 128>}]} {
    %c0_i32 = arith.constant 0 : i32
    %0 = arith.cmpi eq, %arg2, %c0_i32 : i32
    %1 = arith.extui %0 : i1 to i32
    %c0_i32_0 = arith.constant 0 : i32
    %2 = arith.cmpi ne, %1, %c0_i32_0 : i32
    scf.if %2 {
      %cst_10 = arith.constant 0.000000e+00 : f32
      %13 = vector.broadcast %cst_10 : f32 to vector<16x128xf32>
      %c0_11 = arith.constant 0 : index
      %c0_12 = arith.constant 0 : index
      %14 = vector.load %arg7[%c0_11, %c0_12] : memref<16x128xf32, #tpu.memory_space<vmem>>, vector<16x128xf32>
      tpu.vector_store %arg7[%c0_11, %c0_12], %13 {strides = array<i32>} : memref<16x128xf32, #tpu.memory_space<vmem>>, vector<16x128xf32>,
    } else {
    }
    %c0 = arith.constant 0 : index
    %c0_1 = arith.constant 0 : index
    %3 = vector.load %arg7[%c0, %c0_1] : memref<16x128xf32, #tpu.memory_space<vmem>>, vector<16x128xf32>
    %c0_2 = arith.constant 0 : index
    %c0_3 = arith.constant 0 : index
    %4 = vector.load %arg3[%c0_2, %c0_3] : memref<16x128xf32, #tpu.memory_space<vmem>>, vector<16x128xf32>
    %5 = arith.truncf %4 : vector<16x128xf32> to vector<16x128xbf16>
    %c0_4 = arith.constant 0 : index
    %c0_5 = arith.constant 0 : index
    %6 = vector.load %arg4[%c0_4, %c0_5] : memref<128x128xbf16, #tpu.memory_space<vmem>>, vector<128x128xbf16>
    %cst = arith.constant dense<0.000000e+00> : vector<16x128xf32>
    %7 = tpu.matmul %5, %6, %cst {dimension_numbers = #tpu.dot_dimension_numbers<[1], [0], [0], [1], [0, 0, 1, 1], [], []>} : vector<16x128xbf16>, vector<128x128xbf16>, vector<16x128xf32> -> vector<16x128xf32>
    %8 = arith.addf %3, %7 : vector<16x128xf32>
    %c0_6 = arith.constant 0 : index
    %c0_7 = arith.constant 0 : index
    %9 = vector.load %arg7[%c0_6, %c0_7] : memref<16x128xf32, #tpu.memory_space<vmem>>, vector<16x128xf32>
    tpu.vector_store %arg7[%c0_6, %c0_7], %8 {strides = array<i32>} : memref<16x128xf32, #tpu.memory_space<vmem>>, vector<16x128xf32>,
    %c0_i32_8 = arith.constant 0 : i32
    %10 = arith.cmpi eq, %arg2, %c0_i32_8 : i32
    %11 = arith.extui %10 : i1 to i32
    %c0_i32_9 = arith.constant 0 : i32
    %12 = arith.cmpi ne, %11, %c0_i32_9 : i32
    scf.if %12 {
      %c0_10 = arith.constant 0 : index
      %c0_11 = arith.constant 0 : index
      %13 = vector.load %arg7[%c0_10, %c0_11] : memref<16x128xf32, #tpu.memory_space<vmem>>, vector<16x128xf32>
      %c0_12 = arith.constant 0 : index
      %c0_13 = arith.constant 0 : index
      %14 = vector.load %arg5[%c0_12, %c0_13] : memref<1x128xf32, #tpu.memory_space<vmem>>, vector<1x128xf32>
      %15 = vector.broadcast %14 : vector<1x128xf32> to vector<16x128xf32>
      %16 = arith.addf %13, %15 : vector<16x128xf32>
      %17 = arith.truncf %16 : vector<16x128xf32> to vector<16x128xbf16>
      %c0_14 = arith.constant 0 : index
      %c0_15 = arith.constant 0 : index
      %18 = vector.load %arg6[%c0_14, %c0_15] : memref<16x128xbf16, #tpu.memory_space<vmem>>, vector<16x128xbf16>
      tpu.vector_store %arg6[%c0_14, %c0_15], %17 {strides = array<i32>} : memref<16x128xbf16, #tpu.memory_space<vmem>>, vector<16x128xbf16>,
    } else {
    }
    return
  }
  func.func @transform_0(%arg0: i32, %arg1: i32, %arg2: i32) -> (i32, i32) {
    %c0_i32 = arith.constant 0 : i32
    return %arg0, %arg2 : i32, i32
  }
  func.func @transform_1(%arg0: i32, %arg1: i32, %arg2: i32) -> (i32, i32) {
    %c0_i32 = arith.constant 0 : i32
    return %arg2, %arg1 : i32, i32
  }
  func.func @transform_2(%arg0: i32, %arg1: i32, %arg2: i32) -> (i32, i32) {
    %c0_i32 = arith.constant 0 : i32
    %c0_i32_0 = arith.constant 0 : i32
    return %c0_i32, %arg1 : i32, i32
  }
  func.func @transform_3(%arg0: i32, %arg1: i32, %arg2: i32) -> (i32, i32) {
    %c0_i32 = arith.constant 0 : i32
    return %arg0, %arg1 : i32, i32
  }
}

module attributes {stable_mosaic.version = 11 : i64} {
  func.func @_dense_kernel(%arg0: i32, %arg1: i32, %arg2: i32, %arg3: memref<16x128xf32, #tpu.memory_space<vmem>>, %arg4: memref<128x256xbf16, #tpu.memory_space<vmem>>, %arg5: memref<1x256xf32, #tpu.memory_space<vmem>>, %arg6: memref<16x256xbf16, #tpu.memory_space<vmem>>, %arg7: memref<16x256xf32, #tpu.memory_space<vmem>>) attributes {dimension_semantics = [#tpu.dimension_semantics<parallel>, #tpu.dimension_semantics<parallel>, #tpu.dimension_semantics<arbitrary>], iteration_bounds = array<i64: 1, 1, 1>, scalar_prefetch = 0 : i64, scratch_operands = 1 : i64, tpu.core_type = #tpu.core_type<tc>, window_params = [{transform_indices = @transform_0, window_bounds = array<i64: 16, 128>}, {transform_indices = @transform_1, window_bounds = array<i64: 128, 256>}, {transform_indices = @transform_2, window_bounds = array<i64: 1, 256>}, {transform_indices = @transform_3, window_bounds = array<i64: 16, 256>}]} {
    %c0_i32 = arith.constant 0 : i32
    %0 = arith.cmpi eq, %arg2, %c0_i32 : i32
    %1 = arith.extui %0 : i1 to i32
    %c0_i32_0 = arith.constant 0 : i32
    %2 = arith.cmpi ne, %1, %c0_i32_0 : i32
    scf.if %2 {
      %cst_10 = arith.constant 0.000000e+00 : f32
      %13 = vector.broadcast %cst_10 : f32 to vector<16x256xf32>
      %c0_11 = arith.constant 0 : index
      %c0_12 = arith.constant 0 : index
      %14 = vector.load %arg7[%c0_11, %c0_12] : memref<16x256xf32, #tpu.memory_space<vmem>>, vector<16x256xf32>
      tpu.vector_store %arg7[%c0_11, %c0_12], %13 {strides = array<i32>} : memref<16x256xf32, #tpu.memory_space<vmem>>, vector<16x256xf32>,
    } else {
    }
    %c0 = arith.constant 0 : index
    %c0_1 = arith.constant 0 : index
    %3 = vector.load %arg7[%c0, %c0_1] : memref<16x256xf32, #tpu.memory_space<vmem>>, vector<16x256xf32>
    %c0_2 = arith.constant 0 : index
    %c0_3 = arith.constant 0 : index
    %4 = vector.load %arg3[%c0_2, %c0_3] : memref<16x128xf32, #tpu.memory_space<vmem>>, vector<16x128xf32>
    %5 = arith.truncf %4 : vector<16x128xf32> to vector<16x128xbf16>
    %c0_4 = arith.constant 0 : index
    %c0_5 = arith.constant 0 : index
    %6 = vector.load %arg4[%c0_4, %c0_5] : memref<128x256xbf16, #tpu.memory_space<vmem>>, vector<128x256xbf16>
    %cst = arith.constant dense<0.000000e+00> : vector<16x256xf32>
    %7 = tpu.matmul %5, %6, %cst {dimension_numbers = #tpu.dot_dimension_numbers<[1], [0], [0], [1], [0, 0, 1, 1], [], []>} : vector<16x128xbf16>, vector<128x256xbf16>, vector<16x256xf32> -> vector<16x256xf32>
    %8 = arith.addf %3, %7 : vector<16x256xf32>
    %c0_6 = arith.constant 0 : index
    %c0_7 = arith.constant 0 : index
    %9 = vector.load %arg7[%c0_6, %c0_7] : memref<16x256xf32, #tpu.memory_space<vmem>>, vector<16x256xf32>
    tpu.vector_store %arg7[%c0_6, %c0_7], %8 {strides = array<i32>} : memref<16x256xf32, #tpu.memory_space<vmem>>, vector<16x256xf32>,
    %c0_i32_8 = arith.constant 0 : i32
    %10 = arith.cmpi eq, %arg2, %c0_i32_8 : i32
    %11 = arith.extui %10 : i1 to i32
    %c0_i32_9 = arith.constant 0 : i32
    %12 = arith.cmpi ne, %11, %c0_i32_9 : i32
    scf.if %12 {
      %c0_10 = arith.constant 0 : index
      %c0_11 = arith.constant 0 : index
      %13 = vector.load %arg7[%c0_10, %c0_11] : memref<16x256xf32, #tpu.memory_space<vmem>>, vector<16x256xf32>
      %c0_12 = arith.constant 0 : index
      %c0_13 = arith.constant 0 : index
      %14 = vector.load %arg5[%c0_12, %c0_13] : memref<1x256xf32, #tpu.memory_space<vmem>>, vector<1x256xf32>
      %15 = vector.broadcast %14 : vector<1x256xf32> to vector<16x256xf32>
      %16 = arith.addf %13, %15 : vector<16x256xf32>
      %cst_14 = arith.constant 5.000000e-01 : f32
      %17 = vector.broadcast %cst_14 : f32 to vector<16x256xf32>
      %18 = arith.mulf %16, %17 : vector<16x256xf32>
      %cst_15 = arith.constant 0.707106769 : f32
      %19 = vector.broadcast %cst_15 : f32 to vector<16x256xf32>
      %20 = arith.mulf %16, %19 : vector<16x256xf32>
      %21 = math.absf %20 : vector<16x256xf32>
      %cst_16 = arith.constant 0.327591091 : f32
      %22 = vector.broadcast %cst_16 : f32 to vector<16x256xf32>
      %23 = arith.mulf %22, %21 : vector<16x256xf32>
      %cst_17 = arith.constant 1.000000e+00 : f32
      %24 = vector.broadcast %cst_17 : f32 to vector<16x256xf32>
      %25 = arith.addf %24, %23 : vector<16x256xf32>
      %cst_18 = arith.constant 1.000000e+00 : f32
      %26 = vector.broadcast %cst_18 : f32 to vector<16x256xf32>
      %27 = arith.divf %26, %25 : vector<16x256xf32>
      %cst_19 = arith.constant 1.06140542 : f32
      %28 = vector.broadcast %cst_19 : f32 to vector<16x256xf32>
      %29 = arith.mulf %28, %27 : vector<16x256xf32>
      %cst_20 = arith.constant -1.45315206 : f32
      %30 = vector.broadcast %cst_20 : f32 to vector<16x256xf32>
      %31 = arith.addf %29, %30 : vector<16x256xf32>
      %32 = arith.mulf %31, %27 : vector<16x256xf32>
      %cst_21 = arith.constant 1.42141378 : f32
      %33 = vector.broadcast %cst_21 : f32 to vector<16x256xf32>
      %34 = arith.addf %32, %33 : vector<16x256xf32>
      %35 = arith.mulf %34, %27 : vector<16x256xf32>
      %cst_22 = arith.constant -0.284496725 : f32
      %36 = vector.broadcast %cst_22 : f32 to vector<16x256xf32>
      %37 = arith.addf %35, %36 : vector<16x256xf32>
      %38 = arith.mulf %37, %27 : vector<16x256xf32>
      %cst_23 = arith.constant 0.254829586 : f32
      %39 = vector.broadcast %cst_23 : f32 to vector<16x256xf32>
      %40 = arith.addf %38, %39 : vector<16x256xf32>
      %41 = arith.mulf %40, %27 : vector<16x256xf32>
      %cst_24 = arith.constant 0.000000e+00 : f32
      %42 = vector.broadcast %cst_24 : f32 to vector<16x256xf32>
      %43 = arith.subf %42, %21 : vector<16x256xf32>
      %44 = arith.mulf %43, %21 : vector<16x256xf32>
      %45 = math.exp %44 : vector<16x256xf32>
      %46 = arith.mulf %41, %45 : vector<16x256xf32>
      %cst_25 = arith.constant 1.000000e+00 : f32
      %47 = vector.broadcast %cst_25 : f32 to vector<16x256xf32>
      %48 = arith.subf %47, %46 : vector<16x256xf32>
      %cst_26 = arith.constant 0.000000e+00 : f32
      %49 = vector.broadcast %cst_26 : f32 to vector<16x256xf32>
      %50 = arith.cmpf olt, %20, %49 : vector<16x256xf32>
      %cst_27 = arith.constant 0.000000e+00 : f32
      %51 = vector.broadcast %cst_27 : f32 to vector<16x256xf32>
      %52 = arith.subf %51, %48 : vector<16x256xf32>
      %53 = arith.select %50, %52, %48 : vector<16x256xi1>, vector<16x256xf32>
      %cst_28 = arith.constant 1.000000e+00 : f32
      %54 = vector.broadcast %cst_28 : f32 to vector<16x256xf32>
      %55 = arith.addf %54, %53 : vector<16x256xf32>
      %56 = arith.mulf %18, %55 : vector<16x256xf32>
      %57 = arith.truncf %56 : vector<16x256xf32> to vector<16x256xbf16>
      %c0_29 = arith.constant 0 : index
      %c0_30 = arith.constant 0 : index
      %58 = vector.load %arg6[%c0_29, %c0_30] : memref<16x256xbf16, #tpu.memory_space<vmem>>, vector<16x256xbf16>
      tpu.vector_store %arg6[%c0_29, %c0_30], %57 {strides = array<i32>} : memref<16x256xbf16, #tpu.memory_space<vmem>>, vector<16x256xbf16>,
    } else {
    }
    return
  }
  func.func @transform_0(%arg0: i32, %arg1: i32, %arg2: i32) -> (i32, i32) {
    %c0_i32 = arith.constant 0 : i32
    return %arg0, %arg2 : i32, i32
  }
  func.func @transform_1(%arg0: i32, %arg1: i32, %arg2: i32) -> (i32, i32) {
    %c0_i32 = arith.constant 0 : i32
    return %arg2, %arg1 : i32, i32
  }
  func.func @transform_2(%arg0: i32, %arg1: i32, %arg2: i32) -> (i32, i32) {
    %c0_i32 = arith.constant 0 : i32
    %c0_i32_0 = arith.constant 0 : i32
    return %c0_i32, %arg1 : i32, i32
  }
  func.func @transform_3(%arg0: i32, %arg1: i32, %arg2: i32) -> (i32, i32) {
    %c0_i32 = arith.constant 0 : i32
    return %arg0, %arg1 : i32, i32
  }
}

module attributes {stable_mosaic.version = 11 : i64} {
  func.func @_dense_add_ln_kernel(%arg0: i32, %arg1: i32, %arg2: memref<16x256xbf16, #tpu.memory_space<vmem>>, %arg3: memref<256x128xbf16, #tpu.memory_space<vmem>>, %arg4: memref<1x128xf32, #tpu.memory_space<vmem>>, %arg5: memref<16x128xf32, #tpu.memory_space<vmem>>, %arg6: memref<1x128xf32, #tpu.memory_space<vmem>>, %arg7: memref<1x128xf32, #tpu.memory_space<vmem>>, %arg8: memref<16x128xf32, #tpu.memory_space<vmem>>, %arg9: memref<16x128xf32, #tpu.memory_space<vmem>>) attributes {dimension_semantics = [#tpu.dimension_semantics<parallel>, #tpu.dimension_semantics<arbitrary>], iteration_bounds = array<i64: 1, 1>, scalar_prefetch = 0 : i64, scratch_operands = 1 : i64, tpu.core_type = #tpu.core_type<tc>, window_params = [{transform_indices = @transform_0, window_bounds = array<i64: 16, 256>}, {transform_indices = @transform_1, window_bounds = array<i64: 256, 128>}, {pipeline_mode = #tpu.pipeline_mode<synchronous>, transform_indices = @transform_2, window_bounds = array<i64: 1, 128>}, {transform_indices = @transform_3, window_bounds = array<i64: 16, 128>}, {pipeline_mode = #tpu.pipeline_mode<synchronous>, transform_indices = @transform_4, window_bounds = array<i64: 1, 128>}, {pipeline_mode = #tpu.pipeline_mode<synchronous>, transform_indices = @transform_5, window_bounds = array<i64: 1, 128>}, {transform_indices = @transform_6, window_bounds = array<i64: 16, 128>}]} {
    %c0_i32 = arith.constant 0 : i32
    %0 = arith.cmpi eq, %arg1, %c0_i32 : i32
    %1 = arith.extui %0 : i1 to i32
    %c0_i32_0 = arith.constant 0 : i32
    %2 = arith.cmpi ne, %1, %c0_i32_0 : i32
    scf.if %2 {
      %cst_10 = arith.constant 0.000000e+00 : f32
      %12 = vector.broadcast %cst_10 : f32 to vector<16x128xf32>
      %c0_11 = arith.constant 0 : index
      %c0_12 = arith.constant 0 : index
      %13 = vector.load %arg9[%c0_11, %c0_12] : memref<16x128xf32, #tpu.memory_space<vmem>>, vector<16x128xf32>
      tpu.vector_store %arg9[%c0_11, %c0_12], %12 {strides = array<i32>} : memref<16x128xf32, #tpu.memory_space<vmem>>, vector<16x128xf32>,
    } else {
    }
    %c0 = arith.constant 0 : index
    %c0_1 = arith.constant 0 : index
    %3 = vector.load %arg9[%c0, %c0_1] : memref<16x128xf32, #tpu.memory_space<vmem>>, vector<16x128xf32>
    %c0_2 = arith.constant 0 : index
    %c0_3 = arith.constant 0 : index
    %4 = vector.load %arg2[%c0_2, %c0_3] : memref<16x256xbf16, #tpu.memory_space<vmem>>, vector<16x256xbf16>
    %c0_4 = arith.constant 0 : index
    %c0_5 = arith.constant 0 : index
    %5 = vector.load %arg3[%c0_4, %c0_5] : memref<256x128xbf16, #tpu.memory_space<vmem>>, vector<256x128xbf16>
    %cst = arith.constant dense<0.000000e+00> : vector<16x128xf32>
    %6 = tpu.matmul %4, %5, %cst {dimension_numbers = #tpu.dot_dimension_numbers<[1], [0], [0], [1], [0, 0, 1, 1], [], []>} : vector<16x256xbf16>, vector<256x128xbf16>, vector<16x128xf32> -> vector<16x128xf32>
    %7 = arith.addf %3, %6 : vector<16x128xf32>
    %c0_6 = arith.constant 0 : index
    %c0_7 = arith.constant 0 : index
    %8 = vector.load %arg9[%c0_6, %c0_7] : memref<16x128xf32, #tpu.memory_space<vmem>>, vector<16x128xf32>
    tpu.vector_store %arg9[%c0_6, %c0_7], %7 {strides = array<i32>} : memref<16x128xf32, #tpu.memory_space<vmem>>, vector<16x128xf32>,
    %c0_i32_8 = arith.constant 0 : i32
    %9 = arith.cmpi eq, %arg1, %c0_i32_8 : i32
    %10 = arith.extui %9 : i1 to i32
    %c0_i32_9 = arith.constant 0 : i32
    %11 = arith.cmpi ne, %10, %c0_i32_9 : i32
    scf.if %11 {
      %c0_10 = arith.constant 0 : index
      %c0_11 = arith.constant 0 : index
      %12 = vector.load %arg9[%c0_10, %c0_11] : memref<16x128xf32, #tpu.memory_space<vmem>>, vector<16x128xf32>
      %c0_12 = arith.constant 0 : index
      %c0_13 = arith.constant 0 : index
      %13 = vector.load %arg4[%c0_12, %c0_13] : memref<1x128xf32, #tpu.memory_space<vmem>>, vector<1x128xf32>
      %14 = vector.broadcast %13 : vector<1x128xf32> to vector<16x128xf32>
      %15 = arith.addf %12, %14 : vector<16x128xf32>
      %c0_14 = arith.constant 0 : index
      %c0_15 = arith.constant 0 : index
      %16 = vector.load %arg5[%c0_14, %c0_15] : memref<16x128xf32, #tpu.memory_space<vmem>>, vector<16x128xf32>
      %17 = arith.addf %15, %16 : vector<16x128xf32>
      %cst_16 = arith.constant dense<0.000000e+00> : vector<16xf32>
      %18 = vector.multi_reduction <add>, %17, %cst_16 [1] : vector<16x128xf32> to vector<16xf32>
      %19 = vector.shape_cast %18 : vector<16xf32> to vector<16x1xf32>
      %cst_17 = arith.constant 1.280000e+02 : f32
      %20 = vector.broadcast %cst_17 : f32 to vector<16x1xf32>
      %21 = arith.divf %19, %20 : vector<16x1xf32>
      %22 = vector.broadcast %21 : vector<16x1xf32> to vector<16x128xf32>
      %23 = arith.subf %17, %22 : vector<16x128xf32>
      %24 = arith.mulf %23, %23 : vector<16x128xf32>
      %cst_18 = arith.constant dense<0.000000e+00> : vector<16xf32>
      %25 = vector.multi_reduction <add>, %24, %cst_18 [1] : vector<16x128xf32> to vector<16xf32>
      %26 = vector.shape_cast %25 : vector<16xf32> to vector<16x1xf32>
      %cst_19 = arith.constant 1.280000e+02 : f32
      %27 = vector.broadcast %cst_19 : f32 to vector<16x1xf32>
      %28 = arith.divf %26, %27 : vector<16x1xf32>
      %cst_20 = arith.constant 9.99999996E-13 : f32
      %29 = vector.broadcast %cst_20 : f32 to vector<16x1xf32>
      %30 = arith.addf %28, %29 : vector<16x1xf32>
      %31 = math.rsqrt %30 : vector<16x1xf32>
      %32 = vector.broadcast %31 : vector<16x1xf32> to vector<16x128xf32>
      %33 = arith.mulf %23, %32 : vector<16x128xf32>
      %c0_21 = arith.constant 0 : index
      %c0_22 = arith.constant 0 : index
      %34 = vector.load %arg6[%c0_21, %c0_22] : memref<1x128xf32, #tpu.memory_space<vmem>>, vector<1x128xf32>
      %35 = vector.broadcast %34 : vector<1x128xf32> to vector<16x128xf32>
      %36 = arith.mulf %33, %35 : vector<16x128xf32>
      %c0_23 = arith.constant 0 : index
      %c0_24 = arith.constant 0 : index
      %37 = vector.load %arg7[%c0_23, %c0_24] : memref<1x128xf32, #tpu.memory_space<vmem>>, vector<1x128xf32>
      %38 = vector.broadcast %37 : vector<1x128xf32> to vector<16x128xf32>
      %39 = arith.addf %36, %38 : vector<16x128xf32>
      %c0_25 = arith.constant 0 : index
      %c0_26 = arith.constant 0 : index
      %40 = vector.load %arg8[%c0_25, %c0_26] : memref<16x128xf32, #tpu.memory_space<vmem>>, vector<16x128xf32>
      tpu.vector_store %arg8[%c0_25, %c0_26], %39 {strides = array<i32>} : memref<16x128xf32, #tpu.memory_space<vmem>>, vector<16x128xf32>,
    } else {
    }
    return
  }
  func.func @transform_0(%arg0: i32, %arg1: i32) -> (i32, i32) {
    %c0_i32 = arith.constant 0 : i32
    return %arg0, %arg1 : i32, i32
  }
  func.func @transform_1(%arg0: i32, %arg1: i32) -> (i32, i32) {
    %c0_i32 = arith.constant 0 : i32
    %c0_i32_0 = arith.constant 0 : i32
    return %arg1, %c0_i32 : i32, i32
  }
  func.func @transform_2(%arg0: i32, %arg1: i32) -> (i32, i32) {
    %c0_i32 = arith.constant 0 : i32
    %c0_i32_0 = arith.constant 0 : i32
    %c0_i32_1 = arith.constant 0 : i32
    return %c0_i32, %c0_i32_0 : i32, i32
  }
  func.func @transform_3(%arg0: i32, %arg1: i32) -> (i32, i32) {
    %c0_i32 = arith.constant 0 : i32
    %c0_i32_0 = arith.constant 0 : i32
    return %arg0, %c0_i32 : i32, i32
  }
  func.func @transform_4(%arg0: i32, %arg1: i32) -> (i32, i32) {
    %c0_i32 = arith.constant 0 : i32
    %c0_i32_0 = arith.constant 0 : i32
    %c0_i32_1 = arith.constant 0 : i32
    return %c0_i32, %c0_i32_0 : i32, i32
  }
  func.func @transform_5(%arg0: i32, %arg1: i32) -> (i32, i32) {
    %c0_i32 = arith.constant 0 : i32
    %c0_i32_0 = arith.constant 0 : i32
    %c0_i32_1 = arith.constant 0 : i32
    return %c0_i32, %c0_i32_0 : i32, i32
  }
  func.func @transform_6(%arg0: i32, %arg1: i32) -> (i32, i32) {
    %c0_i32 = arith.constant 0 : i32
    %c0_i32_0 = arith.constant 0 : i32
    return %arg0, %c0_i32 : i32, i32
  }
}

module attributes {stable_mosaic.version = 11 : i64} {
  func.func @_dense_kernel(%arg0: i32, %arg1: i32, %arg2: i32, %arg3: memref<2x128xf32, #tpu.memory_space<vmem>>, %arg4: memref<128x128xbf16, #tpu.memory_space<vmem>>, %arg5: memref<1x128xf32, #tpu.memory_space<vmem>>, %arg6: memref<2x128xf32, #tpu.memory_space<vmem>>, %arg7: memref<2x128xf32, #tpu.memory_space<vmem>>) attributes {dimension_semantics = [#tpu.dimension_semantics<parallel>, #tpu.dimension_semantics<parallel>, #tpu.dimension_semantics<arbitrary>], iteration_bounds = array<i64: 1, 1, 1>, scalar_prefetch = 0 : i64, scratch_operands = 1 : i64, tpu.core_type = #tpu.core_type<tc>, window_params = [{transform_indices = @transform_0, window_bounds = array<i64: 2, 128>}, {transform_indices = @transform_1, window_bounds = array<i64: 128, 128>}, {transform_indices = @transform_2, window_bounds = array<i64: 1, 128>}, {transform_indices = @transform_3, window_bounds = array<i64: 2, 128>}]} {
    %c0_i32 = arith.constant 0 : i32
    %0 = arith.cmpi eq, %arg2, %c0_i32 : i32
    %1 = arith.extui %0 : i1 to i32
    %c0_i32_0 = arith.constant 0 : i32
    %2 = arith.cmpi ne, %1, %c0_i32_0 : i32
    scf.if %2 {
      %cst_10 = arith.constant 0.000000e+00 : f32
      %13 = vector.broadcast %cst_10 : f32 to vector<2x128xf32>
      %c0_11 = arith.constant 0 : index
      %c0_12 = arith.constant 0 : index
      %14 = vector.load %arg7[%c0_11, %c0_12] : memref<2x128xf32, #tpu.memory_space<vmem>>, vector<2x128xf32>
      tpu.vector_store %arg7[%c0_11, %c0_12], %13 {strides = array<i32>} : memref<2x128xf32, #tpu.memory_space<vmem>>, vector<2x128xf32>,
    } else {
    }
    %c0 = arith.constant 0 : index
    %c0_1 = arith.constant 0 : index
    %3 = vector.load %arg7[%c0, %c0_1] : memref<2x128xf32, #tpu.memory_space<vmem>>, vector<2x128xf32>
    %c0_2 = arith.constant 0 : index
    %c0_3 = arith.constant 0 : index
    %4 = vector.load %arg3[%c0_2, %c0_3] : memref<2x128xf32, #tpu.memory_space<vmem>>, vector<2x128xf32>
    %5 = arith.truncf %4 : vector<2x128xf32> to vector<2x128xbf16>
    %c0_4 = arith.constant 0 : index
    %c0_5 = arith.constant 0 : index
    %6 = vector.load %arg4[%c0_4, %c0_5] : memref<128x128xbf16, #tpu.memory_space<vmem>>, vector<128x128xbf16>
    %cst = arith.constant dense<0.000000e+00> : vector<2x128xf32>
    %7 = tpu.matmul %5, %6, %cst {dimension_numbers = #tpu.dot_dimension_numbers<[1], [0], [0], [1], [0, 0, 1, 1], [], []>} : vector<2x128xbf16>, vector<128x128xbf16>, vector<2x128xf32> -> vector<2x128xf32>
    %8 = arith.addf %3, %7 : vector<2x128xf32>
    %c0_6 = arith.constant 0 : index
    %c0_7 = arith.constant 0 : index
    %9 = vector.load %arg7[%c0_6, %c0_7] : memref<2x128xf32, #tpu.memory_space<vmem>>, vector<2x128xf32>
    tpu.vector_store %arg7[%c0_6, %c0_7], %8 {strides = array<i32>} : memref<2x128xf32, #tpu.memory_space<vmem>>, vector<2x128xf32>,
    %c0_i32_8 = arith.constant 0 : i32
    %10 = arith.cmpi eq, %arg2, %c0_i32_8 : i32
    %11 = arith.extui %10 : i1 to i32
    %c0_i32_9 = arith.constant 0 : i32
    %12 = arith.cmpi ne, %11, %c0_i32_9 : i32
    scf.if %12 {
      %c0_10 = arith.constant 0 : index
      %c0_11 = arith.constant 0 : index
      %13 = vector.load %arg7[%c0_10, %c0_11] : memref<2x128xf32, #tpu.memory_space<vmem>>, vector<2x128xf32>
      %c0_12 = arith.constant 0 : index
      %c0_13 = arith.constant 0 : index
      %14 = vector.load %arg5[%c0_12, %c0_13] : memref<1x128xf32, #tpu.memory_space<vmem>>, vector<1x128xf32>
      %15 = vector.broadcast %14 : vector<1x128xf32> to vector<2x128xf32>
      %16 = arith.addf %13, %15 : vector<2x128xf32>
      %17 = math.tanh %16 : vector<2x128xf32>
      %c0_14 = arith.constant 0 : index
      %c0_15 = arith.constant 0 : index
      %18 = vector.load %arg6[%c0_14, %c0_15] : memref<2x128xf32, #tpu.memory_space<vmem>>, vector<2x128xf32>
      tpu.vector_store %arg6[%c0_14, %c0_15], %17 {strides = array<i32>} : memref<2x128xf32, #tpu.memory_space<vmem>>, vector<2x128xf32>,
    } else {
    }
    return
  }
  func.func @transform_0(%arg0: i32, %arg1: i32, %arg2: i32) -> (i32, i32) {
    %c0_i32 = arith.constant 0 : i32
    return %arg0, %arg2 : i32, i32
  }
  func.func @transform_1(%arg0: i32, %arg1: i32, %arg2: i32) -> (i32, i32) {
    %c0_i32 = arith.constant 0 : i32
    return %arg2, %arg1 : i32, i32
  }
  func.func @transform_2(%arg0: i32, %arg1: i32, %arg2: i32) -> (i32, i32) {
    %c0_i32 = arith.constant 0 : i32
    %c0_i32_0 = arith.constant 0 : i32
    return %c0_i32, %arg1 : i32, i32
  }
  func.func @transform_3(%arg0: i32, %arg1: i32, %arg2: i32) -> (i32, i32) {
    %c0_i32 = arith.constant 0 : i32
    return %arg0, %arg1 : i32, i32
  }
}

</mosaic_0001>

<llo_original>
// kernel: bert_forward.12
$region0: #{bert_forward.12}
  #allocation0 [shape = 'u32[]', space=smem, size = 0x4, offset = 0x4, fixed_abs, tag = 'smem constant byte address 0x4 - core index']
  #allocation1 [shape = 'u32[72,128]{1,0:T(1,128)}', space=vmem, size = 0x9000, scoped, tag = 'internal scratch']
  %s0 = inlined_call_operand.vmem [shape: f32[16,128], index: 0, kind: input, shape index: {}]
  %s1 = inlined_call_operand.vmem [shape: f32[16,128], index: 1, kind: input, shape index: {}]
  %s2 = inlined_call_operand.vmem [shape: f32[1,128], index: 2, kind: input, shape index: {}]
  %s3 = inlined_call_operand.vmem [shape: f32[1,128], index: 3, kind: input, shape index: {}]
  %s4 = inlined_call_operand.vmem [shape: f32[16,128], index: 4, kind: output, shape index: {}]
  %s5 = sld [smem:[#allocation0]]
  $region26: #{bert_forward.12} parent=0
    _
  %s7 = ssub.s32 1, %s5
  %s8 = scalar_select 0, %s7, %s5
  // Predicated region
  $region2: #{bert_forward.12} parent=0 // pred_check
    _
  $region3: #{bert_forward.12} parent=0 // pred_check_branch
    %10 = sbr.rel (0) target = $region5
  $region4: #{bert_forward.12} parent=0 // pred_region
    _
  $region5: #{bert_forward.12} parent=0 // pred_fallthru
    _
  // Predicated region
  $region6: #{bert_forward.12} parent=0 // pred_check
    _
  $region7: #{bert_forward.12} parent=0 // pred_check_branch
    %12 = sbr.rel (0) target = $region9
  $region8: #{bert_forward.12} parent=0 // pred_region
    _
  $region9: #{bert_forward.12} parent=0 // pred_fallthru
    _
  // Predicated region
  $region10: #{bert_forward.12} parent=0 // pred_check
    _
  $region11: #{bert_forward.12} parent=0 // pred_check_branch
    %14 = sbr.rel (0) target = $region13
  $region12: #{bert_forward.12} parent=0 // pred_region
    _
  $region13: #{bert_forward.12} parent=0 // pred_fallthru
    _
  // Predicated region
  $region14: #{bert_forward.12} parent=0 // pred_check
    _
  $region15: #{bert_forward.12} parent=0 // pred_check_branch
    %16 = sbr.rel (0) target = $region17
  $region16: #{bert_forward.12} parent=0 // pred_region
    _
  $region17: #{bert_forward.12} parent=0 // pred_fallthru
    _
  %v17 = vld [vmem:[%s0] sm:$0xff]
  %v18 = vld [vmem:[%s0 + $0x8] sm:$0xff]
  %v19 = vld [vmem:[%s1] sm:$0xff]
  %v20 = vld [vmem:[%s1 + $0x8] sm:$0xff]
  %v21 = vadd.f32 %v17, %v19
  %v22 = vadd.f32 %v18, %v20
  %23 = vadd.xlane.f32.xlu0 %v21
  %v24 = vpop.xlane.xlu0 %23
  %25 = vadd.xlane.f32.xlu0 %v22
  %v26 = vpop.xlane.xlu0 %25
  %v27 = vrcp.pop 128.0
  %v28 = vmul.f32 128.0, %v27
  %v29 = vsub.f32 1.0, %v28
  %v30 = vmul.f32 %v27, %v29
  %v31 = vadd.f32 %v27, %v30
  %vm32 = vweird.f32 %v27
  %v33 = vsel %vm32, %v27, %v31
  %v34 = vmul.f32 %v24, %v33
  %v35 = vmul.f32 %v26, %v33
  %v36 = vsub.f32 %v21, %v34
  %v37 = vsub.f32 %v22, %v35
  %v38 = vmul.f32 %v36, %v36
  %v39 = vmul.f32 %v37, %v37
  %40 = vadd.xlane.f32.xlu0 %v38
  %v41 = vpop.xlane.xlu0 %40
  %42 = vadd.xlane.f32.xlu0 %v39
  %v43 = vpop.xlane.xlu0 %42
  %v44 = vmul.f32 %v41, %v33
  %v45 = vmul.f32 %v43, %v33
  %v46 = vadd.f32 %v44, 1e-12
  %v47 = vadd.f32 %v45, 1e-12
  %v48 = vrsqrt.pop %v46
  %v49 = vmul.f32 %v48, %v46
  %v50 = vmul.f32 %v49, %v48
  %v51 = vmul.f32 0.5, %v50
  %v52 = vsub.f32 1.5, %v51
  %v53 = vmul.f32 %v48, %v52
  %vm54 = vweird.f32 %v46
  %vm55 = vweird.f32 %v48
  %vm56 = vmor %vm54, %vm55
  %v57 = vsel %vm56, %v48, %v53
  %v58 = vrsqrt.pop %v47
  %v59 = vmul.f32 %v58, %v47
  %v60 = vmul.f32 %v59, %v58
  %v61 = vmul.f32 0.5, %v60
  %v62 = vsub.f32 1.5, %v61
  %v63 = vmul.f32 %v58, %v62
  %vm64 = vweird.f32 %v47
  %vm65 = vweird.f32 %v58
  %vm66 = vmor %vm64, %vm65
  %v67 = vsel %vm66, %v58, %v63
  %v68 = vmul.f32 %v36, %v57
  %v69 = vmul.f32 %v37, %v67
  %v70 = vld [vmem:[%s2] sm:$0x1]
  %v72 = vperm.slane %v70, 0
  %v74 = vmul.f32 %v68, %v72
  %v75 = vmul.f32 %v69, %v72
  %v76 = vld [vmem:[%s3] sm:$0x1]
  %v78 = vperm.slane %v76, 0
  %v80 = vadd.f32 %v74, %v78
  %v81 = vadd.f32 %v75, %v78
  %82 = vst [vmem:[%s4] sm:$0xff] %v80
  %83 = vst [vmem:[%s4 + $0x8] sm:$0xff] %v81
  // Predicated region
  $region18: #{bert_forward.12} parent=0 // pred_check
    _
  $region19: #{bert_forward.12} parent=0 // pred_check_branch
    %85 = sbr.rel (0) target = $region21
  $region20: #{bert_forward.12} parent=0 // pred_region
    _
  $region21: #{bert_forward.12} parent=0 // pred_fallthru
    _
  // Predicated region
  $region22: #{bert_forward.12} parent=0 // pred_check
    _
  $region23: #{bert_forward.12} parent=0 // pred_check_branch
    %87 = sbr.rel (0) target = $region25
  $region24: #{bert_forward.12} parent=0 // pred_region
    _
  $region25: #{bert_forward.12} parent=0 // pred_fallthru
    _

// kernel: bert_forward.13
$region0: #{bert_forward.13}
  #allocation0 [shape = 'u32[]', space=smem, size = 0x4, offset = 0x4, fixed_abs, tag = 'smem constant byte address 0x4 - core index']
  #allocation1 [shape = 'u32[72,128]{1,0:T(1,128)}', space=vmem, size = 0x9000, scoped, tag = 'internal scratch']
  #allocation2 [shape = 'f32[16,128]{1,0:T(8,128)}', space=vmem, size = 0x2000, scoped, tag = 'scratch operand']
  %s0 = inlined_call_operand.vmem [shape: f32[16,128], index: 0, kind: input, shape index: {}]
  %s1 = inlined_call_operand.vmem [shape: bf16[128,384], index: 1, kind: input, shape index: {}]
  %s2 = inlined_call_operand.vmem [shape: f32[1,384], index: 2, kind: input, shape index: {}]
  %s3 = inlined_call_operand.vmem [shape: bf16[16,384], index: 3, kind: output, shape index: {}]
  %s4 = sld [smem:[#allocation0]]
  $region131: #{bert_forward.13} parent=0
    _
  %s6 = ssub.s32 1, %s4
  %s7 = scalar_select 0, %s6, %s4
  $region1: #{bert_forward.13} parent=0
    #allocation3 [shape = 'u8[65536]{0}', space=vmem, size = 0x10000, scoped, tag = 'input window, operand 1']
    #allocation4 [shape = 'u8[8192]{0}', space=vmem, size = 0x2000, scoped, tag = 'output window, operand 0']
    loop: start=0, step=1, limit=5
    $region2: #{bert_forward.13} parent=1 // loop_pre_header
      _
    $region3: #{bert_forward.13} parent=1 // loop_header
      %s9 = sphi 0, %s13
      %p10 = scmp.ge.s32.totalorder %s9, 5
      %s16 = sphi 0, %s35
      %s17 = sphi 0, %s31
      %s18 = sphi 0, %s27
      %s19 = sphi 0, %s16
      %s20 = sphi 0, %s17
      %s21 = sphi 0, %s18
      %s22 = sphi 0, %s19
      %s23 = sphi 0, %s20
      %s24 = sphi 0, %s21
      %s40 = sphi 0, %s42
      %s43 = sphi 0, %s40
      %s44 = sphi 0, %s43
      %s60 = sphi 0, %s44
      %s68 = sphi 0, %s70
      %s71 = sphi 0, %s68
      %s72 = sphi 0, %s71
      %s88 = sphi 0, %s72
      %s94 = sphi 0, %s96
      %s97 = sphi 0, %s94
      %s98 = sphi 0, %s97
      %s114 = sphi 0, %s98
      %s122 = sphi 0, %s124
      %s125 = sphi 0, %s122
      %s126 = sphi 0, %s125
      %s142 = sphi 0, %s126
    $region4: #{bert_forward.13} parent=1 // loop_header_branch
      %12 = sbr.rel (%p10) target = $region8
    $region5: #{bert_forward.13} parent=1 // loop_body
      %s14 = ssub.s32 %s9, 1
      %s15 = ssub.s32 %s9, 2
      %s25 = sadd.s32 1, %s18
      %p26 = scmp.ge.s32.totalorder %s25, 1
      %s27 = scalar_select %p26, 0, %s25
      %s28 = sadd.s32 1, %s17
      %s29 = scalar_select %p26, %s28, %s17
      %p30 = scmp.ge.s32.totalorder %s29, 3
      %s31 = scalar_select %p30, 0, %s29
      %s32 = sadd.s32 1, %s16
      %s33 = scalar_select %p30, %s32, %s16
      %p34 = scmp.ge.s32.totalorder %s33, 1
      %s35 = scalar_select %p34, 0, %s33
      %s36 = ssub.s32 %s16, %s35
      %s37 = ssub.s32 %s18, %s27
      %s38 = sor.u32 %s36, %s37
      %p39 = scmp.eq.s32.totalorder %s38, 0
      %s41 = sadd.s32 %s40, 1
      %s42 = scalar_select %p39, %s40, %s41
      %p45 = pneg %p39
      %p46 = scmp.eq.s32.totalorder %s9, 2
      %p47 = por %p45, %p46
      %p48 = scmp.ne.s32.totalorder %s40, %s43
      %p49 = scmp.eq.s32.totalorder %s9, 0
      %p50 = por %p48, %p49
      %p51 = scmp.ne.s32.totalorder %s40, %s43
      %p52 = scmp.eq.s32.totalorder %s14, 2
      %p53 = por %p51, %p52
      %p54 = scmp.ne.s32.totalorder %s43, %s44
      %p55 = scmp.eq.s32.totalorder %s14, 0
      %p56 = por %p54, %p55
      %p57 = scmp.ne.s32.totalorder %s43, %s44
      %p58 = scmp.eq.s32.totalorder %s15, 2
      %p59 = por %p57, %p58
      %p61 = scmp.ne.s32.totalorder %s44, %s60
      %p62 = scmp.eq.s32.totalorder %s15, 0
      %p63 = por %p61, %p62
      %s64 = ssub.s32 %s18, %s27
      %s65 = ssub.s32 %s17, %s31
      %s66 = sor.u32 %s64, %s65
      %p67 = scmp.eq.s32.totalorder %s66, 0
      %s69 = sadd.s32 %s68, 1
      %s70 = scalar_select %p67, %s68, %s69
      %p73 = pneg %p67
      %p74 = scmp.eq.s32.totalorder %s9, 2
      %p75 = por %p73, %p74
      %p76 = scmp.ne.s32.totalorder %s68, %s71
      %p77 = scmp.eq.s32.totalorder %s9, 0
      %p78 = por %p76, %p77
      %p79 = scmp.ne.s32.totalorder %s68, %s71
      %p80 = scmp.eq.s32.totalorder %s14, 2
      %p81 = por %p79, %p80
      %p82 = scmp.ne.s32.totalorder %s71, %s72
      %p83 = scmp.eq.s32.totalorder %s14, 0
      %p84 = por %p82, %p83
      %p85 = scmp.ne.s32.totalorder %s71, %s72
      %p86 = scmp.eq.s32.totalorder %s15, 2
      %p87 = por %p85, %p86
      %p89 = scmp.ne.s32.totalorder %s72, %s88
      %p90 = scmp.eq.s32.totalorder %s15, 0
      %p91 = por %p89, %p90
      %s92 = ssub.s32 %s17, %s31
      %p93 = scmp.eq.s32.totalorder %s92, 0
      %s95 = sadd.s32 %s94, 1
      %s96 = scalar_select %p93, %s94, %s95
      %p99 = pneg %p93
      %p100 = scmp.eq.s32.totalorder %s9, 2
      %p101 = por %p99, %p100
      %p102 = scmp.ne.s32.totalorder %s94, %s97
      %p103 = scmp.eq.s32.totalorder %s9, 0
      %p104 = por %p102, %p103
      %p105 = scmp.ne.s32.totalorder %s94, %s97
      %p106 = scmp.eq.s32.totalorder %s14, 2
      %p107 = por %p105, %p106
      %p108 = scmp.ne.s32.totalorder %s97, %s98
      %p109 = scmp.eq.s32.totalorder %s14, 0
      %p110 = por %p108, %p109
      %p111 = scmp.ne.s32.totalorder %s97, %s98
      %p112 = scmp.eq.s32.totalorder %s15, 2
      %p113 = por %p111, %p112
      %p115 = scmp.ne.s32.totalorder %s98, %s114
      %p116 = scmp.eq.s32.totalorder %s15, 0
      %p117 = por %p115, %p116
      %s118 = ssub.s32 %s16, %s35
      %s119 = ssub.s32 %s17, %s31
      %s120 = sor.u32 %s118, %s119
      %p121 = scmp.eq.s32.totalorder %s120, 0
      %s123 = sadd.s32 %s122, 1
      %s124 = scalar_select %p121, %s122, %s123
      %p127 = pneg %p121
      %p128 = scmp.eq.s32.totalorder %s9, 2
      %p129 = por %p127, %p128
      %p130 = scmp.ne.s32.totalorder %s122, %s125
      %p131 = scmp.eq.s32.totalorder %s9, 0
      %p132 = por %p130, %p131
      %p133 = scmp.ne.s32.totalorder %s122, %s125
      %p134 = scmp.eq.s32.totalorder %s14, 2
      %p135 = por %p133, %p134
      %p136 = scmp.ne.s32.totalorder %s125, %s126
      %p137 = scmp.eq.s32.totalorder %s14, 0
      %p138 = por %p136, %p137
      %p139 = scmp.ne.s32.totalorder %s125, %s126
      %p140 = scmp.eq.s32.totalorder %s15, 2
      %p141 = por %p139, %p140
      %p143 = scmp.ne.s32.totalorder %s126, %s142
      %p144 = scmp.eq.s32.totalorder %s15, 0
      %p145 = por %p143, %p144
      %p146 = scmp.le.s32.totalorder 1, %s9
      %p147 = scmp.lt.s32.totalorder %s9, 4
      %p148 = pnand %p146, %p147
      %p149 = pneg %p148
      // Predicated region
      $region9: #{bert_forward.13} parent=5 // pred_check
        _
      $region10: #{bert_forward.13} parent=5 // pred_check_branch
        %151 = sbr.rel (%p148) target = $region12
      $region11: #{bert_forward.13} parent=5 // pred_region
        %s152 = ssub.s32 %s9, 1
        // Predicated region
        $region13: #{bert_forward.13} parent=11 // pred_check
          %p153 = pneg %p56
        $region14: #{bert_forward.13} parent=11 // pred_check_branch
          %155 = sbr.rel (%p153) target = $region16
        $region15: #{bert_forward.13} parent=11 // pred_region
          %s156 = smul.u32 2, %s19
          %p157 = scmp.lt.s32.totalorder %s156, 1
          %s158 = scalar_select %p157, %s156, 1
          %p159 = scmp.lt.s32.totalorder %s21, 0
          %s160 = scalar_select %p159, %s21, 0
          %s161 = sadd.s32 %s160, %s158
          %s162 = smul.addr %s161, 8
          %s163 = scalar_lea.vmem %s0, %s162
          %s164 = smul.u32 2, %s19
        $region16: #{bert_forward.13} parent=11 // pred_fallthru
          _
      $region12: #{bert_forward.13} parent=5 // pred_fallthru
        _
      %p165 = scmp.lt.s32.totalorder %s9, 3
      // Predicated region
      $region17: #{bert_forward.13} parent=5 // pred_check
        %p166 = pneg %p165
      $region18: #{bert_forward.13} parent=5 // pred_check_branch
        %168 = sbr.rel (%p166) target = $region20
      $region19: #{bert_forward.13} parent=5 // pred_region
        // Predicated region
        $region21: #{bert_forward.13} parent=19 // pred_check
          %p169 = pneg %p78
        $region22: #{bert_forward.13} parent=19 // pred_check_branch
          %171 = sbr.rel (%p169) target = $region24
        $region23: #{bert_forward.13} parent=19 // pred_region
          %s172 = sand.u32 %s68, 1
          %s173 = sand.u32 %s68, 1
          %s174 = smul.addr %s173, 64
          %s175 = scalar_lea.vmem [#allocation3], %s174
          %s176 = smul.u32 16, %s18
          %s177 = smul.addr %s176, 3
          %s178 = sadd.s32 %s17, %s177
          %s179 = smul.addr %s178, 4
          %s180 = scalar_lea.vmem %s1, %s179
          // Predicated region
          $region25: #{bert_forward.13} parent=23 // pred_check
            _
          $region26: #{bert_forward.13} parent=23 // pred_check_branch
            %182 = sbr.rel (0) target = $region28
          $region27: #{bert_forward.13} parent=23 // pred_region
            // Predicated region
            $region29: #{bert_forward.13} parent=27 // pred_check
              _
            $region30: #{bert_forward.13} parent=27 // pred_check_branch
              %184 = sbr.rel target = $region32
            $region31: #{bert_forward.13} parent=27 // pred_region
              // Predicated region
              $region44: #{bert_forward.13} parent=31 // pred_check
                _
              $region45: #{bert_forward.13} parent=31 // pred_check_branch
                %230 = sbr.rel (0) target = $region47
              $region46: #{bert_forward.13} parent=31 // pred_region
                loop: start=0, step=1, limit=1
                $region48: #{bert_forward.13} parent=46 // loop_pre_header
                  _
                $region49: #{bert_forward.13} parent=46 // loop_header
                  %s232 = sphi 0, %s236
                  %p233 = scmp.ge.s32.totalorder %s232, 1
                  %s237 = sphi %s180, %s180
                  %s238 = sphi %s175, %s175
                $region50: #{bert_forward.13} parent=46 // loop_header_branch
                  %235 = sbr.rel (%p233) target = $region54
                $region51: #{bert_forward.13} parent=46 // loop_body
                  _
                $region52: #{bert_forward.13} parent=46 // loop_footer
                  %s236 = sadd.s32 1, %s232
                $region53: #{bert_forward.13} parent=46 // loop_footer_branch
                  %231 = sbr.rel target = $region49
                $region54: #{bert_forward.13} parent=46 // loop_exit
                  _
                %s240 = ssub.s32 16, 1
                loop: start=0, step=1, limit=1
                $region55: #{bert_forward.13} parent=46 // loop_pre_header
                  _
                $region56: #{bert_forward.13} parent=46 // loop_header
                  %s242 = sphi 0, %s246
                  %p243 = scmp.ge.s32.totalorder %s242, 1
                  %s247 = sphi %s180, %s180
                  %s248 = sphi %s175, %s175
                $region57: #{bert_forward.13} parent=46 // loop_header_branch
                  %245 = sbr.rel (%p243) target = $region61
                $region58: #{bert_forward.13} parent=46 // loop_body
                  %v249 = vld [vmem:[%s247] sm:%s240]
                  %250 = vst [vmem:[%s248] sm:%s240] %v249
                  %v251 = vld [vmem:[%s247 + $0xc] sm:%s240]
                  %252 = vst [vmem:[%s248 + $0x4] sm:%s240] %v251
                  %v253 = vld [vmem:[%s247 + $0x18] sm:%s240]
                  %254 = vst [vmem:[%s248 + $0x8] sm:%s240] %v253
                  %v255 = vld [vmem:[%s247 + $0x24] sm:%s240]
                  %256 = vst [vmem:[%s248 + $0xc] sm:%s240] %v255
                  %v257 = vld [vmem:[%s247 + $0x30] sm:%s240]
                  %258 = vst [vmem:[%s248 + $0x10] sm:%s240] %v257
                  %v259 = vld [vmem:[%s247 + $0x3c] sm:%s240]
                  %260 = vst [vmem:[%s248 + $0x14] sm:%s240] %v259
                  %v261 = vld [vmem:[%s247 + $0x48] sm:%s240]
                  %262 = vst [vmem:[%s248 + $0x18] sm:%s240] %v261
                  %v263 = vld [vmem:[%s247 + $0x54] sm:%s240]
                  %264 = vst [vmem:[%s248 + $0x1c] sm:%s240] %v263
                  %v265 = vld [vmem:[%s247 + $0x60] sm:%s240]
                  %266 = vst [vmem:[%s248 + $0x20] sm:%s240] %v265
                  %v267 = vld [vmem:[%s247 + $0x6c] sm:%s240]
                  %268 = vst [vmem:[%s248 + $0x24] sm:%s240] %v267
                  %v269 = vld [vmem:[%s247 + $0x78] sm:%s240]
                  %270 = vst [vmem:[%s248 + $0x28] sm:%s240] %v269
                  %v271 = vld [vmem:[%s247 + $0x84] sm:%s240]
                  %272 = vst [vmem:[%s248 + $0x2c] sm:%s240] %v271
                  %v273 = vld [vmem:[%s247 + $0x90] sm:%s240]
                  %274 = vst [vmem:[%s248 + $0x30] sm:%s240] %v273
                  %v275 = vld [vmem:[%s247 + $0x9c] sm:%s240]
                  %276 = vst [vmem:[%s248 + $0x34] sm:%s240] %v275
                  %v277 = vld [vmem:[%s247 + $0xa8] sm:%s240]
                  %278 = vst [vmem:[%s248 + $0x38] sm:%s240] %v277
                  %v279 = vld [vmem:[%s247 + $0xb4] sm:%s240]
                  %280 = vst [vmem:[%s248 + $0x3c] sm:%s240] %v279
                $region59: #{bert_forward.13} parent=46 // loop_footer
                  %s246 = sadd.s32 1, %s242
                $region60: #{bert_forward.13} parent=46 // loop_footer_branch
                  %241 = sbr.rel target = $region56
                $region61: #{bert_forward.13} parent=46 // loop_exit
                  _
              $region47: #{bert_forward.13} parent=31 // pred_fallthru
                _
            $region32: #{bert_forward.13} parent=27 // pred_fallthru
              _
            // Predicated region
            $region33: #{bert_forward.13} parent=27 // pred_check
              _
            $region34: #{bert_forward.13} parent=27 // pred_check_branch
              %186 = sbr.rel (0) target = $region36
            $region35: #{bert_forward.13} parent=27 // pred_region
              %s188 = ssub.s32 16, 1
              loop: start=0, step=1, limit=1
              $region37: #{bert_forward.13} parent=35 // loop_pre_header
                _
              $region38: #{bert_forward.13} parent=35 // loop_header
                %s190 = sphi 0, %s194
                %p191 = scmp.ge.s32.totalorder %s190, 1
                %s195 = sphi %s180, %s180
                %s196 = sphi %s175, %s175
              $region39: #{bert_forward.13} parent=35 // loop_header_branch
                %193 = sbr.rel (%p191) target = $region43
              $region40: #{bert_forward.13} parent=35 // loop_body
                %v197 = vld [vmem:[%s195] sm:%s188]
                %198 = vst [vmem:[%s196] sm:%s188] %v197
                %v199 = vld [vmem:[%s195 + $0xc] sm:%s188]
                %200 = vst [vmem:[%s196 + $0x4] sm:%s188] %v199
                %v201 = vld [vmem:[%s195 + $0x18] sm:%s188]
                %202 = vst [vmem:[%s196 + $0x8] sm:%s188] %v201
                %v203 = vld [vmem:[%s195 + $0x24] sm:%s188]
                %204 = vst [vmem:[%s196 + $0xc] sm:%s188] %v203
                %v205 = vld [vmem:[%s195 + $0x30] sm:%s188]
                %206 = vst [vmem:[%s196 + $0x10] sm:%s188] %v205
                %v207 = vld [vmem:[%s195 + $0x3c] sm:%s188]
                %208 = vst [vmem:[%s196 + $0x14] sm:%s188] %v207
                %v209 = vld [vmem:[%s195 + $0x48] sm:%s188]
                %210 = vst [vmem:[%s196 + $0x18] sm:%s188] %v209
                %v211 = vld [vmem:[%s195 + $0x54] sm:%s188]
                %212 = vst [vmem:[%s196 + $0x1c] sm:%s188] %v211
                %v213 = vld [vmem:[%s195 + $0x60] sm:%s188]
                %214 = vst [vmem:[%s196 + $0x20] sm:%s188] %v213
                %v215 = vld [vmem:[%s195 + $0x6c] sm:%s188]
                %216 = vst [vmem:[%s196 + $0x24] sm:%s188] %v215
                %v217 = vld [vmem:[%s195 + $0x78] sm:%s188]
                %218 = vst [vmem:[%s196 + $0x28] sm:%s188] %v217
                %v219 = vld [vmem:[%s195 + $0x84] sm:%s188]
                %220 = vst [vmem:[%s196 + $0x2c] sm:%s188] %v219
                %v221 = vld [vmem:[%s195 + $0x90] sm:%s188]
                %222 = vst [vmem:[%s196 + $0x30] sm:%s188] %v221
                %v223 = vld [vmem:[%s195 + $0x9c] sm:%s188]
                %224 = vst [vmem:[%s196 + $0x34] sm:%s188] %v223
                %v225 = vld [vmem:[%s195 + $0xa8] sm:%s188]
                %226 = vst [vmem:[%s196 + $0x38] sm:%s188] %v225
                %v227 = vld [vmem:[%s195 + $0xb4] sm:%s188]
                %228 = vst [vmem:[%s196 + $0x3c] sm:%s188] %v227
              $region41: #{bert_forward.13} parent=35 // loop_footer
                %s194 = sadd.s32 1, %s190
              $region42: #{bert_forward.13} parent=35 // loop_footer_branch
                %189 = sbr.rel target = $region38
              $region43: #{bert_forward.13} parent=35 // loop_exit
                _
            $region36: #{bert_forward.13} parent=27 // pred_fallthru
              _
          $region28: #{bert_forward.13} parent=23 // pred_fallthru
            _
          %281 = vnop
        $region24: #{bert_forward.13} parent=19 // pred_fallthru
          _
        // Predicated region
        $region62: #{bert_forward.13} parent=19 // pred_check
          %p282 = pneg %p104
        $region63: #{bert_forward.13} parent=19 // pred_check_branch
          %284 = sbr.rel (%p282) target = $region65
        $region64: #{bert_forward.13} parent=19 // pred_region
          %p285 = scmp.lt.s32.totalorder %s17, 2
          %s286 = scalar_select %p285, %s17, 2
          %s287 = scalar_lea.vmem %s2, %s286
        $region65: #{bert_forward.13} parent=19 // pred_fallthru
          _
      $region20: #{bert_forward.13} parent=5 // pred_fallthru
        _
      %p288 = scmp.le.s32.totalorder 1, %s9
      %p289 = scmp.lt.s32.totalorder %s9, 4
      %p290 = pnand %p288, %p289
      %p291 = pneg %p290
      // Predicated region
      $region66: #{bert_forward.13} parent=5 // pred_check
        _
      $region67: #{bert_forward.13} parent=5 // pred_check_branch
        %293 = sbr.rel (%p290) target = $region69
      $region68: #{bert_forward.13} parent=5 // pred_region
        %s294 = ssub.s32 %s9, 1
        %s295 = sand.u32 %s71, 1
        %s296 = sand.u32 %s71, 1
        %s297 = smul.addr %s296, 64
        %s298 = scalar_lea.vmem [#allocation3], %s297
        // Predicated region
        $region70: #{bert_forward.13} parent=68 // pred_check
          %p299 = pneg %p84
        $region71: #{bert_forward.13} parent=68 // pred_check_branch
          %301 = sbr.rel (%p299) target = $region73
        $region72: #{bert_forward.13} parent=68 // pred_region
          _
        $region73: #{bert_forward.13} parent=68 // pred_fallthru
          _
        %s302 = smul.u32 2, %s19
        %p303 = scmp.lt.s32.totalorder %s302, 1
        %s304 = scalar_select %p303, %s302, 1
        %p305 = scmp.lt.s32.totalorder %s21, 0
        %s306 = scalar_select %p305, %s21, 0
        %s307 = sadd.s32 %s306, %s304
        %s308 = smul.addr %s307, 8
        %s309 = scalar_lea.vmem %s0, %s308
        %p310 = pneg %p56
        %p311 = pneg %p53
        %s312 = sand.u32 %s71, 1
        %s313 = sand.u32 %s71, 1
        %s314 = smul.addr %s313, 64
        %s315 = scalar_lea.vmem [#allocation3], %s314
        %p316 = pneg %p84
        %p317 = pneg %p81
        %p318 = scmp.lt.s32.totalorder %s20, 2
        %s319 = scalar_select %p318, %s20, 2
        %s320 = scalar_lea.vmem %s2, %s319
        %p321 = pneg %p110
        %p322 = pneg %p107
        %p323 = pneg %p138
        %p324 = pneg %p135
        %s325 = sand.u32 %s125, 1
        %s326 = sand.u32 %s125, 1
        %s327 = smul.addr %s326, 8
        %s328 = scalar_lea.vmem [#allocation4], %s327
        %s329 = smul.u32 2, %s19
        %p330 = scmp.lt.s32.totalorder %s329, 1
        %s331 = scalar_select %p330, %s329, 1
        %p332 = scmp.lt.s32.totalorder %s21, 0
        %s333 = scalar_select %p332, %s21, 0
        %s334 = sadd.s32 %s333, %s331
        %s335 = smul.addr %s334, 8
        %s336 = scalar_lea.vmem %s0, %s335
        %s337 = smul.u32 2, %s19
        %s338 = smul.u32 16, %s21
        %p339 = scmp.lt.s32.totalorder %s20, 2
        %s340 = scalar_select %p339, %s20, 2
        %s341 = scalar_lea.vmem %s2, %s340
        %s342 = smul.u32 2, %s19
        %p343 = scmp.eq.s32.totalorder %s21, 0
        // Predicated region
        $region74: #{bert_forward.13} parent=68 // pred_check
          %p344 = pneg %p343
        $region75: #{bert_forward.13} parent=68 // pred_check_branch
          %346 = sbr.rel (%p344) target = $region77
        $region76: #{bert_forward.13} parent=68 // pred_region
          %347 = vst [vmem:[#allocation2] sm:$0xff] 0.0
          %348 = vst [vmem:[#allocation2 + $0x8] sm:$0xff] 0.0
        $region77: #{bert_forward.13} parent=68 // pred_fallthru
          _
        %v349 = vld [vmem:[#allocation2] sm:$0xff]
        %v350 = vld [vmem:[#allocation2 + $0x8] sm:$0xff]
        %v351 = vld [vmem:[%s336] sm:$0xff]
        %v352 = vld [vmem:[%s336 + $0x8] sm:$0xff]
        %v353 = vpack.c.bf16 %v352, %v351
        %v354 = vld [vmem:[%s298] sm:$0xf]
        %v355 = vld [vmem:[%s298 + $0x4] sm:$0xf]
        %v356 = vld [vmem:[%s298 + $0x8] sm:$0xf]
        %v357 = vld [vmem:[%s298 + $0xc] sm:$0xf]
        %v358 = vld [vmem:[%s298 + $0x10] sm:$0xf]
        %v359 = vld [vmem:[%s298 + $0x14] sm:$0xf]
        %v360 = vld [vmem:[%s298 + $0x18] sm:$0xf]
        %v361 = vld [vmem:[%s298 + $0x1c] sm:$0xf]
        %v362 = vld [vmem:[%s298 + $0x20] sm:$0xf]
        %v363 = vld [vmem:[%s298 + $0x24] sm:$0xf]
        %v364 = vld [vmem:[%s298 + $0x28] sm:$0xf]
        %v365 = vld [vmem:[%s298 + $0x2c] sm:$0xf]
        %v366 = vld [vmem:[%s298 + $0x30] sm:$0xf]
        %v367 = vld [vmem:[%s298 + $0x34] sm:$0xf]
        %v368 = vld [vmem:[%s298 + $0x38] sm:$0xf]
        %v369 = vld [vmem:[%s298 + $0x3c] sm:$0xf]
        %v386 = vunpack.c.l.b16 %v354
        %v387 = vunpack.c.l.b16 %v355
        %v388 = vunpack.c.l.b16 %v356
        %v389 = vunpack.c.l.b16 %v357
        %v390 = vunpack.c.l.b16 %v358
        %v391 = vunpack.c.l.b16 %v359
        %v392 = vunpack.c.l.b16 %v360
        %v393 = vunpack.c.l.b16 %v361
        %v394 = vunpack.c.l.b16 %v362
        %v395 = vunpack.c.l.b16 %v363
        %v396 = vunpack.c.l.b16 %v364
        %v397 = vunpack.c.l.b16 %v365
        %v398 = vunpack.c.l.b16 %v366
        %v399 = vunpack.c.l.b16 %v367
        %v400 = vunpack.c.l.b16 %v368
        %v401 = vunpack.c.l.b16 %v369
        %v402 = vpack.c.b16 %v387, %v386
        %v403 = vpack.c.b16 %v389, %v388
        %v404 = vpack.c.b16 %v391, %v390
        %v405 = vpack.c.b16 %v393, %v392
        %v406 = vpack.c.b16 %v395, %v394
        %v407 = vpack.c.b16 %v397, %v396
        %v408 = vpack.c.b16 %v399, %v398
        %v409 = vpack.c.b16 %v401, %v400
        %418 = vmatpush.bf16.msra.mxu0 %v409
        %419 = vmatpush.bf16.msra.mxu0 %v408
        %420 = vmatpush.bf16.msra.mxu0 %v407
        %421 = vmatpush.bf16.msra.mxu0 %v406
        %422 = vmatpush.bf16.msra.mxu0 %v405
        %423 = vmatpush.bf16.msra.mxu0 %v404
        %424 = vmatpush.bf16.msra.mxu0 %v403
        %425 = vmatpush.bf16.msra.mxu0 %v402
        %426 = vmatmul.bf16.gmra.mxu0 %v353
        %v427 = vpop.f32.mrf.mxu0
        %v428 = vadd.f32 0.0, %v427
        %v429 = vpop.f32.mrf.mxu0
        %v430 = vadd.f32 0.0, %v429
        %431 = vdwg.mxu0
        %v432 = vadd.f32 %v349, %v428
        %v433 = vadd.f32 %v350, %v430
        %434 = vst [vmem:[#allocation2] sm:$0xff] %v432
        %435 = vst [vmem:[#allocation2 + $0x8] sm:$0xff] %v433
        // Predicated region
        $region78: #{bert_forward.13} parent=68 // pred_check
          %p436 = pneg %p343
        $region79: #{bert_forward.13} parent=68 // pred_check_branch
          %438 = sbr.rel (%p436) target = $region81
        $region80: #{bert_forward.13} parent=68 // pred_region
          %v439 = vld [vmem:[#allocation2] sm:$0xff]
          %v440 = vld [vmem:[#allocation2 + $0x8] sm:$0xff]
          %v441 = vld [vmem:[%s341] sm:$0x1]
          %v443 = vperm.slane %v441, 0
          %v445 = vadd.f32 %v439, %v443
          %v446 = vadd.f32 %v440, %v443
          %v447 = vpack.c.bf16 %v445, %v445
          %v448 = vpack.c.bf16 %v446, %v446
          %449 = vst [vmem:[%s328] sm:$0xf] %v447
          %450 = vst [vmem:[%s328 + $0x4] sm:$0xf] %v448
        $region81: #{bert_forward.13} parent=68 // pred_fallthru
          _
        %s451 = sand.u32 %s125, 1
        %s452 = sand.u32 %s125, 1
        %s453 = smul.addr %s452, 8
        %s454 = scalar_lea.vmem [#allocation4], %s453
        // Predicated region
        $region82: #{bert_forward.13} parent=68 // pred_check
          %p455 = pneg %p135
        $region83: #{bert_forward.13} parent=68 // pred_check_branch
          %457 = sbr.rel (%p455) target = $region85
        $region84: #{bert_forward.13} parent=68 // pred_region
          %s458 = smul.u32 2, %s19
          %s459 = smul.addr %s458, 3
          %s460 = sadd.s32 %s20, %s459
          %s461 = smul.addr %s460, 4
          %s462 = scalar_lea.vmem %s3, %s461
          // Predicated region
          $region86: #{bert_forward.13} parent=84 // pred_check
            _
          $region87: #{bert_forward.13} parent=84 // pred_check_branch
            %464 = sbr.rel (0) target = $region89
          $region88: #{bert_forward.13} parent=84 // pred_region
            // Predicated region
            $region90: #{bert_forward.13} parent=88 // pred_check
              _
            $region91: #{bert_forward.13} parent=88 // pred_check_branch
              %466 = sbr.rel target = $region93
            $region92: #{bert_forward.13} parent=88 // pred_region
              // Predicated region
              $region105: #{bert_forward.13} parent=92 // pred_check
                _
              $region106: #{bert_forward.13} parent=92 // pred_check_branch
                %484 = sbr.rel (0) target = $region108
              $region107: #{bert_forward.13} parent=92 // pred_region
                loop: start=0, step=1, limit=1
                $region109: #{bert_forward.13} parent=107 // loop_pre_header
                  _
                $region110: #{bert_forward.13} parent=107 // loop_header
                  %s486 = sphi 0, %s490
                  %p487 = scmp.ge.s32.totalorder %s486, 1
                  %s491 = sphi %s454, %s454
                  %s492 = sphi %s462, %s462
                $region111: #{bert_forward.13} parent=107 // loop_header_branch
                  %489 = sbr.rel (%p487) target = $region115
                $region112: #{bert_forward.13} parent=107 // loop_body
                  _
                $region113: #{bert_forward.13} parent=107 // loop_footer
                  %s490 = sadd.s32 1, %s486
                $region114: #{bert_forward.13} parent=107 // loop_footer_branch
                  %485 = sbr.rel target = $region110
                $region115: #{bert_forward.13} parent=107 // loop_exit
                  _
                %s494 = ssub.s32 16, 1
                loop: start=0, step=1, limit=1
                $region116: #{bert_forward.13} parent=107 // loop_pre_header
                  _
                $region117: #{bert_forward.13} parent=107 // loop_header
                  %s496 = sphi 0, %s500
                  %p497 = scmp.ge.s32.totalorder %s496, 1
                  %s501 = sphi %s454, %s454
                  %s502 = sphi %s462, %s462
                $region118: #{bert_forward.13} parent=107 // loop_header_branch
                  %499 = sbr.rel (%p497) target = $region122
                $region119: #{bert_forward.13} parent=107 // loop_body
                  %v503 = vld [vmem:[%s501] sm:%s494]
                  %504 = vst [vmem:[%s502] sm:%s494] %v503
                  %v505 = vld [vmem:[%s501 + $0x4] sm:%s494]
                  %506 = vst [vmem:[%s502 + $0xc] sm:%s494] %v505
                $region120: #{bert_forward.13} parent=107 // loop_footer
                  %s500 = sadd.s32 1, %s496
                $region121: #{bert_forward.13} parent=107 // loop_footer_branch
                  %495 = sbr.rel target = $region117
                $region122: #{bert_forward.13} parent=107 // loop_exit
                  _
              $region108: #{bert_forward.13} parent=92 // pred_fallthru
                _
            $region93: #{bert_forward.13} parent=88 // pred_fallthru
              _
            // Predicated region
            $region94: #{bert_forward.13} parent=88 // pred_check
              _
            $region95: #{bert_forward.13} parent=88 // pred_check_branch
              %468 = sbr.rel (0) target = $region97
            $region96: #{bert_forward.13} parent=88 // pred_region
              %s470 = ssub.s32 16, 1
              loop: start=0, step=1, limit=1
              $region98: #{bert_forward.13} parent=96 // loop_pre_header
                _
              $region99: #{bert_forward.13} parent=96 // loop_header
                %s472 = sphi 0, %s476
                %p473 = scmp.ge.s32.totalorder %s472, 1
                %s477 = sphi %s454, %s454
                %s478 = sphi %s462, %s462
              $region100: #{bert_forward.13} parent=96 // loop_header_branch
                %475 = sbr.rel (%p473) target = $region104
              $region101: #{bert_forward.13} parent=96 // loop_body
                %v479 = vld [vmem:[%s477] sm:%s470]
                %480 = vst [vmem:[%s478] sm:%s470] %v479
                %v481 = vld [vmem:[%s477 + $0x4] sm:%s470]
                %482 = vst [vmem:[%s478 + $0xc] sm:%s470] %v481
              $region102: #{bert_forward.13} parent=96 // loop_footer
                %s476 = sadd.s32 1, %s472
              $region103: #{bert_forward.13} parent=96 // loop_footer_branch
                %471 = sbr.rel target = $region99
              $region104: #{bert_forward.13} parent=96 // loop_exit
                _
            $region97: #{bert_forward.13} parent=88 // pred_fallthru
              _
          $region89: #{bert_forward.13} parent=84 // pred_fallthru
            _
          %507 = vnop
        $region85: #{bert_forward.13} parent=68 // pred_fallthru
          _
      $region69: #{bert_forward.13} parent=5 // pred_fallthru
        _
      %p508 = scmp.le.s32.totalorder 2, %s9
      // Predicated region
      $region123: #{bert_forward.13} parent=5 // pred_check
        %p509 = pneg %p508
      $region124: #{bert_forward.13} parent=5 // pred_check_branch
        %511 = sbr.rel (%p509) target = $region126
      $region125: #{bert_forward.13} parent=5 // pred_region
        %s512 = ssub.s32 %s9, 2
        // Predicated region
        $region127: #{bert_forward.13} parent=125 // pred_check
          %p513 = pneg %p141
        $region128: #{bert_forward.13} parent=125 // pred_check_branch
          %515 = sbr.rel (%p513) target = $region130
        $region129: #{bert_forward.13} parent=125 // pred_region
          %s516 = sand.u32 %s126, 1
          %s517 = sand.u32 %s126, 1
          %s518 = smul.addr %s517, 8
          %s519 = scalar_lea.vmem [#allocation4], %s518
        $region130: #{bert_forward.13} parent=125 // pred_fallthru
          _
      $region126: #{bert_forward.13} parent=5 // pred_fallthru
        _
    $region6: #{bert_forward.13} parent=1 // loop_footer
      %s13 = sadd.s32 1, %s9
    $region7: #{bert_forward.13} parent=1 // loop_footer_branch
      %8 = sbr.rel target = $region3
    $region8: #{bert_forward.13} parent=1 // loop_exit
      _

// kernel: bert_forward.15
$region0: #{bert_forward.15}
  #allocation0 [shape = 'u32[]', space=smem, size = 0x4, offset = 0x4, fixed_abs, tag = 'smem constant byte address 0x4 - core index']
  #allocation1 [shape = 'u32[72,128]{1,0:T(1,128)}', space=vmem, size = 0x9000, scoped, tag = 'internal scratch']
  #allocation2 [shape = 'f32[16,128]{1,0:T(8,128)}', space=vmem, size = 0x2000, scoped, tag = 'scratch operand']
  %s0 = inlined_call_operand.vmem [shape: bf16[16,128], index: 0, kind: input, shape index: {}]
  %s1 = inlined_call_operand.hbm [shape: bf16[128,128], index: 1, kind: input, shape index: {}]
  %s2 = inlined_call_operand.vmem [shape: f32[1,128], index: 2, kind: input, shape index: {}]
  %s3 = inlined_call_operand.vmem [shape: f32[16,128], index: 3, kind: input, shape index: {}]
  %s4 = inlined_call_operand.vmem [shape: f32[1,128], index: 4, kind: input, shape index: {}]
  %s5 = inlined_call_operand.vmem [shape: f32[1,128], index: 5, kind: input, shape index: {}]
  %s6 = inlined_call_operand.vmem [shape: f32[16,128], index: 6, kind: output, shape index: {}]
  %s7 = sld [smem:[#allocation0]]
  $region46: #{bert_forward.15} parent=0
    _
  %s9 = ssub.s32 1, %s7
  %s10 = scalar_select 0, %s9, %s7
  $region1: #{bert_forward.15} parent=0
    #allocation3 [shape = 'u8[32768]{0}', space=vmem, size = 0x8000, scoped, tag = 'input window, operand 1, single buffered']
    #allocation4 [shape = 's32[1]{0}', space=sflag, size = 0x4, scoped, tag = 'scoped memory for bert_forward.15']
    %11 = vsyncpa [#allocation4], 0
    // Predicated region
    $region2: #{bert_forward.15} parent=1 // pred_check
      _
    $region3: #{bert_forward.15} parent=1 // pred_check_branch
      %13 = sbr.rel (0) target = $region5
    $region4: #{bert_forward.15} parent=1 // pred_region
      _
    $region5: #{bert_forward.15} parent=1 // pred_fallthru
      _
    // Predicated region
    $region6: #{bert_forward.15} parent=1 // pred_check
      _
    $region7: #{bert_forward.15} parent=1 // pred_check_branch
      %15 = sbr.rel (0) target = $region9
    $region8: #{bert_forward.15} parent=1 // pred_region
      %17 = vsyncadd [#allocation4], 0
      %s18 = sshll.u32 %s1, 4
      %s19 = int_to_ptr.hbm [resolvable:$true] %s18
      %s20 = sshll.u32 [#allocation3], 4
      %s21 = int_to_ptr.vmem [resolvable:$true] %s20
      %26 = dma.hbm_to_vmem [thread:$0]  %s19, 1024, %s21, [#allocation4], 64, 64, 4
    $region9: #{bert_forward.15} parent=1 // pred_fallthru
      _
    // Predicated region
    $region10: #{bert_forward.15} parent=1 // pred_check
      _
    $region11: #{bert_forward.15} parent=1 // pred_check_branch
      %28 = sbr.rel (0) target = $region13
    $region12: #{bert_forward.15} parent=1 // pred_region
      _
    $region13: #{bert_forward.15} parent=1 // pred_fallthru
      _
    // Predicated region
    $region14: #{bert_forward.15} parent=1 // pred_check
      _
    $region15: #{bert_forward.15} parent=1 // pred_check_branch
      %30 = sbr.rel (0) target = $region17
    $region16: #{bert_forward.15} parent=1 // pred_region
      _
    $region17: #{bert_forward.15} parent=1 // pred_fallthru
      _
    // Predicated region
    $region18: #{bert_forward.15} parent=1 // pred_check
      _
    $region19: #{bert_forward.15} parent=1 // pred_check_branch
      %32 = sbr.rel (0) target = $region21
    $region20: #{bert_forward.15} parent=1 // pred_region
      _
    $region21: #{bert_forward.15} parent=1 // pred_fallthru
      _
    // Predicated region
    $region22: #{bert_forward.15} parent=1 // pred_check
      _
    $region23: #{bert_forward.15} parent=1 // pred_check_branch
      %34 = sbr.rel (0) target = $region25
    $region24: #{bert_forward.15} parent=1 // pred_region
      _
    $region25: #{bert_forward.15} parent=1 // pred_fallthru
      _
    // Predicated region
    $region26: #{bert_forward.15} parent=1 // pred_check
      _
    $region27: #{bert_forward.15} parent=1 // pred_check_branch
      %36 = sbr.rel (0) target = $region29
    $region28: #{bert_forward.15} parent=1 // pred_region
      %38 = dma.done [#allocation4], 1024
    $region29: #{bert_forward.15} parent=1 // pred_fallthru
      _
    %p39 = scmp.eq.s32.totalorder 0, 0
    // Predicated region
    $region30: #{bert_forward.15} parent=1 // pred_check
      %p40 = pneg %p39
    $region31: #{bert_forward.15} parent=1 // pred_check_branch
      %42 = sbr.rel (%p40) target = $region33
    $region32: #{bert_forward.15} parent=1 // pred_region
      %43 = vst [vmem:[#allocation2] sm:$0xff] 0.0
      %44 = vst [vmem:[#allocation2 + $0x8] sm:$0xff] 0.0
    $region33: #{bert_forward.15} parent=1 // pred_fallthru
      _
    %v45 = vld [vmem:[#allocation2] sm:$0xff]
    %v46 = vld [vmem:[#allocation2 + $0x8] sm:$0xff]
    %v47 = vld [vmem:[%s0] sm:$0xf]
    %v48 = vld [vmem:[%s0 + $0x4] sm:$0xf]
    %v49 = vld [vmem:[#allocation3] sm:$0xf]
    %v50 = vld [vmem:[#allocation3 + $0x4] sm:$0xf]
    %v51 = vld [vmem:[#allocation3 + $0x8] sm:$0xf]
    %v52 = vld [vmem:[#allocation3 + $0xc] sm:$0xf]
    %v53 = vld [vmem:[#allocation3 + $0x10] sm:$0xf]
    %v54 = vld [vmem:[#allocation3 + $0x14] sm:$0xf]
    %v55 = vld [vmem:[#allocation3 + $0x18] sm:$0xf]
    %v56 = vld [vmem:[#allocation3 + $0x1c] sm:$0xf]
    %v57 = vld [vmem:[#allocation3 + $0x20] sm:$0xf]
    %v58 = vld [vmem:[#allocation3 + $0x24] sm:$0xf]
    %v59 = vld [vmem:[#allocation3 + $0x28] sm:$0xf]
    %v60 = vld [vmem:[#allocation3 + $0x2c] sm:$0xf]
    %v61 = vld [vmem:[#allocation3 + $0x30] sm:$0xf]
    %v62 = vld [vmem:[#allocation3 + $0x34] sm:$0xf]
    %v63 = vld [vmem:[#allocation3 + $0x38] sm:$0xf]
    %v64 = vld [vmem:[#allocation3 + $0x3c] sm:$0xf]
    %v67 = vunpack.c.l.b16 %v47
    %v68 = vunpack.c.l.b16 %v48
    %v69 = vpack.c.b16 %v68, %v67
    %v87 = vunpack.c.l.b16 %v49
    %v88 = vunpack.c.l.b16 %v50
    %v89 = vunpack.c.l.b16 %v51
    %v90 = vunpack.c.l.b16 %v52
    %v91 = vunpack.c.l.b16 %v53
    %v92 = vunpack.c.l.b16 %v54
    %v93 = vunpack.c.l.b16 %v55
    %v94 = vunpack.c.l.b16 %v56
    %v95 = vunpack.c.l.b16 %v57
    %v96 = vunpack.c.l.b16 %v58
    %v97 = vunpack.c.l.b16 %v59
    %v98 = vunpack.c.l.b16 %v60
    %v99 = vunpack.c.l.b16 %v61
    %v100 = vunpack.c.l.b16 %v62
    %v101 = vunpack.c.l.b16 %v63
    %v102 = vunpack.c.l.b16 %v64
    %v103 = vpack.c.b16 %v88, %v87
    %v104 = vpack.c.b16 %v90, %v89
    %v105 = vpack.c.b16 %v92, %v91
    %v106 = vpack.c.b16 %v94, %v93
    %v107 = vpack.c.b16 %v96, %v95
    %v108 = vpack.c.b16 %v98, %v97
    %v109 = vpack.c.b16 %v100, %v99
    %v110 = vpack.c.b16 %v102, %v101
    %119 = vmatpush.bf16.msra.mxu0 %v110
    %120 = vmatpush.bf16.msra.mxu0 %v109
    %121 = vmatpush.bf16.msra.mxu0 %v108
    %122 = vmatpush.bf16.msra.mxu0 %v107
    %123 = vmatpush.bf16.msra.mxu0 %v106
    %124 = vmatpush.bf16.msra.mxu0 %v105
    %125 = vmatpush.bf16.msra.mxu0 %v104
    %126 = vmatpush.bf16.msra.mxu0 %v103
    %127 = vmatmul.bf16.gmra.mxu0 %v69
    %v128 = vpop.f32.mrf.mxu0
    %v129 = vadd.f32 0.0, %v128
    %v130 = vpop.f32.mrf.mxu0
    %v131 = vadd.f32 0.0, %v130
    %132 = vdwg.mxu0
    %v133 = vadd.f32 %v45, %v129
    %v134 = vadd.f32 %v46, %v131
    %135 = vst [vmem:[#allocation2] sm:$0xff] %v133
    %136 = vst [vmem:[#allocation2 + $0x8] sm:$0xff] %v134
    // Predicated region
    $region34: #{bert_forward.15} parent=1 // pred_check
      %p137 = pneg %p39
    $region35: #{bert_forward.15} parent=1 // pred_check_branch
      %139 = sbr.rel (%p137) target = $region37
    $region36: #{bert_forward.15} parent=1 // pred_region
      %v140 = vld [vmem:[#allocation2] sm:$0xff]
      %v141 = vld [vmem:[#allocation2 + $0x8] sm:$0xff]
      %v142 = vld [vmem:[%s2] sm:$0x1]
      %v144 = vperm.slane %v142, 0
      %v146 = vadd.f32 %v140, %v144
      %v147 = vadd.f32 %v141, %v144
      %v148 = vld [vmem:[%s3] sm:$0xff]
      %v149 = vld [vmem:[%s3 + $0x8] sm:$0xff]
      %v150 = vadd.f32 %v146, %v148
      %v151 = vadd.f32 %v147, %v149
      %152 = vadd.xlane.f32.xlu0 %v150
      %v153 = vpop.xlane.xlu0 %152
      %154 = vadd.xlane.f32.xlu0 %v151
      %v155 = vpop.xlane.xlu0 %154
      %v156 = vrcp.pop 128.0
      %v157 = vmul.f32 128.0, %v156
      %v158 = vsub.f32 1.0, %v157
      %v159 = vmul.f32 %v156, %v158
      %v160 = vadd.f32 %v156, %v159
      %vm161 = vweird.f32 %v156
      %v162 = vsel %vm161, %v156, %v160
      %v163 = vmul.f32 %v153, %v162
      %v164 = vmul.f32 %v155, %v162
      %v165 = vsub.f32 %v150, %v163
      %v166 = vsub.f32 %v151, %v164
      %v167 = vmul.f32 %v165, %v165
      %v168 = vmul.f32 %v166, %v166
      %169 = vadd.xlane.f32.xlu0 %v167
      %v170 = vpop.xlane.xlu0 %169
      %171 = vadd.xlane.f32.xlu0 %v168
      %v172 = vpop.xlane.xlu0 %171
      %v173 = vmul.f32 %v170, %v162
      %v174 = vmul.f32 %v172, %v162
      %v175 = vadd.f32 %v173, 1e-12
      %v176 = vadd.f32 %v174, 1e-12
      %v177 = vrsqrt.pop %v175
      %v178 = vmul.f32 %v177, %v175
      %v179 = vmul.f32 %v178, %v177
      %v180 = vmul.f32 0.5, %v179
      %v181 = vsub.f32 1.5, %v180
      %v182 = vmul.f32 %v177, %v181
      %vm183 = vweird.f32 %v175
      %vm184 = vweird.f32 %v177
      %vm185 = vmor %vm183, %vm184
      %v186 = vsel %vm185, %v177, %v182
      %v187 = vrsqrt.pop %v176
      %v188 = vmul.f32 %v187, %v176
      %v189 = vmul.f32 %v188, %v187
      %v190 = vmul.f32 0.5, %v189
      %v191 = vsub.f32 1.5, %v190
      %v192 = vmul.f32 %v187, %v191
      %vm193 = vweird.f32 %v176
      %vm194 = vweird.f32 %v187
      %vm195 = vmor %vm193, %vm194
      %v196 = vsel %vm195, %v187, %v192
      %v197 = vmul.f32 %v165, %v186
      %v198 = vmul.f32 %v166, %v196
      %v199 = vld [vmem:[%s4] sm:$0x1]
      %v201 = vperm.slane %v199, 0
      %v203 = vmul.f32 %v197, %v201
      %v204 = vmul.f32 %v198, %v201
      %v205 = vld [vmem:[%s5] sm:$0x1]
      %v207 = vperm.slane %v205, 0
      %v209 = vadd.f32 %v203, %v207
      %v210 = vadd.f32 %v204, %v207
      %211 = vst [vmem:[%s6] sm:$0xff] %v209
      %212 = vst [vmem:[%s6 + $0x8] sm:$0xff] %v210
    $region37: #{bert_forward.15} parent=1 // pred_fallthru
      _
    // Predicated region
    $region38: #{bert_forward.15} parent=1 // pred_check
      _
    $region39: #{bert_forward.15} parent=1 // pred_check_branch
      %214 = sbr.rel (0) target = $region41
    $region40: #{bert_forward.15} parent=1 // pred_region
      _
    $region41: #{bert_forward.15} parent=1 // pred_fallthru
      _
    // Predicated region
    $region42: #{bert_forward.15} parent=1 // pred_check
      _
    $region43: #{bert_forward.15} parent=1 // pred_check_branch
      %216 = sbr.rel (0) target = $region45
    $region44: #{bert_forward.15} parent=1 // pred_region
      _
    $region45: #{bert_forward.15} parent=1 // pred_fallthru
      _
    %217 = vsyncpa [#allocation4], 1

// kernel: bert_forward.14
$region0: #{bert_forward.14}
  #allocation0 [shape = 'u32[]', space=smem, size = 0x4, offset = 0x4, fixed_abs, tag = 'smem constant byte address 0x4 - core index']
  #allocation1 [shape = 'u32[72,128]{1,0:T(1,128)}', space=vmem, size = 0x9000, scoped, tag = 'internal scratch']
  %s0 = inlined_call_operand.vmem [shape: bf16[2,8,384], index: 0, kind: input, shape index: {}, may-alias: {0,1,2}]
  %s1 = inlined_call_operand.vmem [shape: bf16[2,8,384], index: 1, kind: input, shape index: {}, may-alias: {0,1,2}]
  %s2 = inlined_call_operand.vmem [shape: bf16[2,8,384], index: 2, kind: input, shape index: {}, may-alias: {0,1,2}]
  %s3 = inlined_call_operand.vmem [shape: f32[2,1,8], index: 3, kind: input, shape index: {}]
  %s4 = inlined_call_operand.vmem [shape: bf16[2,8,128], index: 4, kind: output, shape index: {}]
  %s5 = sld [smem:[#allocation0]]
  $region49: #{bert_forward.14} parent=0
    _
  %s7 = ssub.s32 1, %s5
  %s8 = scalar_select 0, %s7, %s5
  loop: start=0, step=1, limit=4
  $region2: #{bert_forward.14} parent=0 // loop_pre_header
    _
  $region3: #{bert_forward.14} parent=0 // loop_header
    %s10 = sphi 0, %s14
    %p11 = scmp.ge.s32.totalorder %s10, 4
    %s17 = sphi 0, %s29
    %s18 = sphi 0, %s25
    %s19 = sphi 0, %s17
    %s20 = sphi 0, %s18
    %s21 = sphi 0, %s19
    %s22 = sphi 0, %s20
    %s34 = sphi 0, %s36
    %s37 = sphi 0, %s34
    %s38 = sphi 0, %s37
    %s54 = sphi 0, %s38
    %s64 = sphi 0, %s66
    %s67 = sphi 0, %s64
    %s68 = sphi 0, %s67
    %s84 = sphi 0, %s68
    %s94 = sphi 0, %s96
    %s97 = sphi 0, %s94
    %s98 = sphi 0, %s97
    %s114 = sphi 0, %s98
    %s120 = sphi 0, %s122
    %s123 = sphi 0, %s120
    %s124 = sphi 0, %s123
    %s140 = sphi 0, %s124
    %s148 = sphi 0, %s150
    %s151 = sphi 0, %s148
    %s152 = sphi 0, %s151
    %s168 = sphi 0, %s152
  $region4: #{bert_forward.14} parent=0 // loop_header_branch
    %13 = sbr.rel (%p11) target = $region8
  $region5: #{bert_forward.14} parent=0 // loop_body
    %s15 = ssub.s32 %s10, 1
    %s16 = ssub.s32 %s10, 2
    %s23 = sadd.s32 1, %s18
    %p24 = scmp.ge.s32.totalorder %s23, 1
    %s25 = scalar_select %p24, 0, %s23
    %s26 = sadd.s32 1, %s17
    %s27 = scalar_select %p24, %s26, %s17
    %p28 = scmp.ge.s32.totalorder %s27, 2
    %s29 = scalar_select %p28, 0, %s27
    %s30 = ssub.s32 %s17, %s29
    %s31 = ssub.s32 %s18, %s25
    %s32 = sor.u32 %s30, %s31
    %p33 = scmp.eq.s32.totalorder %s32, 0
    %s35 = sadd.s32 %s34, 1
    %s36 = scalar_select %p33, %s34, %s35
    %p39 = pneg %p33
    %p40 = scmp.eq.s32.totalorder %s10, 1
    %p41 = por %p39, %p40
    %p42 = scmp.ne.s32.totalorder %s34, %s37
    %p43 = scmp.eq.s32.totalorder %s10, 0
    %p44 = por %p42, %p43
    %p45 = scmp.ne.s32.totalorder %s34, %s37
    %p46 = scmp.eq.s32.totalorder %s15, 1
    %p47 = por %p45, %p46
    %p48 = scmp.ne.s32.totalorder %s37, %s38
    %p49 = scmp.eq.s32.totalorder %s15, 0
    %p50 = por %p48, %p49
    %p51 = scmp.ne.s32.totalorder %s37, %s38
    %p52 = scmp.eq.s32.totalorder %s16, 1
    %p53 = por %p51, %p52
    %p55 = scmp.ne.s32.totalorder %s38, %s54
    %p56 = scmp.eq.s32.totalorder %s16, 0
    %p57 = por %p55, %p56
    %s58 = sadd.s32 %s18, 1
    %s59 = sadd.s32 %s25, 1
    %s60 = ssub.s32 %s17, %s29
    %s61 = ssub.s32 %s58, %s59
    %s62 = sor.u32 %s60, %s61
    %p63 = scmp.eq.s32.totalorder %s62, 0
    %s65 = sadd.s32 %s64, 1
    %s66 = scalar_select %p63, %s64, %s65
    %p69 = pneg %p63
    %p70 = scmp.eq.s32.totalorder %s10, 1
    %p71 = por %p69, %p70
    %p72 = scmp.ne.s32.totalorder %s64, %s67
    %p73 = scmp.eq.s32.totalorder %s10, 0
    %p74 = por %p72, %p73
    %p75 = scmp.ne.s32.totalorder %s64, %s67
    %p76 = scmp.eq.s32.totalorder %s15, 1
    %p77 = por %p75, %p76
    %p78 = scmp.ne.s32.totalorder %s67, %s68
    %p79 = scmp.eq.s32.totalorder %s15, 0
    %p80 = por %p78, %p79
    %p81 = scmp.ne.s32.totalorder %s67, %s68
    %p82 = scmp.eq.s32.totalorder %s16, 1
    %p83 = por %p81, %p82
    %p85 = scmp.ne.s32.totalorder %s68, %s84
    %p86 = scmp.eq.s32.totalorder %s16, 0
    %p87 = por %p85, %p86
    %s88 = sadd.s32 %s18, 2
    %s89 = sadd.s32 %s25, 2
    %s90 = ssub.s32 %s17, %s29
    %s91 = ssub.s32 %s88, %s89
    %s92 = sor.u32 %s90, %s91
    %p93 = scmp.eq.s32.totalorder %s92, 0
    %s95 = sadd.s32 %s94, 1
    %s96 = scalar_select %p93, %s94, %s95
    %p99 = pneg %p93
    %p100 = scmp.eq.s32.totalorder %s10, 1
    %p101 = por %p99, %p100
    %p102 = scmp.ne.s32.totalorder %s94, %s97
    %p103 = scmp.eq.s32.totalorder %s10, 0
    %p104 = por %p102, %p103
    %p105 = scmp.ne.s32.totalorder %s94, %s97
    %p106 = scmp.eq.s32.totalorder %s15, 1
    %p107 = por %p105, %p106
    %p108 = scmp.ne.s32.totalorder %s97, %s98
    %p109 = scmp.eq.s32.totalorder %s15, 0
    %p110 = por %p108, %p109
    %p111 = scmp.ne.s32.totalorder %s97, %s98
    %p112 = scmp.eq.s32.totalorder %s16, 1
    %p113 = por %p111, %p112
    %p115 = scmp.ne.s32.totalorder %s98, %s114
    %p116 = scmp.eq.s32.totalorder %s16, 0
    %p117 = por %p115, %p116
    %s118 = ssub.s32 %s17, %s29
    %p119 = scmp.eq.s32.totalorder %s118, 0
    %s121 = sadd.s32 %s120, 1
    %s122 = scalar_select %p119, %s120, %s121
    %p125 = pneg %p119
    %p126 = scmp.eq.s32.totalorder %s10, 1
    %p127 = por %p125, %p126
    %p128 = scmp.ne.s32.totalorder %s120, %s123
    %p129 = scmp.eq.s32.totalorder %s10, 0
    %p130 = por %p128, %p129
    %p131 = scmp.ne.s32.totalorder %s120, %s123
    %p132 = scmp.eq.s32.totalorder %s15, 1
    %p133 = por %p131, %p132
    %p134 = scmp.ne.s32.totalorder %s123, %s124
    %p135 = scmp.eq.s32.totalorder %s15, 0
    %p136 = por %p134, %p135
    %p137 = scmp.ne.s32.totalorder %s123, %s124
    %p138 = scmp.eq.s32.totalorder %s16, 1
    %p139 = por %p137, %p138
    %p141 = scmp.ne.s32.totalorder %s124, %s140
    %p142 = scmp.eq.s32.totalorder %s16, 0
    %p143 = por %p141, %p142
    %s144 = ssub.s32 %s17, %s29
    %s145 = ssub.s32 %s18, %s25
    %s146 = sor.u32 %s144, %s145
    %p147 = scmp.eq.s32.totalorder %s146, 0
    %s149 = sadd.s32 %s148, 1
    %s150 = scalar_select %p147, %s148, %s149
    %p153 = pneg %p147
    %p154 = scmp.eq.s32.totalorder %s10, 1
    %p155 = por %p153, %p154
    %p156 = scmp.ne.s32.totalorder %s148, %s151
    %p157 = scmp.eq.s32.totalorder %s10, 0
    %p158 = por %p156, %p157
    %p159 = scmp.ne.s32.totalorder %s148, %s151
    %p160 = scmp.eq.s32.totalorder %s15, 1
    %p161 = por %p159, %p160
    %p162 = scmp.ne.s32.totalorder %s151, %s152
    %p163 = scmp.eq.s32.totalorder %s15, 0
    %p164 = por %p162, %p163
    %p165 = scmp.ne.s32.totalorder %s151, %s152
    %p166 = scmp.eq.s32.totalorder %s16, 1
    %p167 = por %p165, %p166
    %p169 = scmp.ne.s32.totalorder %s152, %s168
    %p170 = scmp.eq.s32.totalorder %s16, 0
    %p171 = por %p169, %p170
    %p172 = scmp.le.s32.totalorder 1, %s10
    %p173 = scmp.lt.s32.totalorder %s10, 3
    %p174 = pnand %p172, %p173
    %p175 = pneg %p174
    // Predicated region
    $region9: #{bert_forward.14} parent=5 // pred_check
      _
    $region10: #{bert_forward.14} parent=5 // pred_check_branch
      %177 = sbr.rel (%p174) target = $region12
    $region11: #{bert_forward.14} parent=5 // pred_region
      %s178 = ssub.s32 %s10, 1
    $region12: #{bert_forward.14} parent=5 // pred_fallthru
      _
    %p179 = scmp.lt.s32.totalorder %s10, 2
    // Predicated region
    $region13: #{bert_forward.14} parent=5 // pred_check
      %p180 = pneg %p179
    $region14: #{bert_forward.14} parent=5 // pred_check_branch
      %182 = sbr.rel (%p180) target = $region16
    $region15: #{bert_forward.14} parent=5 // pred_region
      // Predicated region
      $region17: #{bert_forward.14} parent=15 // pred_check
        %p183 = pneg %p44
      $region18: #{bert_forward.14} parent=15 // pred_check_branch
        %185 = sbr.rel (%p183) target = $region20
      $region19: #{bert_forward.14} parent=15 // pred_region
        %p186 = scmp.lt.s32.totalorder %s17, 1
        %s187 = scalar_select %p186, %s17, 1
        %p188 = scmp.lt.s32.totalorder %s18, 2
        %s189 = scalar_select %p188, %s18, 2
        %s190 = smul.addr %s187, 3
        %s191 = sadd.s32 %s189, %s190
        %s192 = smul.addr %s191, 4
        %s193 = scalar_lea.vmem %s0, %s192
      $region20: #{bert_forward.14} parent=15 // pred_fallthru
        _
      // Predicated region
      $region21: #{bert_forward.14} parent=15 // pred_check
        %p194 = pneg %p74
      $region22: #{bert_forward.14} parent=15 // pred_check_branch
        %196 = sbr.rel (%p194) target = $region24
      $region23: #{bert_forward.14} parent=15 // pred_region
        %s197 = sadd.s32 %s18, 1
        %p198 = scmp.lt.s32.totalorder %s17, 1
        %s199 = scalar_select %p198, %s17, 1
        %p200 = scmp.lt.s32.totalorder %s197, 2
        %s201 = scalar_select %p200, %s197, 2
        %s202 = smul.addr %s199, 3
        %s203 = sadd.s32 %s201, %s202
        %s204 = smul.addr %s203, 4
        %s205 = scalar_lea.vmem %s1, %s204
        %s206 = sadd.s32 %s18, 1
      $region24: #{bert_forward.14} parent=15 // pred_fallthru
        _
      // Predicated region
      $region25: #{bert_forward.14} parent=15 // pred_check
        %p207 = pneg %p104
      $region26: #{bert_forward.14} parent=15 // pred_check_branch
        %209 = sbr.rel (%p207) target = $region28
      $region27: #{bert_forward.14} parent=15 // pred_region
        %s210 = sadd.s32 %s18, 2
        %p211 = scmp.lt.s32.totalorder %s17, 1
        %s212 = scalar_select %p211, %s17, 1
        %p213 = scmp.lt.s32.totalorder %s210, 2
        %s214 = scalar_select %p213, %s210, 2
        %s215 = smul.addr %s212, 3
        %s216 = sadd.s32 %s214, %s215
        %s217 = smul.addr %s216, 4
        %s218 = scalar_lea.vmem %s2, %s217
        %s219 = sadd.s32 %s18, 2
      $region28: #{bert_forward.14} parent=15 // pred_fallthru
        _
      // Predicated region
      $region29: #{bert_forward.14} parent=15 // pred_check
        %p220 = pneg %p130
      $region30: #{bert_forward.14} parent=15 // pred_check_branch
        %222 = sbr.rel (%p220) target = $region32
      $region31: #{bert_forward.14} parent=15 // pred_region
        %p223 = scmp.lt.s32.totalorder %s17, 1
        %s224 = scalar_select %p223, %s17, 1
        %s225 = scalar_lea.vmem %s3, %s224
      $region32: #{bert_forward.14} parent=15 // pred_fallthru
        _
    $region16: #{bert_forward.14} parent=5 // pred_fallthru
      _
    %p226 = scmp.le.s32.totalorder 1, %s10
    %p227 = scmp.lt.s32.totalorder %s10, 3
    %p228 = pnand %p226, %p227
    %p229 = pneg %p228
    // Predicated region
    $region33: #{bert_forward.14} parent=5 // pred_check
      _
    $region34: #{bert_forward.14} parent=5 // pred_check_branch
      %231 = sbr.rel (%p228) target = $region36
    $region35: #{bert_forward.14} parent=5 // pred_region
      %s232 = ssub.s32 %s10, 1
      %p233 = scmp.lt.s32.totalorder %s19, 1
      %s234 = scalar_select %p233, %s19, 1
      %p235 = scmp.lt.s32.totalorder %s20, 2
      %s236 = scalar_select %p235, %s20, 2
      %s237 = smul.addr %s234, 3
      %s238 = sadd.s32 %s236, %s237
      %s239 = smul.addr %s238, 4
      %s240 = scalar_lea.vmem %s0, %s239
      %p241 = pneg %p50
      %p242 = pneg %p47
      %s243 = sadd.s32 %s20, 1
      %p244 = scmp.lt.s32.totalorder %s19, 1
      %s245 = scalar_select %p244, %s19, 1
      %p246 = scmp.lt.s32.totalorder %s243, 2
      %s247 = scalar_select %p246, %s243, 2
      %s248 = smul.addr %s245, 3
      %s249 = sadd.s32 %s247, %s248
      %s250 = smul.addr %s249, 4
      %s251 = scalar_lea.vmem %s1, %s250
      %p252 = pneg %p80
      %p253 = pneg %p77
      %s254 = sadd.s32 %s20, 2
      %p255 = scmp.lt.s32.totalorder %s19, 1
      %s256 = scalar_select %p255, %s19, 1
      %p257 = scmp.lt.s32.totalorder %s254, 2
      %s258 = scalar_select %p257, %s254, 2
      %s259 = smul.addr %s256, 3
      %s260 = sadd.s32 %s258, %s259
      %s261 = smul.addr %s260, 4
      %s262 = scalar_lea.vmem %s2, %s261
      %p263 = pneg %p110
      %p264 = pneg %p107
      %p265 = scmp.lt.s32.totalorder %s19, 1
      %s266 = scalar_select %p265, %s19, 1
      %s267 = scalar_lea.vmem %s3, %s266
      %p268 = pneg %p136
      %p269 = pneg %p133
      %p270 = pneg %p164
      %p271 = pneg %p161
      %p272 = scmp.lt.s32.totalorder %s19, 1
      %s273 = scalar_select %p272, %s19, 1
      %p274 = scmp.lt.s32.totalorder %s20, 0
      %s275 = scalar_select %p274, %s20, 0
      %s276 = sadd.s32 %s275, %s273
      %s277 = smul.addr %s276, 4
      %s278 = scalar_lea.vmem %s4, %s277
      %p279 = scmp.lt.s32.totalorder %s19, 1
      %s280 = scalar_select %p279, %s19, 1
      %p281 = scmp.lt.s32.totalorder %s20, 2
      %s282 = scalar_select %p281, %s20, 2
      %s283 = smul.addr %s280, 3
      %s284 = sadd.s32 %s282, %s283
      %s285 = smul.addr %s284, 4
      %s286 = scalar_lea.vmem %s0, %s285
      %s287 = sadd.s32 %s20, 1
      %p288 = scmp.lt.s32.totalorder %s19, 1
      %s289 = scalar_select %p288, %s19, 1
      %p290 = scmp.lt.s32.totalorder %s287, 2
      %s291 = scalar_select %p290, %s287, 2
      %s292 = smul.addr %s289, 3
      %s293 = sadd.s32 %s291, %s292
      %s294 = smul.addr %s293, 4
      %s295 = scalar_lea.vmem %s1, %s294
      %s296 = sadd.s32 %s20, 1
      %s297 = sadd.s32 %s20, 2
      %p298 = scmp.lt.s32.totalorder %s19, 1
      %s299 = scalar_select %p298, %s19, 1
      %p300 = scmp.lt.s32.totalorder %s297, 2
      %s301 = scalar_select %p300, %s297, 2
      %s302 = smul.addr %s299, 3
      %s303 = sadd.s32 %s301, %s302
      %s304 = smul.addr %s303, 4
      %s305 = scalar_lea.vmem %s2, %s304
      %s306 = sadd.s32 %s20, 2
      %p307 = scmp.lt.s32.totalorder %s19, 1
      %s308 = scalar_select %p307, %s19, 1
      %s309 = scalar_lea.vmem %s3, %s308
      %p310 = scmp.lt.s32.totalorder %s19, 1
      %s311 = scalar_select %p310, %s19, 1
      %p312 = scmp.lt.s32.totalorder %s20, 0
      %s313 = scalar_select %p312, %s20, 0
      %s314 = sadd.s32 %s313, %s311
      %s315 = smul.addr %s314, 4
      %s316 = scalar_lea.vmem %s4, %s315
      %v318 = vld [vmem:[%s309] sm:$0x1]
      %v319 = vld [vmem:[%s286] sm:$0xf]
      %v320 = vld [vmem:[%s295] sm:$0xf]
      %v321 = vld [vmem:[%s305] sm:$0xf]
      %vm322 = vcmask 261120
      %v324 = vsel %vm322, %v319, 0
      %v327 = vsel %vm322, %v320, 0
      %329 = vmatpush.bf16.xpose.msra.mxu0 0
      %330 = vmatpush.bf16.xpose.msra.mxu0 0
      %331 = vmatpush.bf16.xpose.msra.mxu0 0
      %332 = vmatpush.bf16.xpose.msra.mxu0 0
      %333 = vmatpush.bf16.xpose.msra.mxu0 0
      %334 = vmatpush.bf16.xpose.msra.mxu0 0
      %335 = vmatpush.bf16.xpose.msra.mxu0 0
      %336 = vmatpush.bf16.xpose.msra.mxu0 %v327
      %337 = vmatmul.bf16.gmra.mxu0 %v324
      %v338 = vpop.f32.mrf.mxu0
      %v339 = vadd.f32 0.0, %v338
      %v340 = vpop.f32.mrf.mxu0
      %341 = vdwg.mxu0
      %v342 = vmul.f32 %v339, 0.17677669
      %v344 = vperm.slane %v318, 0
      %v346 = vadd.f32 %v342, %v344
      %vm347 = vcmask 64512
      %v348 = vsel %vm347, %v346, -inf
      %349 = vmax.xlane.f32.xlu0 %v348
      %v350 = vpop.xlane.xlu0 %349
      %v351 = vsub.f32 %v346, %v350
      %v352 = vmul.f32 %v351, 1.442695
      %v353 = vpow.pop %v352
      %v354 = vsel %vm347, %v353, 0.0
      %355 = vadd.xlane.f32.xlu0 %v354
      %v356 = vpop.xlane.xlu0 %355
      %v357 = vrcp.pop %v356
      %v358 = vmul.f32 %v353, %v357
      %v359 = vpack.c.bf16 %v358, %v358
      %v361 = vsel %vm347, %v359, 0
      %vm363 = vcmask 1043456
      %v365 = vsel %vm363, %v321, 0
      %367 = vmatpush.bf16.msra.mxu0 0
      %368 = vmatpush.bf16.msra.mxu0 0
      %369 = vmatpush.bf16.msra.mxu0 0
      %370 = vmatpush.bf16.msra.mxu0 0
      %371 = vmatpush.bf16.msra.mxu0 0
      %372 = vmatpush.bf16.msra.mxu0 0
      %373 = vmatpush.bf16.msra.mxu0 0
      %374 = vmatpush.bf16.msra.mxu0 %v365
      %375 = vmatmul.bf16.gmra.mxu0 %v361
      %v376 = vpop.f32.mrf.mxu0
      %v377 = vadd.f32 0.0, %v376
      %v378 = vpop.f32.mrf.mxu0
      %379 = vdwg.mxu0
      %v380 = vpack.c.bf16 %v377, %v377
      %vm381 = vcmask 257024
      %382 = vst.msk [vmem:[%s316] sm:$0xf] %vm381, %v380
      %v384 = vunpack.c.l.b16 %v319
      %v385 = vpack.c.b16 %v384, %v384
      %386 = vrot.lane.b32.xlu0 %v385, 96
      %v387 = vpop.permute.xlu0 %386
      %v389 = vunpack.c.l.b16 %v320
      %v390 = vpack.c.b16 %v389, %v389
      %391 = vrot.lane.b32.xlu0 %v390, 96
      %v392 = vpop.permute.xlu0 %391
      %v394 = vsel %vm322, %v387, 0
      %v397 = vsel %vm322, %v392, 0
      %399 = vmatpush.bf16.xpose.msra.mxu0 0
      %400 = vmatpush.bf16.xpose.msra.mxu0 0
      %401 = vmatpush.bf16.xpose.msra.mxu0 0
      %402 = vmatpush.bf16.xpose.msra.mxu0 0
      %403 = vmatpush.bf16.xpose.msra.mxu0 0
      %404 = vmatpush.bf16.xpose.msra.mxu0 0
      %405 = vmatpush.bf16.xpose.msra.mxu0 0
      %406 = vmatpush.bf16.xpose.msra.mxu0 %v397
      %407 = vmatmul.bf16.gmra.mxu0 %v394
      %v408 = vpop.f32.mrf.mxu0
      %v409 = vadd.f32 0.0, %v408
      %v410 = vpop.f32.mrf.mxu0
      %411 = vdwg.mxu0
      %v412 = vmul.f32 %v409, 0.17677669
      %v413 = vadd.f32 %v412, %v344
      %v414 = vsel %vm347, %v413, -inf
      %415 = vmax.xlane.f32.xlu0 %v414
      %v416 = vpop.xlane.xlu0 %415
      %v417 = vsub.f32 %v413, %v416
      %v418 = vmul.f32 %v417, 1.442695
      %v419 = vpow.pop %v418
      %v420 = vsel %vm347, %v419, 0.0
      %421 = vadd.xlane.f32.xlu0 %v420
      %v422 = vpop.xlane.xlu0 %421
      %v423 = vrcp.pop %v422
      %v424 = vmul.f32 %v419, %v423
      %v425 = vpack.c.bf16 %v424, %v424
      %v427 = vunpack.c.l.b16 %v321
      %v428 = vpack.c.b16 %v427, %v427
      %429 = vrot.lane.b32.xlu0 %v428, 96
      %v430 = vpop.permute.xlu0 %429
      %v432 = vsel %vm347, %v425, 0
      %v435 = vsel %vm363, %v430, 0
      %437 = vmatpush.bf16.msra.mxu0 0
      %438 = vmatpush.bf16.msra.mxu0 0
      %439 = vmatpush.bf16.msra.mxu0 0
      %440 = vmatpush.bf16.msra.mxu0 0
      %441 = vmatpush.bf16.msra.mxu0 0
      %442 = vmatpush.bf16.msra.mxu0 0
      %443 = vmatpush.bf16.msra.mxu0 0
      %444 = vmatpush.bf16.msra.mxu0 %v435
      %445 = vmatmul.bf16.gmra.mxu0 %v432
      %v446 = vpop.f32.mrf.mxu0
      %v447 = vadd.f32 0.0, %v446
      %v448 = vpop.f32.mrf.mxu0
      %449 = vdwg.mxu0
      %v450 = vpack.c.bf16 %v447, %v447
      %452 = vrot.lane.b32.xlu0 %v450, 32
      %v453 = vpop.permute.xlu0 %452
      %vm455 = vcmask 519424
      %456 = vst.msk [vmem:[%s316] sm:$0xf] %vm455, %v453
      %457 = vrot.lane.b32.xlu0 %v385, 64
      %v458 = vpop.permute.xlu0 %457
      %459 = vrot.lane.b32.xlu0 %v390, 64
      %v460 = vpop.permute.xlu0 %459
      %v462 = vsel %vm322, %v458, 0
      %v465 = vsel %vm322, %v460, 0
      %467 = vmatpush.bf16.xpose.msra.mxu0 0
      %468 = vmatpush.bf16.xpose.msra.mxu0 0
      %469 = vmatpush.bf16.xpose.msra.mxu0 0
      %470 = vmatpush.bf16.xpose.msra.mxu0 0
      %471 = vmatpush.bf16.xpose.msra.mxu0 0
      %472 = vmatpush.bf16.xpose.msra.mxu0 0
      %473 = vmatpush.bf16.xpose.msra.mxu0 0
      %474 = vmatpush.bf16.xpose.msra.mxu0 %v465
      %475 = vmatmul.bf16.gmra.mxu0 %v462
      %v476 = vpop.f32.mrf.mxu0
      %v477 = vadd.f32 0.0, %v476
      %v478 = vpop.f32.mrf.mxu0
      %479 = vdwg.mxu0
      %v480 = vmul.f32 %v477, 0.17677669
      %v481 = vadd.f32 %v480, %v344
      %v482 = vsel %vm347, %v481, -inf
      %483 = vmax.xlane.f32.xlu0 %v482
      %v484 = vpop.xlane.xlu0 %483
      %v485 = vsub.f32 %v481, %v484
      %v486 = vmul.f32 %v485, 1.442695
      %v487 = vpow.pop %v486
      %v488 = vsel %vm347, %v487, 0.0
      %489 = vadd.xlane.f32.xlu0 %v488
      %v490 = vpop.xlane.xlu0 %489
      %v491 = vrcp.pop %v490
      %v492 = vmul.f32 %v487, %v491
      %v493 = vpack.c.bf16 %v492, %v492
      %494 = vrot.lane.b32.xlu0 %v428, 64
      %v495 = vpop.permute.xlu0 %494
      %v497 = vsel %vm347, %v493, 0
      %v500 = vsel %vm363, %v495, 0
      %502 = vmatpush.bf16.msra.mxu0 0
      %503 = vmatpush.bf16.msra.mxu0 0
      %504 = vmatpush.bf16.msra.mxu0 0
      %505 = vmatpush.bf16.msra.mxu0 0
      %506 = vmatpush.bf16.msra.mxu0 0
      %507 = vmatpush.bf16.msra.mxu0 0
      %508 = vmatpush.bf16.msra.mxu0 0
      %509 = vmatpush.bf16.msra.mxu0 %v500
      %510 = vmatmul.bf16.gmra.mxu0 %v497
      %v511 = vpop.f32.mrf.mxu0
      %v512 = vadd.f32 0.0, %v511
      %v513 = vpop.f32.mrf.mxu0
      %514 = vdwg.mxu0
      %v515 = vpack.c.bf16 %v512, %v512
      %517 = vrot.lane.b32.xlu0 %v515, 64
      %v518 = vpop.permute.xlu0 %517
      %vm520 = vcmask 781824
      %521 = vst.msk [vmem:[%s316] sm:$0xf] %vm520, %v518
      %522 = vrot.lane.b32.xlu0 %v385, 32
      %v523 = vpop.permute.xlu0 %522
      %524 = vrot.lane.b32.xlu0 %v390, 32
      %v525 = vpop.permute.xlu0 %524
      %v527 = vsel %vm322, %v523, 0
      %v530 = vsel %vm322, %v525, 0
      %532 = vmatpush.bf16.xpose.msra.mxu0 0
      %533 = vmatpush.bf16.xpose.msra.mxu0 0
      %534 = vmatpush.bf16.xpose.msra.mxu0 0
      %535 = vmatpush.bf16.xpose.msra.mxu0 0
      %536 = vmatpush.bf16.xpose.msra.mxu0 0
      %537 = vmatpush.bf16.xpose.msra.mxu0 0
      %538 = vmatpush.bf16.xpose.msra.mxu0 0
      %539 = vmatpush.bf16.xpose.msra.mxu0 %v530
      %540 = vmatmul.bf16.gmra.mxu0 %v527
      %v541 = vpop.f32.mrf.mxu0
      %v542 = vadd.f32 0.0, %v541
      %v543 = vpop.f32.mrf.mxu0
      %544 = vdwg.mxu0
      %v545 = vmul.f32 %v542, 0.17677669
      %v546 = vadd.f32 %v545, %v344
      %v547 = vsel %vm347, %v546, -inf
      %548 = vmax.xlane.f32.xlu0 %v547
      %v549 = vpop.xlane.xlu0 %548
      %v550 = vsub.f32 %v546, %v549
      %v551 = vmul.f32 %v550, 1.442695
      %v552 = vpow.pop %v551
      %v553 = vsel %vm347, %v552, 0.0
      %554 = vadd.xlane.f32.xlu0 %v553
      %v555 = vpop.xlane.xlu0 %554
      %v556 = vrcp.pop %v555
      %v557 = vmul.f32 %v552, %v556
      %v558 = vpack.c.bf16 %v557, %v557
      %559 = vrot.lane.b32.xlu0 %v428, 32
      %v560 = vpop.permute.xlu0 %559
      %v562 = vsel %vm347, %v558, 0
      %v565 = vsel %vm363, %v560, 0
      %567 = vmatpush.bf16.msra.mxu0 0
      %568 = vmatpush.bf16.msra.mxu0 0
      %569 = vmatpush.bf16.msra.mxu0 0
      %570 = vmatpush.bf16.msra.mxu0 0
      %571 = vmatpush.bf16.msra.mxu0 0
      %572 = vmatpush.bf16.msra.mxu0 0
      %573 = vmatpush.bf16.msra.mxu0 0
      %574 = vmatpush.bf16.msra.mxu0 %v565
      %575 = vmatmul.bf16.gmra.mxu0 %v562
      %v576 = vpop.f32.mrf.mxu0
      %v577 = vadd.f32 0.0, %v576
      %v578 = vpop.f32.mrf.mxu0
      %579 = vdwg.mxu0
      %v580 = vpack.c.bf16 %v577, %v577
      %582 = vrot.lane.b32.xlu0 %v580, 96
      %v583 = vpop.permute.xlu0 %582
      %vm585 = vcmask 1044224
      %586 = vst.msk [vmem:[%s316] sm:$0xf] %vm585, %v583
      %p587 = scmp.lt.s32.totalorder %s19, 1
      %s588 = scalar_select %p587, %s19, 1
      %p589 = scmp.lt.s32.totalorder %s20, 0
      %s590 = scalar_select %p589, %s20, 0
      %s591 = sadd.s32 %s590, %s588
      %s592 = smul.addr %s591, 4
      %s593 = scalar_lea.vmem %s4, %s592
      // Predicated region
      $region37: #{bert_forward.14} parent=35 // pred_check
        %p594 = pneg %p161
      $region38: #{bert_forward.14} parent=35 // pred_check_branch
        %596 = sbr.rel (%p594) target = $region40
      $region39: #{bert_forward.14} parent=35 // pred_region
        _
      $region40: #{bert_forward.14} parent=35 // pred_fallthru
        _
    $region36: #{bert_forward.14} parent=5 // pred_fallthru
      _
    %p597 = scmp.le.s32.totalorder 2, %s10
    // Predicated region
    $region41: #{bert_forward.14} parent=5 // pred_check
      %p598 = pneg %p597
    $region42: #{bert_forward.14} parent=5 // pred_check_branch
      %600 = sbr.rel (%p598) target = $region44
    $region43: #{bert_forward.14} parent=5 // pred_region
      %s601 = ssub.s32 %s10, 2
      // Predicated region
      $region45: #{bert_forward.14} parent=43 // pred_check
        %p602 = pneg %p167
      $region46: #{bert_forward.14} parent=43 // pred_check_branch
        %604 = sbr.rel (%p602) target = $region48
      $region47: #{bert_forward.14} parent=43 // pred_region
        %p605 = scmp.lt.s32.totalorder %s21, 1
        %s606 = scalar_select %p605, %s21, 1
        %p607 = scmp.lt.s32.totalorder %s22, 0
        %s608 = scalar_select %p607, %s22, 0
        %s609 = sadd.s32 %s608, %s606
        %s610 = smul.addr %s609, 4
        %s611 = scalar_lea.vmem %s4, %s610
      $region48: #{bert_forward.14} parent=43 // pred_fallthru
        _
    $region44: #{bert_forward.14} parent=5 // pred_fallthru
      _
  $region6: #{bert_forward.14} parent=0 // loop_footer
    %s14 = sadd.s32 1, %s10
  $region7: #{bert_forward.14} parent=0 // loop_footer_branch
    %9 = sbr.rel target = $region3
  $region8: #{bert_forward.14} parent=0 // loop_exit
    _

// kernel: bert_forward.18
$region0: #{bert_forward.18}
  #allocation0 [shape = 'u32[]', space=smem, size = 0x4, offset = 0x4, fixed_abs, tag = 'smem constant byte address 0x4 - core index']
  #allocation1 [shape = 'u32[72,128]{1,0:T(1,128)}', space=vmem, size = 0x9000, scoped, tag = 'internal scratch']
  #allocation2 [shape = 'f32[16,128]{1,0:T(8,128)}', space=vmem, size = 0x2000, scoped, tag = 'scratch operand']
  %s0 = inlined_call_operand.vmem [shape: f32[16,128], index: 0, kind: input, shape index: {}]
  %s1 = inlined_call_operand.hbm [shape: bf16[128,384], index: 1, kind: input, shape index: {}]
  %s2 = inlined_call_operand.vmem [shape: f32[1,384], index: 2, kind: input, shape index: {}]
  %s3 = inlined_call_operand.vmem [shape: bf16[16,384], index: 3, kind: output, shape index: {}]
  %s4 = sld [smem:[#allocation0]]
  $region94: #{bert_forward.18} parent=0
    _
  %s6 = ssub.s32 1, %s4
  %s7 = scalar_select 0, %s6, %s4
  $region1: #{bert_forward.18} parent=0
    #allocation3 [shape = 'u8[65536]{0}', space=vmem, size = 0x10000, scoped, tag = 'input window, operand 1']
    #allocation4 [shape = 's32[2]{0}', space=sflag, size = 0x8, scoped, tag = 'scoped memory for bert_forward.18']
    #allocation5 [shape = 'u8[8192]{0}', space=vmem, size = 0x2000, scoped, tag = 'output window, operand 0']
    %8 = vsyncpa [#allocation4], 0
    %s9 = scalar_lea.sflag [#allocation4], 1
    %10 = vsyncpa %s9, 0
    loop: start=0, step=1, limit=5
    $region2: #{bert_forward.18} parent=1 // loop_pre_header
      _
    $region3: #{bert_forward.18} parent=1 // loop_header
      %s12 = sphi 0, %s16
      %p13 = scmp.ge.s32.totalorder %s12, 5
      %s19 = sphi 0, %s38
      %s20 = sphi 0, %s34
      %s21 = sphi 0, %s30
      %s22 = sphi 0, %s19
      %s23 = sphi 0, %s20
      %s24 = sphi 0, %s21
      %s25 = sphi 0, %s22
      %s26 = sphi 0, %s23
      %s27 = sphi 0, %s24
      %s43 = sphi 0, %s45
      %s46 = sphi 0, %s43
      %s47 = sphi 0, %s46
      %s63 = sphi 0, %s47
      %s71 = sphi 0, %s73
      %s74 = sphi 0, %s71
      %s75 = sphi 0, %s74
      %s91 = sphi 0, %s75
      %s97 = sphi 0, %s99
      %s100 = sphi 0, %s97
      %s101 = sphi 0, %s100
      %s117 = sphi 0, %s101
      %s125 = sphi 0, %s127
      %s128 = sphi 0, %s125
      %s129 = sphi 0, %s128
      %s145 = sphi 0, %s129
    $region4: #{bert_forward.18} parent=1 // loop_header_branch
      %15 = sbr.rel (%p13) target = $region8
    $region5: #{bert_forward.18} parent=1 // loop_body
      %s17 = ssub.s32 %s12, 1
      %s18 = ssub.s32 %s12, 2
      %s28 = sadd.s32 1, %s21
      %p29 = scmp.ge.s32.totalorder %s28, 1
      %s30 = scalar_select %p29, 0, %s28
      %s31 = sadd.s32 1, %s20
      %s32 = scalar_select %p29, %s31, %s20
      %p33 = scmp.ge.s32.totalorder %s32, 3
      %s34 = scalar_select %p33, 0, %s32
      %s35 = sadd.s32 1, %s19
      %s36 = scalar_select %p33, %s35, %s19
      %p37 = scmp.ge.s32.totalorder %s36, 1
      %s38 = scalar_select %p37, 0, %s36
      %s39 = ssub.s32 %s19, %s38
      %s40 = ssub.s32 %s21, %s30
      %s41 = sor.u32 %s39, %s40
      %p42 = scmp.eq.s32.totalorder %s41, 0
      %s44 = sadd.s32 %s43, 1
      %s45 = scalar_select %p42, %s43, %s44
      %p48 = pneg %p42
      %p49 = scmp.eq.s32.totalorder %s12, 2
      %p50 = por %p48, %p49
      %p51 = scmp.ne.s32.totalorder %s43, %s46
      %p52 = scmp.eq.s32.totalorder %s12, 0
      %p53 = por %p51, %p52
      %p54 = scmp.ne.s32.totalorder %s43, %s46
      %p55 = scmp.eq.s32.totalorder %s17, 2
      %p56 = por %p54, %p55
      %p57 = scmp.ne.s32.totalorder %s46, %s47
      %p58 = scmp.eq.s32.totalorder %s17, 0
      %p59 = por %p57, %p58
      %p60 = scmp.ne.s32.totalorder %s46, %s47
      %p61 = scmp.eq.s32.totalorder %s18, 2
      %p62 = por %p60, %p61
      %p64 = scmp.ne.s32.totalorder %s47, %s63
      %p65 = scmp.eq.s32.totalorder %s18, 0
      %p66 = por %p64, %p65
      %s67 = ssub.s32 %s21, %s30
      %s68 = ssub.s32 %s20, %s34
      %s69 = sor.u32 %s67, %s68
      %p70 = scmp.eq.s32.totalorder %s69, 0
      %s72 = sadd.s32 %s71, 1
      %s73 = scalar_select %p70, %s71, %s72
      %p76 = pneg %p70
      %p77 = scmp.eq.s32.totalorder %s12, 2
      %p78 = por %p76, %p77
      %p79 = scmp.ne.s32.totalorder %s71, %s74
      %p80 = scmp.eq.s32.totalorder %s12, 0
      %p81 = por %p79, %p80
      %p82 = scmp.ne.s32.totalorder %s71, %s74
      %p83 = scmp.eq.s32.totalorder %s17, 2
      %p84 = por %p82, %p83
      %p85 = scmp.ne.s32.totalorder %s74, %s75
      %p86 = scmp.eq.s32.totalorder %s17, 0
      %p87 = por %p85, %p86
      %p88 = scmp.ne.s32.totalorder %s74, %s75
      %p89 = scmp.eq.s32.totalorder %s18, 2
      %p90 = por %p88, %p89
      %p92 = scmp.ne.s32.totalorder %s75, %s91
      %p93 = scmp.eq.s32.totalorder %s18, 0
      %p94 = por %p92, %p93
      %s95 = ssub.s32 %s20, %s34
      %p96 = scmp.eq.s32.totalorder %s95, 0
      %s98 = sadd.s32 %s97, 1
      %s99 = scalar_select %p96, %s97, %s98
      %p102 = pneg %p96
      %p103 = scmp.eq.s32.totalorder %s12, 2
      %p104 = por %p102, %p103
      %p105 = scmp.ne.s32.totalorder %s97, %s100
      %p106 = scmp.eq.s32.totalorder %s12, 0
      %p107 = por %p105, %p106
      %p108 = scmp.ne.s32.totalorder %s97, %s100
      %p109 = scmp.eq.s32.totalorder %s17, 2
      %p110 = por %p108, %p109
      %p111 = scmp.ne.s32.totalorder %s100, %s101
      %p112 = scmp.eq.s32.totalorder %s17, 0
      %p113 = por %p111, %p112
      %p114 = scmp.ne.s32.totalorder %s100, %s101
      %p115 = scmp.eq.s32.totalorder %s18, 2
      %p116 = por %p114, %p115
      %p118 = scmp.ne.s32.totalorder %s101, %s117
      %p119 = scmp.eq.s32.totalorder %s18, 0
      %p120 = por %p118, %p119
      %s121 = ssub.s32 %s19, %s38
      %s122 = ssub.s32 %s20, %s34
      %s123 = sor.u32 %s121, %s122
      %p124 = scmp.eq.s32.totalorder %s123, 0
      %s126 = sadd.s32 %s125, 1
      %s127 = scalar_select %p124, %s125, %s126
      %p130 = pneg %p124
      %p131 = scmp.eq.s32.totalorder %s12, 2
      %p132 = por %p130, %p131
      %p133 = scmp.ne.s32.totalorder %s125, %s128
      %p134 = scmp.eq.s32.totalorder %s12, 0
      %p135 = por %p133, %p134
      %p136 = scmp.ne.s32.totalorder %s125, %s128
      %p137 = scmp.eq.s32.totalorder %s17, 2
      %p138 = por %p136, %p137
      %p139 = scmp.ne.s32.totalorder %s128, %s129
      %p140 = scmp.eq.s32.totalorder %s17, 0
      %p141 = por %p139, %p140
      %p142 = scmp.ne.s32.totalorder %s128, %s129
      %p143 = scmp.eq.s32.totalorder %s18, 2
      %p144 = por %p142, %p143
      %p146 = scmp.ne.s32.totalorder %s129, %s145
      %p147 = scmp.eq.s32.totalorder %s18, 0
      %p148 = por %p146, %p147
      %p149 = scmp.le.s32.totalorder 1, %s12
      %p150 = scmp.lt.s32.totalorder %s12, 4
      %p151 = pnand %p149, %p150
      %p152 = pneg %p151
      // Predicated region
      $region9: #{bert_forward.18} parent=5 // pred_check
        _
      $region10: #{bert_forward.18} parent=5 // pred_check_branch
        %154 = sbr.rel (%p151) target = $region12
      $region11: #{bert_forward.18} parent=5 // pred_region
        %s155 = ssub.s32 %s12, 1
        // Predicated region
        $region13: #{bert_forward.18} parent=11 // pred_check
          %p156 = pneg %p59
        $region14: #{bert_forward.18} parent=11 // pred_check_branch
          %158 = sbr.rel (%p156) target = $region16
        $region15: #{bert_forward.18} parent=11 // pred_region
          %s159 = smul.u32 2, %s22
          %p160 = scmp.lt.s32.totalorder %s159, 1
          %s161 = scalar_select %p160, %s159, 1
          %p162 = scmp.lt.s32.totalorder %s24, 0
          %s163 = scalar_select %p162, %s24, 0
          %s164 = sadd.s32 %s163, %s161
          %s165 = smul.addr %s164, 8
          %s166 = scalar_lea.vmem %s0, %s165
          %s167 = smul.u32 2, %s22
        $region16: #{bert_forward.18} parent=11 // pred_fallthru
          _
      $region12: #{bert_forward.18} parent=5 // pred_fallthru
        _
      %p168 = scmp.lt.s32.totalorder %s12, 3
      // Predicated region
      $region17: #{bert_forward.18} parent=5 // pred_check
        %p169 = pneg %p168
      $region18: #{bert_forward.18} parent=5 // pred_check_branch
        %171 = sbr.rel (%p169) target = $region20
      $region19: #{bert_forward.18} parent=5 // pred_region
        // Predicated region
        $region21: #{bert_forward.18} parent=19 // pred_check
          %p172 = pneg %p81
        $region22: #{bert_forward.18} parent=19 // pred_check_branch
          %174 = sbr.rel (%p172) target = $region24
        $region23: #{bert_forward.18} parent=19 // pred_region
          %s175 = sand.u32 %s71, 1
          %s176 = scalar_lea.sflag [#allocation4], %s175
          %s177 = sand.u32 %s71, 1
          %s178 = smul.addr %s177, 64
          %s179 = scalar_lea.vmem [#allocation3], %s178
          %s180 = smul.u32 16, %s21
          %182 = vsyncadd %s176, 0
          %s183 = smul.addr %s180, 3
          %s184 = sadd.s32 %s20, %s183
          %s185 = smul.addr %s184, 4
          %s186 = scalar_lea.hbm %s1, %s185
          %s187 = sshll.u32 %s186, 4
          %s188 = int_to_ptr.hbm [resolvable:$true] %s187
          %s189 = sshll.u32 %s179, 4
          %s190 = int_to_ptr.vmem [resolvable:$true] %s189
          %195 = dma.hbm_to_vmem [thread:$0]  %s188, 1024, %s190, %s176, 192, 64, 4
        $region24: #{bert_forward.18} parent=19 // pred_fallthru
          _
        // Predicated region
        $region25: #{bert_forward.18} parent=19 // pred_check
          %p196 = pneg %p107
        $region26: #{bert_forward.18} parent=19 // pred_check_branch
          %198 = sbr.rel (%p196) target = $region28
        $region27: #{bert_forward.18} parent=19 // pred_region
          %p199 = scmp.lt.s32.totalorder %s20, 2
          %s200 = scalar_select %p199, %s20, 2
          %s201 = scalar_lea.vmem %s2, %s200
        $region28: #{bert_forward.18} parent=19 // pred_fallthru
          _
      $region20: #{bert_forward.18} parent=5 // pred_fallthru
        _
      %p202 = scmp.le.s32.totalorder 1, %s12
      %p203 = scmp.lt.s32.totalorder %s12, 4
      %p204 = pnand %p202, %p203
      %p205 = pneg %p204
      // Predicated region
      $region29: #{bert_forward.18} parent=5 // pred_check
        _
      $region30: #{bert_forward.18} parent=5 // pred_check_branch
        %207 = sbr.rel (%p204) target = $region32
      $region31: #{bert_forward.18} parent=5 // pred_region
        %s208 = ssub.s32 %s12, 1
        %s209 = sand.u32 %s74, 1
        %s210 = scalar_lea.sflag [#allocation4], %s209
        %s211 = sand.u32 %s74, 1
        %s212 = smul.addr %s211, 64
        %s213 = scalar_lea.vmem [#allocation3], %s212
        // Predicated region
        $region33: #{bert_forward.18} parent=31 // pred_check
          %p214 = pneg %p87
        $region34: #{bert_forward.18} parent=31 // pred_check_branch
          %216 = sbr.rel (%p214) target = $region36
        $region35: #{bert_forward.18} parent=31 // pred_region
          %218 = dma.done %s210, 1024
        $region36: #{bert_forward.18} parent=31 // pred_fallthru
          _
        %s219 = smul.u32 2, %s22
        %p220 = scmp.lt.s32.totalorder %s219, 1
        %s221 = scalar_select %p220, %s219, 1
        %p222 = scmp.lt.s32.totalorder %s24, 0
        %s223 = scalar_select %p222, %s24, 0
        %s224 = sadd.s32 %s223, %s221
        %s225 = smul.addr %s224, 8
        %s226 = scalar_lea.vmem %s0, %s225
        %p227 = pneg %p59
        %p228 = pneg %p56
        %s229 = sand.u32 %s74, 1
        %s230 = scalar_lea.sflag [#allocation4], %s229
        %s231 = sand.u32 %s74, 1
        %s232 = smul.addr %s231, 64
        %s233 = scalar_lea.vmem [#allocation3], %s232
        %p234 = pneg %p87
        %p235 = pneg %p84
        %p236 = scmp.lt.s32.totalorder %s23, 2
        %s237 = scalar_select %p236, %s23, 2
        %s238 = scalar_lea.vmem %s2, %s237
        %p239 = pneg %p113
        %p240 = pneg %p110
        %p241 = pneg %p141
        %p242 = pneg %p138
        %s243 = sand.u32 %s128, 1
        %s244 = sand.u32 %s128, 1
        %s245 = smul.addr %s244, 8
        %s246 = scalar_lea.vmem [#allocation5], %s245
        %s247 = smul.u32 2, %s22
        %p248 = scmp.lt.s32.totalorder %s247, 1
        %s249 = scalar_select %p248, %s247, 1
        %p250 = scmp.lt.s32.totalorder %s24, 0
        %s251 = scalar_select %p250, %s24, 0
        %s252 = sadd.s32 %s251, %s249
        %s253 = smul.addr %s252, 8
        %s254 = scalar_lea.vmem %s0, %s253
        %s255 = smul.u32 2, %s22
        %s256 = smul.u32 16, %s24
        %p257 = scmp.lt.s32.totalorder %s23, 2
        %s258 = scalar_select %p257, %s23, 2
        %s259 = scalar_lea.vmem %s2, %s258
        %s260 = smul.u32 2, %s22
        %p261 = scmp.eq.s32.totalorder %s24, 0
        // Predicated region
        $region37: #{bert_forward.18} parent=31 // pred_check
          %p262 = pneg %p261
        $region38: #{bert_forward.18} parent=31 // pred_check_branch
          %264 = sbr.rel (%p262) target = $region40
        $region39: #{bert_forward.18} parent=31 // pred_region
          %265 = vst [vmem:[#allocation2] sm:$0xff] 0.0
          %266 = vst [vmem:[#allocation2 + $0x8] sm:$0xff] 0.0
        $region40: #{bert_forward.18} parent=31 // pred_fallthru
          _
        %v267 = vld [vmem:[#allocation2] sm:$0xff]
        %v268 = vld [vmem:[#allocation2 + $0x8] sm:$0xff]
        %v269 = vld [vmem:[%s254] sm:$0xff]
        %v270 = vld [vmem:[%s254 + $0x8] sm:$0xff]
        %v271 = vpack.c.bf16 %v270, %v269
        %v272 = vld [vmem:[%s213] sm:$0xf]
        %v273 = vld [vmem:[%s213 + $0x4] sm:$0xf]
        %v274 = vld [vmem:[%s213 + $0x8] sm:$0xf]
        %v275 = vld [vmem:[%s213 + $0xc] sm:$0xf]
        %v276 = vld [vmem:[%s213 + $0x10] sm:$0xf]
        %v277 = vld [vmem:[%s213 + $0x14] sm:$0xf]
        %v278 = vld [vmem:[%s213 + $0x18] sm:$0xf]
        %v279 = vld [vmem:[%s213 + $0x1c] sm:$0xf]
        %v280 = vld [vmem:[%s213 + $0x20] sm:$0xf]
        %v281 = vld [vmem:[%s213 + $0x24] sm:$0xf]
        %v282 = vld [vmem:[%s213 + $0x28] sm:$0xf]
        %v283 = vld [vmem:[%s213 + $0x2c] sm:$0xf]
        %v284 = vld [vmem:[%s213 + $0x30] sm:$0xf]
        %v285 = vld [vmem:[%s213 + $0x34] sm:$0xf]
        %v286 = vld [vmem:[%s213 + $0x38] sm:$0xf]
        %v287 = vld [vmem:[%s213 + $0x3c] sm:$0xf]
        %v304 = vunpack.c.l.b16 %v272
        %v305 = vunpack.c.l.b16 %v273
        %v306 = vunpack.c.l.b16 %v274
        %v307 = vunpack.c.l.b16 %v275
        %v308 = vunpack.c.l.b16 %v276
        %v309 = vunpack.c.l.b16 %v277
        %v310 = vunpack.c.l.b16 %v278
        %v311 = vunpack.c.l.b16 %v279
        %v312 = vunpack.c.l.b16 %v280
        %v313 = vunpack.c.l.b16 %v281
        %v314 = vunpack.c.l.b16 %v282
        %v315 = vunpack.c.l.b16 %v283
        %v316 = vunpack.c.l.b16 %v284
        %v317 = vunpack.c.l.b16 %v285
        %v318 = vunpack.c.l.b16 %v286
        %v319 = vunpack.c.l.b16 %v287
        %v320 = vpack.c.b16 %v305, %v304
        %v321 = vpack.c.b16 %v307, %v306
        %v322 = vpack.c.b16 %v309, %v308
        %v323 = vpack.c.b16 %v311, %v310
        %v324 = vpack.c.b16 %v313, %v312
        %v325 = vpack.c.b16 %v315, %v314
        %v326 = vpack.c.b16 %v317, %v316
        %v327 = vpack.c.b16 %v319, %v318
        %336 = vmatpush.bf16.msra.mxu0 %v327
        %337 = vmatpush.bf16.msra.mxu0 %v326
        %338 = vmatpush.bf16.msra.mxu0 %v325
        %339 = vmatpush.bf16.msra.mxu0 %v324
        %340 = vmatpush.bf16.msra.mxu0 %v323
        %341 = vmatpush.bf16.msra.mxu0 %v322
        %342 = vmatpush.bf16.msra.mxu0 %v321
        %343 = vmatpush.bf16.msra.mxu0 %v320
        %344 = vmatmul.bf16.gmra.mxu0 %v271
        %v345 = vpop.f32.mrf.mxu0
        %v346 = vadd.f32 0.0, %v345
        %v347 = vpop.f32.mrf.mxu0
        %v348 = vadd.f32 0.0, %v347
        %349 = vdwg.mxu0
        %v350 = vadd.f32 %v267, %v346
        %v351 = vadd.f32 %v268, %v348
        %352 = vst [vmem:[#allocation2] sm:$0xff] %v350
        %353 = vst [vmem:[#allocation2 + $0x8] sm:$0xff] %v351
        // Predicated region
        $region41: #{bert_forward.18} parent=31 // pred_check
          %p354 = pneg %p261
        $region42: #{bert_forward.18} parent=31 // pred_check_branch
          %356 = sbr.rel (%p354) target = $region44
        $region43: #{bert_forward.18} parent=31 // pred_region
          %v357 = vld [vmem:[#allocation2] sm:$0xff]
          %v358 = vld [vmem:[#allocation2 + $0x8] sm:$0xff]
          %v359 = vld [vmem:[%s259] sm:$0x1]
          %v361 = vperm.slane %v359, 0
          %v363 = vadd.f32 %v357, %v361
          %v364 = vadd.f32 %v358, %v361
          %v365 = vpack.c.bf16 %v363, %v363
          %v366 = vpack.c.bf16 %v364, %v364
          %367 = vst [vmem:[%s246] sm:$0xf] %v365
          %368 = vst [vmem:[%s246 + $0x4] sm:$0xf] %v366
        $region44: #{bert_forward.18} parent=31 // pred_fallthru
          _
        %s369 = sand.u32 %s128, 1
        %s370 = sand.u32 %s128, 1
        %s371 = smul.addr %s370, 8
        %s372 = scalar_lea.vmem [#allocation5], %s371
        // Predicated region
        $region45: #{bert_forward.18} parent=31 // pred_check
          %p373 = pneg %p138
        $region46: #{bert_forward.18} parent=31 // pred_check_branch
          %375 = sbr.rel (%p373) target = $region48
        $region47: #{bert_forward.18} parent=31 // pred_region
          %s376 = smul.u32 2, %s22
          %s377 = smul.addr %s376, 3
          %s378 = sadd.s32 %s23, %s377
          %s379 = smul.addr %s378, 4
          %s380 = scalar_lea.vmem %s3, %s379
          // Predicated region
          $region49: #{bert_forward.18} parent=47 // pred_check
            _
          $region50: #{bert_forward.18} parent=47 // pred_check_branch
            %382 = sbr.rel (0) target = $region52
          $region51: #{bert_forward.18} parent=47 // pred_region
            // Predicated region
            $region53: #{bert_forward.18} parent=51 // pred_check
              _
            $region54: #{bert_forward.18} parent=51 // pred_check_branch
              %384 = sbr.rel target = $region56
            $region55: #{bert_forward.18} parent=51 // pred_region
              // Predicated region
              $region68: #{bert_forward.18} parent=55 // pred_check
                _
              $region69: #{bert_forward.18} parent=55 // pred_check_branch
                %402 = sbr.rel (0) target = $region71
              $region70: #{bert_forward.18} parent=55 // pred_region
                loop: start=0, step=1, limit=1
                $region72: #{bert_forward.18} parent=70 // loop_pre_header
                  _
                $region73: #{bert_forward.18} parent=70 // loop_header
                  %s404 = sphi 0, %s408
                  %p405 = scmp.ge.s32.totalorder %s404, 1
                  %s409 = sphi %s372, %s372
                  %s410 = sphi %s380, %s380
                $region74: #{bert_forward.18} parent=70 // loop_header_branch
                  %407 = sbr.rel (%p405) target = $region78
                $region75: #{bert_forward.18} parent=70 // loop_body
                  _
                $region76: #{bert_forward.18} parent=70 // loop_footer
                  %s408 = sadd.s32 1, %s404
                $region77: #{bert_forward.18} parent=70 // loop_footer_branch
                  %403 = sbr.rel target = $region73
                $region78: #{bert_forward.18} parent=70 // loop_exit
                  _
                %s412 = ssub.s32 16, 1
                loop: start=0, step=1, limit=1
                $region79: #{bert_forward.18} parent=70 // loop_pre_header
                  _
                $region80: #{bert_forward.18} parent=70 // loop_header
                  %s414 = sphi 0, %s418
                  %p415 = scmp.ge.s32.totalorder %s414, 1
                  %s419 = sphi %s372, %s372
                  %s420 = sphi %s380, %s380
                $region81: #{bert_forward.18} parent=70 // loop_header_branch
                  %417 = sbr.rel (%p415) target = $region85
                $region82: #{bert_forward.18} parent=70 // loop_body
                  %v421 = vld [vmem:[%s419] sm:%s412]
                  %422 = vst [vmem:[%s420] sm:%s412] %v421
                  %v423 = vld [vmem:[%s419 + $0x4] sm:%s412]
                  %424 = vst [vmem:[%s420 + $0xc] sm:%s412] %v423
                $region83: #{bert_forward.18} parent=70 // loop_footer
                  %s418 = sadd.s32 1, %s414
                $region84: #{bert_forward.18} parent=70 // loop_footer_branch
                  %413 = sbr.rel target = $region80
                $region85: #{bert_forward.18} parent=70 // loop_exit
                  _
              $region71: #{bert_forward.18} parent=55 // pred_fallthru
                _
            $region56: #{bert_forward.18} parent=51 // pred_fallthru
              _
            // Predicated region
            $region57: #{bert_forward.18} parent=51 // pred_check
              _
            $region58: #{bert_forward.18} parent=51 // pred_check_branch
              %386 = sbr.rel (0) target = $region60
            $region59: #{bert_forward.18} parent=51 // pred_region
              %s388 = ssub.s32 16, 1
              loop: start=0, step=1, limit=1
              $region61: #{bert_forward.18} parent=59 // loop_pre_header
                _
              $region62: #{bert_forward.18} parent=59 // loop_header
                %s390 = sphi 0, %s394
                %p391 = scmp.ge.s32.totalorder %s390, 1
                %s395 = sphi %s372, %s372
                %s396 = sphi %s380, %s380
              $region63: #{bert_forward.18} parent=59 // loop_header_branch
                %393 = sbr.rel (%p391) target = $region67
              $region64: #{bert_forward.18} parent=59 // loop_body
                %v397 = vld [vmem:[%s395] sm:%s388]
                %398 = vst [vmem:[%s396] sm:%s388] %v397
                %v399 = vld [vmem:[%s395 + $0x4] sm:%s388]
                %400 = vst [vmem:[%s396 + $0xc] sm:%s388] %v399
              $region65: #{bert_forward.18} parent=59 // loop_footer
                %s394 = sadd.s32 1, %s390
              $region66: #{bert_forward.18} parent=59 // loop_footer_branch
                %389 = sbr.rel target = $region62
              $region67: #{bert_forward.18} parent=59 // loop_exit
                _
            $region60: #{bert_forward.18} parent=51 // pred_fallthru
              _
          $region52: #{bert_forward.18} parent=47 // pred_fallthru
            _
          %425 = vnop
        $region48: #{bert_forward.18} parent=31 // pred_fallthru
          _
      $region32: #{bert_forward.18} parent=5 // pred_fallthru
        _
      %p426 = scmp.le.s32.totalorder 2, %s12
      // Predicated region
      $region86: #{bert_forward.18} parent=5 // pred_check
        %p427 = pneg %p426
      $region87: #{bert_forward.18} parent=5 // pred_check_branch
        %429 = sbr.rel (%p427) target = $region89
      $region88: #{bert_forward.18} parent=5 // pred_region
        %s430 = ssub.s32 %s12, 2
        // Predicated region
        $region90: #{bert_forward.18} parent=88 // pred_check
          %p431 = pneg %p144
        $region91: #{bert_forward.18} parent=88 // pred_check_branch
          %433 = sbr.rel (%p431) target = $region93
        $region92: #{bert_forward.18} parent=88 // pred_region
          %s434 = sand.u32 %s129, 1
          %s435 = sand.u32 %s129, 1
          %s436 = smul.addr %s435, 8
          %s437 = scalar_lea.vmem [#allocation5], %s436
        $region93: #{bert_forward.18} parent=88 // pred_fallthru
          _
      $region89: #{bert_forward.18} parent=5 // pred_fallthru
        _
    $region6: #{bert_forward.18} parent=1 // loop_footer
      %s16 = sadd.s32 1, %s12
    $region7: #{bert_forward.18} parent=1 // loop_footer_branch
      %11 = sbr.rel target = $region3
    $region8: #{bert_forward.18} parent=1 // loop_exit
      _
    %438 = vsyncpa [#allocation4], 1
    %s439 = scalar_lea.sflag [#allocation4], 1
    %440 = vsyncpa %s439, 1

// kernel: bert_forward.16
$region0: #{bert_forward.16}
  #allocation0 [shape = 'u32[]', space=smem, size = 0x4, offset = 0x4, fixed_abs, tag = 'smem constant byte address 0x4 - core index']
  #allocation1 [shape = 'u32[72,128]{1,0:T(1,128)}', space=vmem, size = 0x9000, scoped, tag = 'internal scratch']
  #allocation2 [shape = 'f32[16,256]{1,0:T(8,128)}', space=vmem, size = 0x4000, scoped, tag = 'scratch operand']
  %s0 = inlined_call_operand.vmem [shape: f32[16,128], index: 0, kind: input, shape index: {}]
  %s1 = inlined_call_operand.vmem [shape: bf16[128,256], index: 1, kind: input, shape index: {}]
  %s2 = inlined_call_operand.vmem [shape: f32[1,256], index: 2, kind: input, shape index: {}]
  %s3 = inlined_call_operand.vmem [shape: bf16[16,256], index: 3, kind: output, shape index: {}]
  %s4 = sld [smem:[#allocation0]]
  $region30: #{bert_forward.16} parent=0
    _
  %s6 = ssub.s32 1, %s4
  %s7 = scalar_select 0, %s6, %s4
  // Predicated region
  $region2: #{bert_forward.16} parent=0 // pred_check
    _
  $region3: #{bert_forward.16} parent=0 // pred_check_branch
    %9 = sbr.rel (0) target = $region5
  $region4: #{bert_forward.16} parent=0 // pred_region
    _
  $region5: #{bert_forward.16} parent=0 // pred_fallthru
    _
  // Predicated region
  $region6: #{bert_forward.16} parent=0 // pred_check
    _
  $region7: #{bert_forward.16} parent=0 // pred_check_branch
    %11 = sbr.rel (0) target = $region9
  $region8: #{bert_forward.16} parent=0 // pred_region
    _
  $region9: #{bert_forward.16} parent=0 // pred_fallthru
    _
  // Predicated region
  $region10: #{bert_forward.16} parent=0 // pred_check
    _
  $region11: #{bert_forward.16} parent=0 // pred_check_branch
    %13 = sbr.rel (0) target = $region13
  $region12: #{bert_forward.16} parent=0 // pred_region
    _
  $region13: #{bert_forward.16} parent=0 // pred_fallthru
    _
  %p14 = scmp.eq.s32.totalorder 0, 0
  // Predicated region
  $region14: #{bert_forward.16} parent=0 // pred_check
    %p15 = pneg %p14
  $region15: #{bert_forward.16} parent=0 // pred_check_branch
    %17 = sbr.rel (%p15) target = $region17
  $region16: #{bert_forward.16} parent=0 // pred_region
    %18 = vst [vmem:[#allocation2] sm:$0xff] 0.0
    %19 = vst [vmem:[#allocation2 + $0x8] sm:$0xff] 0.0
    %20 = vst [vmem:[#allocation2 + $0x10] sm:$0xff] 0.0
    %21 = vst [vmem:[#allocation2 + $0x18] sm:$0xff] 0.0
  $region17: #{bert_forward.16} parent=0 // pred_fallthru
    _
  %v22 = vld [vmem:[#allocation2] sm:$0xff]
  %v23 = vld [vmem:[#allocation2 + $0x8] sm:$0xff]
  %v24 = vld [vmem:[#allocation2 + $0x10] sm:$0xff]
  %v25 = vld [vmem:[#allocation2 + $0x18] sm:$0xff]
  %v26 = vld [vmem:[%s0] sm:$0xff]
  %v27 = vld [vmem:[%s0 + $0x8] sm:$0xff]
  %v28 = vpack.c.bf16 %v27, %v26
  %v29 = vld [vmem:[%s1] sm:$0xff]
  %v30 = vld [vmem:[%s1 + $0x8] sm:$0xff]
  %v31 = vld [vmem:[%s1 + $0x10] sm:$0xff]
  %v32 = vld [vmem:[%s1 + $0x18] sm:$0xff]
  %v33 = vld [vmem:[%s1 + $0x20] sm:$0xff]
  %v34 = vld [vmem:[%s1 + $0x28] sm:$0xff]
  %v35 = vld [vmem:[%s1 + $0x30] sm:$0xff]
  %v36 = vld [vmem:[%s1 + $0x38] sm:$0xff]
  %v37 = vld [vmem:[%s1 + $0x40] sm:$0xff]
  %v38 = vld [vmem:[%s1 + $0x48] sm:$0xff]
  %v39 = vld [vmem:[%s1 + $0x50] sm:$0xff]
  %v40 = vld [vmem:[%s1 + $0x58] sm:$0xff]
  %v41 = vld [vmem:[%s1 + $0x60] sm:$0xff]
  %v42 = vld [vmem:[%s1 + $0x68] sm:$0xff]
  %v43 = vld [vmem:[%s1 + $0x70] sm:$0xff]
  %v44 = vld [vmem:[%s1 + $0x78] sm:$0xff]
  %v61 = vunpack.c.l.b16 %v29
  %v62 = vunpack.c.h.b16 %v29
  %v63 = vunpack.c.l.b16 %v30
  %v64 = vunpack.c.h.b16 %v30
  %v65 = vunpack.c.l.b16 %v31
  %v66 = vunpack.c.h.b16 %v31
  %v67 = vunpack.c.l.b16 %v32
  %v68 = vunpack.c.h.b16 %v32
  %v69 = vunpack.c.l.b16 %v33
  %v70 = vunpack.c.h.b16 %v33
  %v71 = vunpack.c.l.b16 %v34
  %v72 = vunpack.c.h.b16 %v34
  %v73 = vunpack.c.l.b16 %v35
  %v74 = vunpack.c.h.b16 %v35
  %v75 = vunpack.c.l.b16 %v36
  %v76 = vunpack.c.h.b16 %v36
  %v77 = vunpack.c.l.b16 %v37
  %v78 = vunpack.c.h.b16 %v37
  %v79 = vunpack.c.l.b16 %v38
  %v80 = vunpack.c.h.b16 %v38
  %v81 = vunpack.c.l.b16 %v39
  %v82 = vunpack.c.h.b16 %v39
  %v83 = vunpack.c.l.b16 %v40
  %v84 = vunpack.c.h.b16 %v40
  %v85 = vunpack.c.l.b16 %v41
  %v86 = vunpack.c.h.b16 %v41
  %v87 = vunpack.c.l.b16 %v42
  %v88 = vunpack.c.h.b16 %v42
  %v89 = vunpack.c.l.b16 %v43
  %v90 = vunpack.c.h.b16 %v43
  %v91 = vunpack.c.l.b16 %v44
  %v92 = vunpack.c.h.b16 %v44
  %v93 = vpack.c.b16 %v63, %v61
  %v94 = vpack.c.b16 %v64, %v62
  %v95 = vpack.c.b16 %v67, %v65
  %v96 = vpack.c.b16 %v68, %v66
  %v97 = vpack.c.b16 %v71, %v69
  %v98 = vpack.c.b16 %v72, %v70
  %v99 = vpack.c.b16 %v75, %v73
  %v100 = vpack.c.b16 %v76, %v74
  %v101 = vpack.c.b16 %v79, %v77
  %v102 = vpack.c.b16 %v80, %v78
  %v103 = vpack.c.b16 %v83, %v81
  %v104 = vpack.c.b16 %v84, %v82
  %v105 = vpack.c.b16 %v87, %v85
  %v106 = vpack.c.b16 %v88, %v86
  %v107 = vpack.c.b16 %v91, %v89
  %v108 = vpack.c.b16 %v92, %v90
  %125 = vmatpush.bf16.msra.mxu0 %v107
  %126 = vmatpush.bf16.msra.mxu0 %v105
  %127 = vmatpush.bf16.msra.mxu0 %v103
  %128 = vmatpush.bf16.msra.mxu0 %v101
  %129 = vmatpush.bf16.msra.mxu0 %v99
  %130 = vmatpush.bf16.msra.mxu0 %v97
  %131 = vmatpush.bf16.msra.mxu0 %v95
  %132 = vmatpush.bf16.msra.mxu0 %v93
  %133 = vmatmul.bf16.gmra.mxu0 %v28
  %v134 = vpop.f32.mrf.mxu0
  %v135 = vadd.f32 0.0, %v134
  %v136 = vpop.f32.mrf.mxu0
  %v137 = vadd.f32 0.0, %v136
  %138 = vdwg.mxu0
  %139 = vmatpush.bf16.msra.mxu0 %v108
  %140 = vmatpush.bf16.msra.mxu0 %v106
  %141 = vmatpush.bf16.msra.mxu0 %v104
  %142 = vmatpush.bf16.msra.mxu0 %v102
  %143 = vmatpush.bf16.msra.mxu0 %v100
  %144 = vmatpush.bf16.msra.mxu0 %v98
  %145 = vmatpush.bf16.msra.mxu0 %v96
  %146 = vmatpush.bf16.msra.mxu0 %v94
  %147 = vmatmul.bf16.gmra.mxu0 %v28
  %v148 = vpop.f32.mrf.mxu0
  %v149 = vadd.f32 0.0, %v148
  %v150 = vpop.f32.mrf.mxu0
  %v151 = vadd.f32 0.0, %v150
  %152 = vdwg.mxu0
  %v153 = vadd.f32 %v22, %v135
  %v154 = vadd.f32 %v23, %v149
  %v155 = vadd.f32 %v24, %v137
  %v156 = vadd.f32 %v25, %v151
  %157 = vst [vmem:[#allocation2] sm:$0xff] %v153
  %158 = vst [vmem:[#allocation2 + $0x8] sm:$0xff] %v154
  %159 = vst [vmem:[#allocation2 + $0x10] sm:$0xff] %v155
  %160 = vst [vmem:[#allocation2 + $0x18] sm:$0xff] %v156
  // Predicated region
  $region18: #{bert_forward.16} parent=0 // pred_check
    %p161 = pneg %p14
  $region19: #{bert_forward.16} parent=0 // pred_check_branch
    %163 = sbr.rel (%p161) target = $region21
  $region20: #{bert_forward.16} parent=0 // pred_region
    %v164 = vld [vmem:[#allocation2] sm:$0xff]
    %v165 = vld [vmem:[#allocation2 + $0x8] sm:$0xff]
    %v166 = vld [vmem:[#allocation2 + $0x10] sm:$0xff]
    %v167 = vld [vmem:[#allocation2 + $0x18] sm:$0xff]
    %v168 = vld [vmem:[%s2] sm:$0x3]
    %v170 = vperm.slane %v168, 0
    %v171 = vperm.slane %v168, 1
    %v174 = vadd.f32 %v164, %v170
    %v175 = vadd.f32 %v165, %v171
    %v176 = vadd.f32 %v166, %v170
    %v177 = vadd.f32 %v167, %v171
    %v178 = vmul.f32 %v174, 0.5
    %v179 = vmul.f32 %v175, 0.5
    %v180 = vmul.f32 %v176, 0.5
    %v181 = vmul.f32 %v177, 0.5
    %v182 = vmul.f32 %v174, 0.70710677
    %v183 = vmul.f32 %v175, 0.70710677
    %v184 = vmul.f32 %v176, 0.70710677
    %v185 = vmul.f32 %v177, 0.70710677
    %v186 = vand.u32 2147483647, %v182
    %v187 = vand.u32 2147483647, %v183
    %v188 = vand.u32 2147483647, %v184
    %v189 = vand.u32 2147483647, %v185
    %v190 = vmul.f32 %v186, 0.3275911
    %v191 = vmul.f32 %v187, 0.3275911
    %v192 = vmul.f32 %v188, 0.3275911
    %v193 = vmul.f32 %v189, 0.3275911
    %v194 = vadd.f32 %v190, 1.0
    %v195 = vadd.f32 %v191, 1.0
    %v196 = vadd.f32 %v192, 1.0
    %v197 = vadd.f32 %v193, 1.0
    %v198 = vrcp.pop %v194
    %v199 = vmul.f32 %v194, %v198
    %v200 = vsub.f32 1.0, %v199
    %v201 = vmul.f32 %v198, %v200
    %v202 = vadd.f32 %v198, %v201
    %vm203 = vweird.f32 %v194
    %vm204 = vweird.f32 %v198
    %vm205 = vmor %vm203, %vm204
    %v206 = vsel %vm205, %v198, %v202
    %v207 = vand.u32 2147483647, %v194
    %vm208 = vcmp.eq.f32.partialorder %v207, 8.507059e+37
    %v209 = vand.u32 %v194, 2147483648
    %v210 = vor.u32 1.1754944e-38, %v209
    %v211 = vsel %vm208, %v210, %v206
    %v212 = vmul.f32 1.0, %v211
    %v213 = vrcp.pop %v195
    %v214 = vmul.f32 %v195, %v213
    %v215 = vsub.f32 1.0, %v214
    %v216 = vmul.f32 %v213, %v215
    %v217 = vadd.f32 %v213, %v216
    %vm218 = vweird.f32 %v195
    %vm219 = vweird.f32 %v213
    %vm220 = vmor %vm218, %vm219
    %v221 = vsel %vm220, %v213, %v217
    %v222 = vand.u32 2147483647, %v195
    %vm223 = vcmp.eq.f32.partialorder %v222, 8.507059e+37
    %v224 = vand.u32 %v195, 2147483648
    %v225 = vor.u32 1.1754944e-38, %v224
    %v226 = vsel %vm223, %v225, %v221
    %v227 = vmul.f32 1.0, %v226
    %v228 = vrcp.pop %v196
    %v229 = vmul.f32 %v196, %v228
    %v230 = vsub.f32 1.0, %v229
    %v231 = vmul.f32 %v228, %v230
    %v232 = vadd.f32 %v228, %v231
    %vm233 = vweird.f32 %v196
    %vm234 = vweird.f32 %v228
    %vm235 = vmor %vm233, %vm234
    %v236 = vsel %vm235, %v228, %v232
    %v237 = vand.u32 2147483647, %v196
    %vm238 = vcmp.eq.f32.partialorder %v237, 8.507059e+37
    %v239 = vand.u32 %v196, 2147483648
    %v240 = vor.u32 1.1754944e-38, %v239
    %v241 = vsel %vm238, %v240, %v236
    %v242 = vmul.f32 1.0, %v241
    %v243 = vrcp.pop %v197
    %v244 = vmul.f32 %v197, %v243
    %v245 = vsub.f32 1.0, %v244
    %v246 = vmul.f32 %v243, %v245
    %v247 = vadd.f32 %v243, %v246
    %vm248 = vweird.f32 %v197
    %vm249 = vweird.f32 %v243
    %vm250 = vmor %vm248, %vm249
    %v251 = vsel %vm250, %v243, %v247
    %v252 = vand.u32 2147483647, %v197
    %vm253 = vcmp.eq.f32.partialorder %v252, 8.507059e+37
    %v254 = vand.u32 %v197, 2147483648
    %v255 = vor.u32 1.1754944e-38, %v254
    %v256 = vsel %vm253, %v255, %v251
    %v257 = vmul.f32 1.0, %v256
    %v258 = vmul.f32 %v212, 1.0614054
    %v259 = vmul.f32 %v227, 1.0614054
    %v260 = vmul.f32 %v242, 1.0614054
    %v261 = vmul.f32 %v257, 1.0614054
    %v262 = vadd.f32 %v258, -1.4531521
    %v263 = vadd.f32 %v259, -1.4531521
    %v264 = vadd.f32 %v260, -1.4531521
    %v265 = vadd.f32 %v261, -1.4531521
    %v266 = vmul.f32 %v262, %v212
    %v267 = vmul.f32 %v263, %v227
    %v268 = vmul.f32 %v264, %v242
    %v269 = vmul.f32 %v265, %v257
    %v270 = vadd.f32 %v266, 1.4214138
    %v271 = vadd.f32 %v267, 1.4214138
    %v272 = vadd.f32 %v268, 1.4214138
    %v273 = vadd.f32 %v269, 1.4214138
    %v274 = vmul.f32 %v270, %v212
    %v275 = vmul.f32 %v271, %v227
    %v276 = vmul.f32 %v272, %v242
    %v277 = vmul.f32 %v273, %v257
    %v278 = vadd.f32 %v274, -0.28449672
    %v279 = vadd.f32 %v275, -0.28449672
    %v280 = vadd.f32 %v276, -0.28449672
    %v281 = vadd.f32 %v277, -0.28449672
    %v282 = vmul.f32 %v278, %v212
    %v283 = vmul.f32 %v279, %v227
    %v284 = vmul.f32 %v280, %v242
    %v285 = vmul.f32 %v281, %v257
    %v286 = vadd.f32 %v282, 0.2548296
    %v287 = vadd.f32 %v283, 0.2548296
    %v288 = vadd.f32 %v284, 0.2548296
    %v289 = vadd.f32 %v285, 0.2548296
    %v290 = vmul.f32 %v286, %v212
    %v291 = vmul.f32 %v287, %v227
    %v292 = vmul.f32 %v288, %v242
    %v293 = vmul.f32 %v289, %v257
    %v294 = vsub.f32 0.0, %v186
    %v295 = vsub.f32 0.0, %v187
    %v296 = vsub.f32 0.0, %v188
    %v297 = vsub.f32 0.0, %v189
    %v298 = vmul.f32 %v294, %v186
    %v299 = vmul.f32 %v295, %v187
    %v300 = vmul.f32 %v296, %v188
    %v301 = vmul.f32 %v297, %v189
    %v302 = vmul.f32 %v298, 1.442695
    %v303 = vpow.pop %v302
    %v304 = vmul.f32 %v299, 1.442695
    %v305 = vpow.pop %v304
    %v306 = vmul.f32 %v300, 1.442695
    %v307 = vpow.pop %v306
    %v308 = vmul.f32 %v301, 1.442695
    %v309 = vpow.pop %v308
    %v310 = vmul.f32 %v290, %v303
    %v311 = vmul.f32 %v291, %v305
    %v312 = vmul.f32 %v292, %v307
    %v313 = vmul.f32 %v293, %v309
    %v314 = vsub.f32 1.0, %v310
    %v315 = vsub.f32 1.0, %v311
    %v316 = vsub.f32 1.0, %v312
    %v317 = vsub.f32 1.0, %v313
    %vm318 = vcmp.lt.f32.partialorder %v182, 0.0
    %vm319 = vcmp.lt.f32.partialorder %v183, 0.0
    %vm320 = vcmp.lt.f32.partialorder %v184, 0.0
    %vm321 = vcmp.lt.f32.partialorder %v185, 0.0
    %v322 = vsub.f32 0.0, %v314
    %v323 = vsub.f32 0.0, %v315
    %v324 = vsub.f32 0.0, %v316
    %v325 = vsub.f32 0.0, %v317
    %v326 = vsel %vm318, %v322, %v314
    %v327 = vsel %vm319, %v323, %v315
    %v328 = vsel %vm320, %v324, %v316
    %v329 = vsel %vm321, %v325, %v317
    %v330 = vadd.f32 %v326, 1.0
    %v331 = vadd.f32 %v327, 1.0
    %v332 = vadd.f32 %v328, 1.0
    %v333 = vadd.f32 %v329, 1.0
    %v334 = vmul.f32 %v178, %v330
    %v335 = vmul.f32 %v179, %v331
    %v336 = vmul.f32 %v180, %v332
    %v337 = vmul.f32 %v181, %v333
    %v338 = vpack.c.bf16 %v335, %v334
    %v339 = vpack.c.bf16 %v337, %v336
    %340 = vst [vmem:[%s3] sm:$0xff] %v338
    %341 = vst [vmem:[%s3 + $0x8] sm:$0xff] %v339
  $region21: #{bert_forward.16} parent=0 // pred_fallthru
    _
  // Predicated region
  $region22: #{bert_forward.16} parent=0 // pred_check
    _
  $region23: #{bert_forward.16} parent=0 // pred_check_branch
    %343 = sbr.rel (0) target = $region25
  $region24: #{bert_forward.16} parent=0 // pred_region
    _
  $region25: #{bert_forward.16} parent=0 // pred_fallthru
    _
  // Predicated region
  $region26: #{bert_forward.16} parent=0 // pred_check
    _
  $region27: #{bert_forward.16} parent=0 // pred_check_branch
    %345 = sbr.rel (0) target = $region29
  $region28: #{bert_forward.16} parent=0 // pred_region
    _
  $region29: #{bert_forward.16} parent=0 // pred_fallthru
    _

// kernel: bert_forward.17
$region0: #{bert_forward.17}
  #allocation0 [shape = 'u32[]', space=smem, size = 0x4, offset = 0x4, fixed_abs, tag = 'smem constant byte address 0x4 - core index']
  #allocation1 [shape = 'u32[72,128]{1,0:T(1,128)}', space=vmem, size = 0x9000, scoped, tag = 'internal scratch']
  #allocation2 [shape = 'f32[16,128]{1,0:T(8,128)}', space=vmem, size = 0x2000, scoped, tag = 'scratch operand']
  %s0 = inlined_call_operand.vmem [shape: bf16[16,256], index: 0, kind: input, shape index: {}]
  %s1 = inlined_call_operand.vmem [shape: bf16[256,128], index: 1, kind: input, shape index: {}]
  %s2 = inlined_call_operand.vmem [shape: f32[1,128], index: 2, kind: input, shape index: {}]
  %s3 = inlined_call_operand.vmem [shape: f32[16,128], index: 3, kind: input, shape index: {}]
  %s4 = inlined_call_operand.vmem [shape: f32[1,128], index: 4, kind: input, shape index: {}]
  %s5 = inlined_call_operand.vmem [shape: f32[1,128], index: 5, kind: input, shape index: {}]
  %s6 = inlined_call_operand.vmem [shape: f32[16,128], index: 6, kind: output, shape index: {}]
  %s7 = sld [smem:[#allocation0]]
  $region42: #{bert_forward.17} parent=0
    _
  %s9 = ssub.s32 1, %s7
  %s10 = scalar_select 0, %s9, %s7
  // Predicated region
  $region2: #{bert_forward.17} parent=0 // pred_check
    _
  $region3: #{bert_forward.17} parent=0 // pred_check_branch
    %12 = sbr.rel (0) target = $region5
  $region4: #{bert_forward.17} parent=0 // pred_region
    _
  $region5: #{bert_forward.17} parent=0 // pred_fallthru
    _
  // Predicated region
  $region6: #{bert_forward.17} parent=0 // pred_check
    _
  $region7: #{bert_forward.17} parent=0 // pred_check_branch
    %14 = sbr.rel (0) target = $region9
  $region8: #{bert_forward.17} parent=0 // pred_region
    _
  $region9: #{bert_forward.17} parent=0 // pred_fallthru
    _
  // Predicated region
  $region10: #{bert_forward.17} parent=0 // pred_check
    _
  $region11: #{bert_forward.17} parent=0 // pred_check_branch
    %16 = sbr.rel (0) target = $region13
  $region12: #{bert_forward.17} parent=0 // pred_region
    _
  $region13: #{bert_forward.17} parent=0 // pred_fallthru
    _
  // Predicated region
  $region14: #{bert_forward.17} parent=0 // pred_check
    _
  $region15: #{bert_forward.17} parent=0 // pred_check_branch
    %18 = sbr.rel (0) target = $region17
  $region16: #{bert_forward.17} parent=0 // pred_region
    _
  $region17: #{bert_forward.17} parent=0 // pred_fallthru
    _
  // Predicated region
  $region18: #{bert_forward.17} parent=0 // pred_check
    _
  $region19: #{bert_forward.17} parent=0 // pred_check_branch
    %20 = sbr.rel (0) target = $region21
  $region20: #{bert_forward.17} parent=0 // pred_region
    _
  $region21: #{bert_forward.17} parent=0 // pred_fallthru
    _
  // Predicated region
  $region22: #{bert_forward.17} parent=0 // pred_check
    _
  $region23: #{bert_forward.17} parent=0 // pred_check_branch
    %22 = sbr.rel (0) target = $region25
  $region24: #{bert_forward.17} parent=0 // pred_region
    _
  $region25: #{bert_forward.17} parent=0 // pred_fallthru
    _
  %p23 = scmp.eq.s32.totalorder 0, 0
  // Predicated region
  $region26: #{bert_forward.17} parent=0 // pred_check
    %p24 = pneg %p23
  $region27: #{bert_forward.17} parent=0 // pred_check_branch
    %26 = sbr.rel (%p24) target = $region29
  $region28: #{bert_forward.17} parent=0 // pred_region
    %27 = vst [vmem:[#allocation2] sm:$0xff] 0.0
    %28 = vst [vmem:[#allocation2 + $0x8] sm:$0xff] 0.0
  $region29: #{bert_forward.17} parent=0 // pred_fallthru
    _
  %v29 = vld [vmem:[#allocation2] sm:$0xff]
  %v30 = vld [vmem:[#allocation2 + $0x8] sm:$0xff]
  %v31 = vld [vmem:[%s0] sm:$0xff]
  %v32 = vld [vmem:[%s0 + $0x8] sm:$0xff]
  %v33 = vld [vmem:[%s1] sm:$0xf]
  %v34 = vld [vmem:[%s1 + $0x4] sm:$0xf]
  %v35 = vld [vmem:[%s1 + $0x8] sm:$0xf]
  %v36 = vld [vmem:[%s1 + $0xc] sm:$0xf]
  %v37 = vld [vmem:[%s1 + $0x10] sm:$0xf]
  %v38 = vld [vmem:[%s1 + $0x14] sm:$0xf]
  %v39 = vld [vmem:[%s1 + $0x18] sm:$0xf]
  %v40 = vld [vmem:[%s1 + $0x1c] sm:$0xf]
  %v41 = vld [vmem:[%s1 + $0x20] sm:$0xf]
  %v42 = vld [vmem:[%s1 + $0x24] sm:$0xf]
  %v43 = vld [vmem:[%s1 + $0x28] sm:$0xf]
  %v44 = vld [vmem:[%s1 + $0x2c] sm:$0xf]
  %v45 = vld [vmem:[%s1 + $0x30] sm:$0xf]
  %v46 = vld [vmem:[%s1 + $0x34] sm:$0xf]
  %v47 = vld [vmem:[%s1 + $0x38] sm:$0xf]
  %v48 = vld [vmem:[%s1 + $0x3c] sm:$0xf]
  %v49 = vld [vmem:[%s1 + $0x40] sm:$0xf]
  %v50 = vld [vmem:[%s1 + $0x44] sm:$0xf]
  %v51 = vld [vmem:[%s1 + $0x48] sm:$0xf]
  %v52 = vld [vmem:[%s1 + $0x4c] sm:$0xf]
  %v53 = vld [vmem:[%s1 + $0x50] sm:$0xf]
  %v54 = vld [vmem:[%s1 + $0x54] sm:$0xf]
  %v55 = vld [vmem:[%s1 + $0x58] sm:$0xf]
  %v56 = vld [vmem:[%s1 + $0x5c] sm:$0xf]
  %v57 = vld [vmem:[%s1 + $0x60] sm:$0xf]
  %v58 = vld [vmem:[%s1 + $0x64] sm:$0xf]
  %v59 = vld [vmem:[%s1 + $0x68] sm:$0xf]
  %v60 = vld [vmem:[%s1 + $0x6c] sm:$0xf]
  %v61 = vld [vmem:[%s1 + $0x70] sm:$0xf]
  %v62 = vld [vmem:[%s1 + $0x74] sm:$0xf]
  %v63 = vld [vmem:[%s1 + $0x78] sm:$0xf]
  %v64 = vld [vmem:[%s1 + $0x7c] sm:$0xf]
  %v67 = vunpack.c.l.b16 %v31
  %v68 = vunpack.c.h.b16 %v31
  %v69 = vunpack.c.l.b16 %v32
  %v70 = vunpack.c.h.b16 %v32
  %v71 = vpack.c.b16 %v69, %v67
  %v72 = vpack.c.b16 %v70, %v68
  %v107 = vunpack.c.l.b16 %v33
  %v108 = vunpack.c.l.b16 %v34
  %v109 = vunpack.c.l.b16 %v35
  %v110 = vunpack.c.l.b16 %v36
  %v111 = vunpack.c.l.b16 %v37
  %v112 = vunpack.c.l.b16 %v38
  %v113 = vunpack.c.l.b16 %v39
  %v114 = vunpack.c.l.b16 %v40
  %v115 = vunpack.c.l.b16 %v41
  %v116 = vunpack.c.l.b16 %v42
  %v117 = vunpack.c.l.b16 %v43
  %v118 = vunpack.c.l.b16 %v44
  %v119 = vunpack.c.l.b16 %v45
  %v120 = vunpack.c.l.b16 %v46
  %v121 = vunpack.c.l.b16 %v47
  %v122 = vunpack.c.l.b16 %v48
  %v123 = vunpack.c.l.b16 %v49
  %v124 = vunpack.c.l.b16 %v50
  %v125 = vunpack.c.l.b16 %v51
  %v126 = vunpack.c.l.b16 %v52
  %v127 = vunpack.c.l.b16 %v53
  %v128 = vunpack.c.l.b16 %v54
  %v129 = vunpack.c.l.b16 %v55
  %v130 = vunpack.c.l.b16 %v56
  %v131 = vunpack.c.l.b16 %v57
  %v132 = vunpack.c.l.b16 %v58
  %v133 = vunpack.c.l.b16 %v59
  %v134 = vunpack.c.l.b16 %v60
  %v135 = vunpack.c.l.b16 %v61
  %v136 = vunpack.c.l.b16 %v62
  %v137 = vunpack.c.l.b16 %v63
  %v138 = vunpack.c.l.b16 %v64
  %v139 = vpack.c.b16 %v108, %v107
  %v140 = vpack.c.b16 %v110, %v109
  %v141 = vpack.c.b16 %v112, %v111
  %v142 = vpack.c.b16 %v114, %v113
  %v143 = vpack.c.b16 %v116, %v115
  %v144 = vpack.c.b16 %v118, %v117
  %v145 = vpack.c.b16 %v120, %v119
  %v146 = vpack.c.b16 %v122, %v121
  %v147 = vpack.c.b16 %v124, %v123
  %v148 = vpack.c.b16 %v126, %v125
  %v149 = vpack.c.b16 %v128, %v127
  %v150 = vpack.c.b16 %v130, %v129
  %v151 = vpack.c.b16 %v132, %v131
  %v152 = vpack.c.b16 %v134, %v133
  %v153 = vpack.c.b16 %v136, %v135
  %v154 = vpack.c.b16 %v138, %v137
  %171 = vmatpush.bf16.msra.mxu0 %v146
  %172 = vmatpush.bf16.msra.mxu0 %v145
  %173 = vmatpush.bf16.msra.mxu0 %v144
  %174 = vmatpush.bf16.msra.mxu0 %v143
  %175 = vmatpush.bf16.msra.mxu0 %v142
  %176 = vmatpush.bf16.msra.mxu0 %v141
  %177 = vmatpush.bf16.msra.mxu0 %v140
  %178 = vmatpush.bf16.msra.mxu0 %v139
  %179 = vmatmul.bf16.gmra.mxu0 %v71
  %v180 = vpop.f32.mrf.mxu0
  %v181 = vadd.f32 0.0, %v180
  %v182 = vpop.f32.mrf.mxu0
  %v183 = vadd.f32 0.0, %v182
  %184 = vdwg.mxu0
  %185 = vmatpush.bf16.msra.mxu0 %v154
  %186 = vmatpush.bf16.msra.mxu0 %v153
  %187 = vmatpush.bf16.msra.mxu0 %v152
  %188 = vmatpush.bf16.msra.mxu0 %v151
  %189 = vmatpush.bf16.msra.mxu0 %v150
  %190 = vmatpush.bf16.msra.mxu0 %v149
  %191 = vmatpush.bf16.msra.mxu0 %v148
  %192 = vmatpush.bf16.msra.mxu0 %v147
  %193 = vmatmul.bf16.gmra.mxu0 %v72
  %v194 = vpop.f32.mrf.mxu0
  %v195 = vadd.f32 %v181, %v194
  %v196 = vpop.f32.mrf.mxu0
  %v197 = vadd.f32 %v183, %v196
  %198 = vdwg.mxu0
  %v199 = vadd.f32 %v29, %v195
  %v200 = vadd.f32 %v30, %v197
  %201 = vst [vmem:[#allocation2] sm:$0xff] %v199
  %202 = vst [vmem:[#allocation2 + $0x8] sm:$0xff] %v200
  // Predicated region
  $region30: #{bert_forward.17} parent=0 // pred_check
    %p203 = pneg %p23
  $region31: #{bert_forward.17} parent=0 // pred_check_branch
    %205 = sbr.rel (%p203) target = $region33
  $region32: #{bert_forward.17} parent=0 // pred_region
    %v206 = vld [vmem:[#allocation2] sm:$0xff]
    %v207 = vld [vmem:[#allocation2 + $0x8] sm:$0xff]
    %v208 = vld [vmem:[%s2] sm:$0x1]
    %v210 = vperm.slane %v208, 0
    %v212 = vadd.f32 %v206, %v210
    %v213 = vadd.f32 %v207, %v210
    %v214 = vld [vmem:[%s3] sm:$0xff]
    %v215 = vld [vmem:[%s3 + $0x8] sm:$0xff]
    %v216 = vadd.f32 %v212, %v214
    %v217 = vadd.f32 %v213, %v215
    %218 = vadd.xlane.f32.xlu0 %v216
    %v219 = vpop.xlane.xlu0 %218
    %220 = vadd.xlane.f32.xlu0 %v217
    %v221 = vpop.xlane.xlu0 %220
    %v222 = vrcp.pop 128.0
    %v223 = vmul.f32 128.0, %v222
    %v224 = vsub.f32 1.0, %v223
    %v225 = vmul.f32 %v222, %v224
    %v226 = vadd.f32 %v222, %v225
    %vm227 = vweird.f32 %v222
    %v228 = vsel %vm227, %v222, %v226
    %v229 = vmul.f32 %v219, %v228
    %v230 = vmul.f32 %v221, %v228
    %v231 = vsub.f32 %v216, %v229
    %v232 = vsub.f32 %v217, %v230
    %v233 = vmul.f32 %v231, %v231
    %v234 = vmul.f32 %v232, %v232
    %235 = vadd.xlane.f32.xlu0 %v233
    %v236 = vpop.xlane.xlu0 %235
    %237 = vadd.xlane.f32.xlu0 %v234
    %v238 = vpop.xlane.xlu0 %237
    %v239 = vmul.f32 %v236, %v228
    %v240 = vmul.f32 %v238, %v228
    %v241 = vadd.f32 %v239, 1e-12
    %v242 = vadd.f32 %v240, 1e-12
    %v243 = vrsqrt.pop %v241
    %v244 = vmul.f32 %v243, %v241
    %v245 = vmul.f32 %v244, %v243
    %v246 = vmul.f32 0.5, %v245
    %v247 = vsub.f32 1.5, %v246
    %v248 = vmul.f32 %v243, %v247
    %vm249 = vweird.f32 %v241
    %vm250 = vweird.f32 %v243
    %vm251 = vmor %vm249, %vm250
    %v252 = vsel %vm251, %v243, %v248
    %v253 = vrsqrt.pop %v242
    %v254 = vmul.f32 %v253, %v242
    %v255 = vmul.f32 %v254, %v253
    %v256 = vmul.f32 0.5, %v255
    %v257 = vsub.f32 1.5, %v256
    %v258 = vmul.f32 %v253, %v257
    %vm259 = vweird.f32 %v242
    %vm260 = vweird.f32 %v253
    %vm261 = vmor %vm259, %vm260
    %v262 = vsel %vm261, %v253, %v258
    %v263 = vmul.f32 %v231, %v252
    %v264 = vmul.f32 %v232, %v262
    %v265 = vld [vmem:[%s4] sm:$0x1]
    %v267 = vperm.slane %v265, 0
    %v269 = vmul.f32 %v263, %v267
    %v270 = vmul.f32 %v264, %v267
    %v271 = vld [vmem:[%s5] sm:$0x1]
    %v273 = vperm.slane %v271, 0
    %v275 = vadd.f32 %v269, %v273
    %v276 = vadd.f32 %v270, %v273
    %277 = vst [vmem:[%s6] sm:$0xff] %v275
    %278 = vst [vmem:[%s6 + $0x8] sm:$0xff] %v276
  $region33: #{bert_forward.17} parent=0 // pred_fallthru
    _
  // Predicated region
  $region34: #{bert_forward.17} parent=0 // pred_check
    _
  $region35: #{bert_forward.17} parent=0 // pred_check_branch
    %280 = sbr.rel (0) target = $region37
  $region36: #{bert_forward.17} parent=0 // pred_region
    _
  $region37: #{bert_forward.17} parent=0 // pred_fallthru
    _
  // Predicated region
  $region38: #{bert_forward.17} parent=0 // pred_check
    _
  $region39: #{bert_forward.17} parent=0 // pred_check_branch
    %282 = sbr.rel (0) target = $region41
  $region40: #{bert_forward.17} parent=0 // pred_region
    _
  $region41: #{bert_forward.17} parent=0 // pred_fallthru
    _

// kernel: bert_forward.21
$region0: #{bert_forward.21}
  #allocation0 [shape = 'u32[]', space=smem, size = 0x4, offset = 0x4, fixed_abs, tag = 'smem constant byte address 0x4 - core index']
  #allocation1 [shape = 'u32[72,128]{1,0:T(1,128)}', space=vmem, size = 0x9000, scoped, tag = 'internal scratch']
  #allocation2 [shape = 'f32[16,256]{1,0:T(8,128)}', space=vmem, size = 0x4000, scoped, tag = 'scratch operand']
  %s0 = inlined_call_operand.vmem [shape: f32[16,128], index: 0, kind: input, shape index: {}]
  %s1 = inlined_call_operand.hbm [shape: bf16[128,256], index: 1, kind: input, shape index: {}]
  %s2 = inlined_call_operand.vmem [shape: f32[1,256], index: 2, kind: input, shape index: {}]
  %s3 = inlined_call_operand.vmem [shape: bf16[16,256], index: 3, kind: output, shape index: {}]
  %s4 = sld [smem:[#allocation0]]
  $region34: #{bert_forward.21} parent=0
    _
  %s6 = ssub.s32 1, %s4
  %s7 = scalar_select 0, %s6, %s4
  $region1: #{bert_forward.21} parent=0
    #allocation3 [shape = 'u8[65536]{0}', space=vmem, size = 0x10000, scoped, tag = 'input window, operand 1, single buffered']
    #allocation4 [shape = 's32[1]{0}', space=sflag, size = 0x4, scoped, tag = 'scoped memory for bert_forward.21']
    %8 = vsyncpa [#allocation4], 0
    // Predicated region
    $region2: #{bert_forward.21} parent=1 // pred_check
      _
    $region3: #{bert_forward.21} parent=1 // pred_check_branch
      %10 = sbr.rel (0) target = $region5
    $region4: #{bert_forward.21} parent=1 // pred_region
      _
    $region5: #{bert_forward.21} parent=1 // pred_fallthru
      _
    // Predicated region
    $region6: #{bert_forward.21} parent=1 // pred_check
      _
    $region7: #{bert_forward.21} parent=1 // pred_check_branch
      %12 = sbr.rel (0) target = $region9
    $region8: #{bert_forward.21} parent=1 // pred_region
      %14 = vsyncadd [#allocation4], 0
      %s15 = sshll.u32 %s1, 4
      %s16 = int_to_ptr.hbm [resolvable:$true] %s15
      %s17 = sshll.u32 [#allocation3], 4
      %s18 = int_to_ptr.vmem [resolvable:$true] %s17
      %23 = dma.hbm_to_vmem [thread:$0]  %s16, 2048, %s18, [#allocation4], 128, 128, 8
    $region9: #{bert_forward.21} parent=1 // pred_fallthru
      _
    // Predicated region
    $region10: #{bert_forward.21} parent=1 // pred_check
      _
    $region11: #{bert_forward.21} parent=1 // pred_check_branch
      %25 = sbr.rel (0) target = $region13
    $region12: #{bert_forward.21} parent=1 // pred_region
      _
    $region13: #{bert_forward.21} parent=1 // pred_fallthru
      _
    // Predicated region
    $region14: #{bert_forward.21} parent=1 // pred_check
      _
    $region15: #{bert_forward.21} parent=1 // pred_check_branch
      %27 = sbr.rel (0) target = $region17
    $region16: #{bert_forward.21} parent=1 // pred_region
      %29 = dma.done [#allocation4], 2048
    $region17: #{bert_forward.21} parent=1 // pred_fallthru
      _
    %p30 = scmp.eq.s32.totalorder 0, 0
    // Predicated region
    $region18: #{bert_forward.21} parent=1 // pred_check
      %p31 = pneg %p30
    $region19: #{bert_forward.21} parent=1 // pred_check_branch
      %33 = sbr.rel (%p31) target = $region21
    $region20: #{bert_forward.21} parent=1 // pred_region
      %34 = vst [vmem:[#allocation2] sm:$0xff] 0.0
      %35 = vst [vmem:[#allocation2 + $0x8] sm:$0xff] 0.0
      %36 = vst [vmem:[#allocation2 + $0x10] sm:$0xff] 0.0
      %37 = vst [vmem:[#allocation2 + $0x18] sm:$0xff] 0.0
    $region21: #{bert_forward.21} parent=1 // pred_fallthru
      _
    %v38 = vld [vmem:[#allocation2] sm:$0xff]
    %v39 = vld [vmem:[#allocation2 + $0x8] sm:$0xff]
    %v40 = vld [vmem:[#allocation2 + $0x10] sm:$0xff]
    %v41 = vld [vmem:[#allocation2 + $0x18] sm:$0xff]
    %v42 = vld [vmem:[%s0] sm:$0xff]
    %v43 = vld [vmem:[%s0 + $0x8] sm:$0xff]
    %v44 = vpack.c.bf16 %v43, %v42
    %v45 = vld [vmem:[#allocation3] sm:$0xff]
    %v46 = vld [vmem:[#allocation3 + $0x8] sm:$0xff]
    %v47 = vld [vmem:[#allocation3 + $0x10] sm:$0xff]
    %v48 = vld [vmem:[#allocation3 + $0x18] sm:$0xff]
    %v49 = vld [vmem:[#allocation3 + $0x20] sm:$0xff]
    %v50 = vld [vmem:[#allocation3 + $0x28] sm:$0xff]
    %v51 = vld [vmem:[#allocation3 + $0x30] sm:$0xff]
    %v52 = vld [vmem:[#allocation3 + $0x38] sm:$0xff]
    %v53 = vld [vmem:[#allocation3 + $0x40] sm:$0xff]
    %v54 = vld [vmem:[#allocation3 + $0x48] sm:$0xff]
    %v55 = vld [vmem:[#allocation3 + $0x50] sm:$0xff]
    %v56 = vld [vmem:[#allocation3 + $0x58] sm:$0xff]
    %v57 = vld [vmem:[#allocation3 + $0x60] sm:$0xff]
    %v58 = vld [vmem:[#allocation3 + $0x68] sm:$0xff]
    %v59 = vld [vmem:[#allocation3 + $0x70] sm:$0xff]
    %v60 = vld [vmem:[#allocation3 + $0x78] sm:$0xff]
    %v77 = vunpack.c.l.b16 %v45
    %v78 = vunpack.c.h.b16 %v45
    %v79 = vunpack.c.l.b16 %v46
    %v80 = vunpack.c.h.b16 %v46
    %v81 = vunpack.c.l.b16 %v47
    %v82 = vunpack.c.h.b16 %v47
    %v83 = vunpack.c.l.b16 %v48
    %v84 = vunpack.c.h.b16 %v48
    %v85 = vunpack.c.l.b16 %v49
    %v86 = vunpack.c.h.b16 %v49
    %v87 = vunpack.c.l.b16 %v50
    %v88 = vunpack.c.h.b16 %v50
    %v89 = vunpack.c.l.b16 %v51
    %v90 = vunpack.c.h.b16 %v51
    %v91 = vunpack.c.l.b16 %v52
    %v92 = vunpack.c.h.b16 %v52
    %v93 = vunpack.c.l.b16 %v53
    %v94 = vunpack.c.h.b16 %v53
    %v95 = vunpack.c.l.b16 %v54
    %v96 = vunpack.c.h.b16 %v54
    %v97 = vunpack.c.l.b16 %v55
    %v98 = vunpack.c.h.b16 %v55
    %v99 = vunpack.c.l.b16 %v56
    %v100 = vunpack.c.h.b16 %v56
    %v101 = vunpack.c.l.b16 %v57
    %v102 = vunpack.c.h.b16 %v57
    %v103 = vunpack.c.l.b16 %v58
    %v104 = vunpack.c.h.b16 %v58
    %v105 = vunpack.c.l.b16 %v59
    %v106 = vunpack.c.h.b16 %v59
    %v107 = vunpack.c.l.b16 %v60
    %v108 = vunpack.c.h.b16 %v60
    %v109 = vpack.c.b16 %v79, %v77
    %v110 = vpack.c.b16 %v80, %v78
    %v111 = vpack.c.b16 %v83, %v81
    %v112 = vpack.c.b16 %v84, %v82
    %v113 = vpack.c.b16 %v87, %v85
    %v114 = vpack.c.b16 %v88, %v86
    %v115 = vpack.c.b16 %v91, %v89
    %v116 = vpack.c.b16 %v92, %v90
    %v117 = vpack.c.b16 %v95, %v93
    %v118 = vpack.c.b16 %v96, %v94
    %v119 = vpack.c.b16 %v99, %v97
    %v120 = vpack.c.b16 %v100, %v98
    %v121 = vpack.c.b16 %v103, %v101
    %v122 = vpack.c.b16 %v104, %v102
    %v123 = vpack.c.b16 %v107, %v105
    %v124 = vpack.c.b16 %v108, %v106
    %141 = vmatpush.bf16.msra.mxu0 %v123
    %142 = vmatpush.bf16.msra.mxu0 %v121
    %143 = vmatpush.bf16.msra.mxu0 %v119
    %144 = vmatpush.bf16.msra.mxu0 %v117
    %145 = vmatpush.bf16.msra.mxu0 %v115
    %146 = vmatpush.bf16.msra.mxu0 %v113
    %147 = vmatpush.bf16.msra.mxu0 %v111
    %148 = vmatpush.bf16.msra.mxu0 %v109
    %149 = vmatmul.bf16.gmra.mxu0 %v44
    %v150 = vpop.f32.mrf.mxu0
    %v151 = vadd.f32 0.0, %v150
    %v152 = vpop.f32.mrf.mxu0
    %v153 = vadd.f32 0.0, %v152
    %154 = vdwg.mxu0
    %155 = vmatpush.bf16.msra.mxu0 %v124
    %156 = vmatpush.bf16.msra.mxu0 %v122
    %157 = vmatpush.bf16.msra.mxu0 %v120
    %158 = vmatpush.bf16.msra.mxu0 %v118
    %159 = vmatpush.bf16.msra.mxu0 %v116
    %160 = vmatpush.bf16.msra.mxu0 %v114
    %161 = vmatpush.bf16.msra.mxu0 %v112
    %162 = vmatpush.bf16.msra.mxu0 %v110
    %163 = vmatmul.bf16.gmra.mxu0 %v44
    %v164 = vpop.f32.mrf.mxu0
    %v165 = vadd.f32 0.0, %v164
    %v166 = vpop.f32.mrf.mxu0
    %v167 = vadd.f32 0.0, %v166
    %168 = vdwg.mxu0
    %v169 = vadd.f32 %v38, %v151
    %v170 = vadd.f32 %v39, %v165
    %v171 = vadd.f32 %v40, %v153
    %v172 = vadd.f32 %v41, %v167
    %173 = vst [vmem:[#allocation2] sm:$0xff] %v169
    %174 = vst [vmem:[#allocation2 + $0x8] sm:$0xff] %v170
    %175 = vst [vmem:[#allocation2 + $0x10] sm:$0xff] %v171
    %176 = vst [vmem:[#allocation2 + $0x18] sm:$0xff] %v172
    // Predicated region
    $region22: #{bert_forward.21} parent=1 // pred_check
      %p177 = pneg %p30
    $region23: #{bert_forward.21} parent=1 // pred_check_branch
      %179 = sbr.rel (%p177) target = $region25
    $region24: #{bert_forward.21} parent=1 // pred_region
      %v180 = vld [vmem:[#allocation2] sm:$0xff]
      %v181 = vld [vmem:[#allocation2 + $0x8] sm:$0xff]
      %v182 = vld [vmem:[#allocation2 + $0x10] sm:$0xff]
      %v183 = vld [vmem:[#allocation2 + $0x18] sm:$0xff]
      %v184 = vld [vmem:[%s2] sm:$0x3]
      %v186 = vperm.slane %v184, 0
      %v187 = vperm.slane %v184, 1
      %v190 = vadd.f32 %v180, %v186
      %v191 = vadd.f32 %v181, %v187
      %v192 = vadd.f32 %v182, %v186
      %v193 = vadd.f32 %v183, %v187
      %v194 = vmul.f32 %v190, 0.5
      %v195 = vmul.f32 %v191, 0.5
      %v196 = vmul.f32 %v192, 0.5
      %v197 = vmul.f32 %v193, 0.5
      %v198 = vmul.f32 %v190, 0.70710677
      %v199 = vmul.f32 %v191, 0.70710677
      %v200 = vmul.f32 %v192, 0.70710677
      %v201 = vmul.f32 %v193, 0.70710677
      %v202 = vand.u32 2147483647, %v198
      %v203 = vand.u32 2147483647, %v199
      %v204 = vand.u32 2147483647, %v200
      %v205 = vand.u32 2147483647, %v201
      %v206 = vmul.f32 %v202, 0.3275911
      %v207 = vmul.f32 %v203, 0.3275911
      %v208 = vmul.f32 %v204, 0.3275911
      %v209 = vmul.f32 %v205, 0.3275911
      %v210 = vadd.f32 %v206, 1.0
      %v211 = vadd.f32 %v207, 1.0
      %v212 = vadd.f32 %v208, 1.0
      %v213 = vadd.f32 %v209, 1.0
      %v214 = vrcp.pop %v210
      %v215 = vmul.f32 %v210, %v214
      %v216 = vsub.f32 1.0, %v215
      %v217 = vmul.f32 %v214, %v216
      %v218 = vadd.f32 %v214, %v217
      %vm219 = vweird.f32 %v210
      %vm220 = vweird.f32 %v214
      %vm221 = vmor %vm219, %vm220
      %v222 = vsel %vm221, %v214, %v218
      %v223 = vand.u32 2147483647, %v210
      %vm224 = vcmp.eq.f32.partialorder %v223, 8.507059e+37
      %v225 = vand.u32 %v210, 2147483648
      %v226 = vor.u32 1.1754944e-38, %v225
      %v227 = vsel %vm224, %v226, %v222
      %v228 = vmul.f32 1.0, %v227
      %v229 = vrcp.pop %v211
      %v230 = vmul.f32 %v211, %v229
      %v231 = vsub.f32 1.0, %v230
      %v232 = vmul.f32 %v229, %v231
      %v233 = vadd.f32 %v229, %v232
      %vm234 = vweird.f32 %v211
      %vm235 = vweird.f32 %v229
      %vm236 = vmor %vm234, %vm235
      %v237 = vsel %vm236, %v229, %v233
      %v238 = vand.u32 2147483647, %v211
      %vm239 = vcmp.eq.f32.partialorder %v238, 8.507059e+37
      %v240 = vand.u32 %v211, 2147483648
      %v241 = vor.u32 1.1754944e-38, %v240
      %v242 = vsel %vm239, %v241, %v237
      %v243 = vmul.f32 1.0, %v242
      %v244 = vrcp.pop %v212
      %v245 = vmul.f32 %v212, %v244
      %v246 = vsub.f32 1.0, %v245
      %v247 = vmul.f32 %v244, %v246
      %v248 = vadd.f32 %v244, %v247
      %vm249 = vweird.f32 %v212
      %vm250 = vweird.f32 %v244
      %vm251 = vmor %vm249, %vm250
      %v252 = vsel %vm251, %v244, %v248
      %v253 = vand.u32 2147483647, %v212
      %vm254 = vcmp.eq.f32.partialorder %v253, 8.507059e+37
      %v255 = vand.u32 %v212, 2147483648
      %v256 = vor.u32 1.1754944e-38, %v255
      %v257 = vsel %vm254, %v256, %v252
      %v258 = vmul.f32 1.0, %v257
      %v259 = vrcp.pop %v213
      %v260 = vmul.f32 %v213, %v259
      %v261 = vsub.f32 1.0, %v260
      %v262 = vmul.f32 %v259, %v261
      %v263 = vadd.f32 %v259, %v262
      %vm264 = vweird.f32 %v213
      %vm265 = vweird.f32 %v259
      %vm266 = vmor %vm264, %vm265
      %v267 = vsel %vm266, %v259, %v263
      %v268 = vand.u32 2147483647, %v213
      %vm269 = vcmp.eq.f32.partialorder %v268, 8.507059e+37
      %v270 = vand.u32 %v213, 2147483648
      %v271 = vor.u32 1.1754944e-38, %v270
      %v272 = vsel %vm269, %v271, %v267
      %v273 = vmul.f32 1.0, %v272
      %v274 = vmul.f32 %v228, 1.0614054
      %v275 = vmul.f32 %v243, 1.0614054
      %v276 = vmul.f32 %v258, 1.0614054
      %v277 = vmul.f32 %v273, 1.0614054
      %v278 = vadd.f32 %v274, -1.4531521
      %v279 = vadd.f32 %v275, -1.4531521
      %v280 = vadd.f32 %v276, -1.4531521
      %v281 = vadd.f32 %v277, -1.4531521
      %v282 = vmul.f32 %v278, %v228
      %v283 = vmul.f32 %v279, %v243
      %v284 = vmul.f32 %v280, %v258
      %v285 = vmul.f32 %v281, %v273
      %v286 = vadd.f32 %v282, 1.4214138
      %v287 = vadd.f32 %v283, 1.4214138
      %v288 = vadd.f32 %v284, 1.4214138
      %v289 = vadd.f32 %v285, 1.4214138
      %v290 = vmul.f32 %v286, %v228
      %v291 = vmul.f32 %v287, %v243
      %v292 = vmul.f32 %v288, %v258
      %v293 = vmul.f32 %v289, %v273
      %v294 = vadd.f32 %v290, -0.28449672
      %v295 = vadd.f32 %v291, -0.28449672
      %v296 = vadd.f32 %v292, -0.28449672
      %v297 = vadd.f32 %v293, -0.28449672
      %v298 = vmul.f32 %v294, %v228
      %v299 = vmul.f32 %v295, %v243
      %v300 = vmul.f32 %v296, %v258
      %v301 = vmul.f32 %v297, %v273
      %v302 = vadd.f32 %v298, 0.2548296
      %v303 = vadd.f32 %v299, 0.2548296
      %v304 = vadd.f32 %v300, 0.2548296
      %v305 = vadd.f32 %v301, 0.2548296
      %v306 = vmul.f32 %v302, %v228
      %v307 = vmul.f32 %v303, %v243
      %v308 = vmul.f32 %v304, %v258
      %v309 = vmul.f32 %v305, %v273
      %v310 = vsub.f32 0.0, %v202
      %v311 = vsub.f32 0.0, %v203
      %v312 = vsub.f32 0.0, %v204
      %v313 = vsub.f32 0.0, %v205
      %v314 = vmul.f32 %v310, %v202
      %v315 = vmul.f32 %v311, %v203
      %v316 = vmul.f32 %v312, %v204
      %v317 = vmul.f32 %v313, %v205
      %v318 = vmul.f32 %v314, 1.442695
      %v319 = vpow.pop %v318
      %v320 = vmul.f32 %v315, 1.442695
      %v321 = vpow.pop %v320
      %v322 = vmul.f32 %v316, 1.442695
      %v323 = vpow.pop %v322
      %v324 = vmul.f32 %v317, 1.442695
      %v325 = vpow.pop %v324
      %v326 = vmul.f32 %v306, %v319
      %v327 = vmul.f32 %v307, %v321
      %v328 = vmul.f32 %v308, %v323
      %v329 = vmul.f32 %v309, %v325
      %v330 = vsub.f32 1.0, %v326
      %v331 = vsub.f32 1.0, %v327
      %v332 = vsub.f32 1.0, %v328
      %v333 = vsub.f32 1.0, %v329
      %vm334 = vcmp.lt.f32.partialorder %v198, 0.0
      %vm335 = vcmp.lt.f32.partialorder %v199, 0.0
      %vm336 = vcmp.lt.f32.partialorder %v200, 0.0
      %vm337 = vcmp.lt.f32.partialorder %v201, 0.0
      %v338 = vsub.f32 0.0, %v330
      %v339 = vsub.f32 0.0, %v331
      %v340 = vsub.f32 0.0, %v332
      %v341 = vsub.f32 0.0, %v333
      %v342 = vsel %vm334, %v338, %v330
      %v343 = vsel %vm335, %v339, %v331
      %v344 = vsel %vm336, %v340, %v332
      %v345 = vsel %vm337, %v341, %v333
      %v346 = vadd.f32 %v342, 1.0
      %v347 = vadd.f32 %v343, 1.0
      %v348 = vadd.f32 %v344, 1.0
      %v349 = vadd.f32 %v345, 1.0
      %v350 = vmul.f32 %v194, %v346
      %v351 = vmul.f32 %v195, %v347
      %v352 = vmul.f32 %v196, %v348
      %v353 = vmul.f32 %v197, %v349
      %v354 = vpack.c.bf16 %v351, %v350
      %v355 = vpack.c.bf16 %v353, %v352
      %356 = vst [vmem:[%s3] sm:$0xff] %v354
      %357 = vst [vmem:[%s3 + $0x8] sm:$0xff] %v355
    $region25: #{bert_forward.21} parent=1 // pred_fallthru
      _
    // Predicated region
    $region26: #{bert_forward.21} parent=1 // pred_check
      _
    $region27: #{bert_forward.21} parent=1 // pred_check_branch
      %359 = sbr.rel (0) target = $region29
    $region28: #{bert_forward.21} parent=1 // pred_region
      _
    $region29: #{bert_forward.21} parent=1 // pred_fallthru
      _
    // Predicated region
    $region30: #{bert_forward.21} parent=1 // pred_check
      _
    $region31: #{bert_forward.21} parent=1 // pred_check_branch
      %361 = sbr.rel (0) target = $region33
    $region32: #{bert_forward.21} parent=1 // pred_region
      _
    $region33: #{bert_forward.21} parent=1 // pred_fallthru
      _
    %362 = vsyncpa [#allocation4], 1

// kernel: bert_forward.23
$region0: #{bert_forward.23}
  #allocation0 [shape = 'u32[]', space=smem, size = 0x4, offset = 0x4, fixed_abs, tag = 'smem constant byte address 0x4 - core index']
  #allocation1 [shape = 'u32[72,128]{1,0:T(1,128)}', space=vmem, size = 0x9000, scoped, tag = 'internal scratch']
  #allocation2 [shape = 'f32[2,128]{1,0:T(2,128)}', space=vmem, size = 0x400, scoped, tag = 'scratch operand']
  %s0 = inlined_call_operand.vmem [shape: f32[2,128], index: 0, kind: input, shape index: {}]
  %s1 = inlined_call_operand.hbm [shape: bf16[128,128], index: 1, kind: input, shape index: {}]
  %s2 = inlined_call_operand.vmem [shape: f32[1,128], index: 2, kind: input, shape index: {}]
  %s3 = inlined_call_operand.hbm [shape: f32[2,128], index: 3, kind: output, shape index: {}]
  %s4 = sld [smem:[#allocation0]]
  $region34: #{bert_forward.23} parent=0
    _
  %s6 = ssub.s32 1, %s4
  %s7 = scalar_select 0, %s6, %s4
  $region1: #{bert_forward.23} parent=0
    #allocation3 [shape = 'u8[32768]{0}', space=vmem, size = 0x8000, scoped, tag = 'input window, operand 1, single buffered']
    #allocation4 [shape = 's32[1]{0}', space=sflag, size = 0x4, scoped, tag = 'scoped memory for bert_forward.23']
    #allocation5 [shape = 's32[1]{0}', space=sflag, size = 0x4, scoped, tag = 'scoped memory for bert_forward.23']
    #allocation6 [shape = 'u8[1024]{0}', space=vmem, size = 0x400, scoped, tag = 'output window, operand 0, single buffered']
    %8 = vsyncpa [#allocation4], 0
    %9 = vsyncpa [#allocation5], 0
    // Predicated region
    $region2: #{bert_forward.23} parent=1 // pred_check
      _
    $region3: #{bert_forward.23} parent=1 // pred_check_branch
      %11 = sbr.rel (0) target = $region5
    $region4: #{bert_forward.23} parent=1 // pred_region
      _
    $region5: #{bert_forward.23} parent=1 // pred_fallthru
      _
    // Predicated region
    $region6: #{bert_forward.23} parent=1 // pred_check
      _
    $region7: #{bert_forward.23} parent=1 // pred_check_branch
      %13 = sbr.rel (0) target = $region9
    $region8: #{bert_forward.23} parent=1 // pred_region
      %15 = vsyncadd [#allocation4], 0
      %s16 = sshll.u32 %s1, 4
      %s17 = int_to_ptr.hbm [resolvable:$true] %s16
      %s18 = sshll.u32 [#allocation3], 4
      %s19 = int_to_ptr.vmem [resolvable:$true] %s18
      %24 = dma.hbm_to_vmem [thread:$0]  %s17, 1024, %s19, [#allocation4], 64, 64, 4
    $region9: #{bert_forward.23} parent=1 // pred_fallthru
      _
    // Predicated region
    $region10: #{bert_forward.23} parent=1 // pred_check
      _
    $region11: #{bert_forward.23} parent=1 // pred_check_branch
      %26 = sbr.rel (0) target = $region13
    $region12: #{bert_forward.23} parent=1 // pred_region
      _
    $region13: #{bert_forward.23} parent=1 // pred_fallthru
      _
    // Predicated region
    $region14: #{bert_forward.23} parent=1 // pred_check
      _
    $region15: #{bert_forward.23} parent=1 // pred_check_branch
      %28 = sbr.rel (0) target = $region17
    $region16: #{bert_forward.23} parent=1 // pred_region
      %30 = dma.done [#allocation4], 1024
    $region17: #{bert_forward.23} parent=1 // pred_fallthru
      _
    %p31 = scmp.eq.s32.totalorder 0, 0
    // Predicated region
    $region18: #{bert_forward.23} parent=1 // pred_check
      %p32 = pneg %p31
    $region19: #{bert_forward.23} parent=1 // pred_check_branch
      %34 = sbr.rel (%p32) target = $region21
    $region20: #{bert_forward.23} parent=1 // pred_region
      %35 = vst [vmem:[#allocation2] sm:$0x3] 0.0
    $region21: #{bert_forward.23} parent=1 // pred_fallthru
      _
    %v36 = vld [vmem:[#allocation2] sm:$0x3]
    %v37 = vld [vmem:[%s0] sm:$0x3]
    %v38 = vpack.c.bf16 %v37, %v37
    %v39 = vld [vmem:[#allocation3] sm:$0xf]
    %v40 = vld [vmem:[#allocation3 + $0x4] sm:$0xf]
    %v41 = vld [vmem:[#allocation3 + $0x8] sm:$0xf]
    %v42 = vld [vmem:[#allocation3 + $0xc] sm:$0xf]
    %v43 = vld [vmem:[#allocation3 + $0x10] sm:$0xf]
    %v44 = vld [vmem:[#allocation3 + $0x14] sm:$0xf]
    %v45 = vld [vmem:[#allocation3 + $0x18] sm:$0xf]
    %v46 = vld [vmem:[#allocation3 + $0x1c] sm:$0xf]
    %v47 = vld [vmem:[#allocation3 + $0x20] sm:$0xf]
    %v48 = vld [vmem:[#allocation3 + $0x24] sm:$0xf]
    %v49 = vld [vmem:[#allocation3 + $0x28] sm:$0xf]
    %v50 = vld [vmem:[#allocation3 + $0x2c] sm:$0xf]
    %v51 = vld [vmem:[#allocation3 + $0x30] sm:$0xf]
    %v52 = vld [vmem:[#allocation3 + $0x34] sm:$0xf]
    %v53 = vld [vmem:[#allocation3 + $0x38] sm:$0xf]
    %v54 = vld [vmem:[#allocation3 + $0x3c] sm:$0xf]
    %v71 = vunpack.c.l.b16 %v39
    %v72 = vunpack.c.l.b16 %v40
    %v73 = vunpack.c.l.b16 %v41
    %v74 = vunpack.c.l.b16 %v42
    %v75 = vunpack.c.l.b16 %v43
    %v76 = vunpack.c.l.b16 %v44
    %v77 = vunpack.c.l.b16 %v45
    %v78 = vunpack.c.l.b16 %v46
    %v79 = vunpack.c.l.b16 %v47
    %v80 = vunpack.c.l.b16 %v48
    %v81 = vunpack.c.l.b16 %v49
    %v82 = vunpack.c.l.b16 %v50
    %v83 = vunpack.c.l.b16 %v51
    %v84 = vunpack.c.l.b16 %v52
    %v85 = vunpack.c.l.b16 %v53
    %v86 = vunpack.c.l.b16 %v54
    %v87 = vpack.c.b16 %v72, %v71
    %v88 = vpack.c.b16 %v74, %v73
    %v89 = vpack.c.b16 %v76, %v75
    %v90 = vpack.c.b16 %v78, %v77
    %v91 = vpack.c.b16 %v80, %v79
    %v92 = vpack.c.b16 %v82, %v81
    %v93 = vpack.c.b16 %v84, %v83
    %v94 = vpack.c.b16 %v86, %v85
    %103 = vmatpush.bf16.msra.mxu0 %v94
    %104 = vmatpush.bf16.msra.mxu0 %v93
    %105 = vmatpush.bf16.msra.mxu0 %v92
    %106 = vmatpush.bf16.msra.mxu0 %v91
    %107 = vmatpush.bf16.msra.mxu0 %v90
    %108 = vmatpush.bf16.msra.mxu0 %v89
    %109 = vmatpush.bf16.msra.mxu0 %v88
    %110 = vmatpush.bf16.msra.mxu0 %v87
    %111 = vmatmul.bf16.gmra.mxu0 %v38
    %v112 = vpop.f32.mrf.mxu0
    %v113 = vadd.f32 0.0, %v112
    %v114 = vpop.f32.mrf.mxu0
    %115 = vdwg.mxu0
    %v116 = vadd.f32 %v36, %v113
    %117 = vst [vmem:[#allocation2] sm:$0x3] %v116
    // Predicated region
    $region22: #{bert_forward.23} parent=1 // pred_check
      %p118 = pneg %p31
    $region23: #{bert_forward.23} parent=1 // pred_check_branch
      %120 = sbr.rel (%p118) target = $region25
    $region24: #{bert_forward.23} parent=1 // pred_region
      %v121 = vld [vmem:[#allocation2] sm:$0x3]
      %v122 = vld [vmem:[%s2] sm:$0x1]
      %v124 = vperm.slane %v122, 0
      %v126 = vadd.f32 %v121, %v124
      %v127 = vtanh.pop %v126
      %128 = vst [vmem:[#allocation6] sm:$0x3] %v127
    $region25: #{bert_forward.23} parent=1 // pred_fallthru
      _
    // Predicated region
    $region26: #{bert_forward.23} parent=1 // pred_check
      _
    $region27: #{bert_forward.23} parent=1 // pred_check_branch
      %130 = sbr.rel (0) target = $region29
    $region28: #{bert_forward.23} parent=1 // pred_region
      %132 = vsyncadd [#allocation5], 0
      %s134 = sshll.u32 [#allocation6], 4
      %s135 = int_to_ptr.vmem [resolvable:$true] %s134
      %s136 = sshll.u32 %s3, 4
      %s137 = int_to_ptr.hbm [resolvable:$true] %s136
      %139 = dma.vmem_to_hbm [thread:$0]  %s135, 32, %s137, [#allocation5]
    $region29: #{bert_forward.23} parent=1 // pred_fallthru
      _
    // Predicated region
    $region30: #{bert_forward.23} parent=1 // pred_check
      _
    $region31: #{bert_forward.23} parent=1 // pred_check_branch
      %141 = sbr.rel (0) target = $region33
    $region32: #{bert_forward.23} parent=1 // pred_region
      %143 = dma.done [#allocation5], 32
    $region33: #{bert_forward.23} parent=1 // pred_fallthru
      _
    %144 = vsyncpa [#allocation4], 1
    %145 = vsyncpa [#allocation5], 1

// kernel: bert_forward.22
$region0: #{bert_forward.22}
  #allocation0 [shape = 'u32[]', space=smem, size = 0x4, offset = 0x4, fixed_abs, tag = 'smem constant byte address 0x4 - core index']
  #allocation1 [shape = 'u32[72,128]{1,0:T(1,128)}', space=vmem, size = 0x9000, scoped, tag = 'internal scratch']
  #allocation2 [shape = 'f32[16,128]{1,0:T(8,128)}', space=vmem, size = 0x2000, scoped, tag = 'scratch operand']
  %s0 = inlined_call_operand.vmem [shape: bf16[16,256], index: 0, kind: input, shape index: {}]
  %s1 = inlined_call_operand.hbm [shape: bf16[256,128], index: 1, kind: input, shape index: {}]
  %s2 = inlined_call_operand.vmem [shape: f32[1,128], index: 2, kind: input, shape index: {}]
  %s3 = inlined_call_operand.vmem [shape: f32[16,128], index: 3, kind: input, shape index: {}]
  %s4 = inlined_call_operand.vmem [shape: f32[1,128], index: 4, kind: input, shape index: {}]
  %s5 = inlined_call_operand.vmem [shape: f32[1,128], index: 5, kind: input, shape index: {}]
  %s6 = inlined_call_operand.vmem [shape: f32[16,128], index: 6, kind: output, shape index: {}]
  %s7 = sld [smem:[#allocation0]]
  $region46: #{bert_forward.22} parent=0
    _
  %s9 = ssub.s32 1, %s7
  %s10 = scalar_select 0, %s9, %s7
  $region1: #{bert_forward.22} parent=0
    #allocation3 [shape = 'u8[65536]{0}', space=vmem, size = 0x10000, scoped, tag = 'input window, operand 1, single buffered']
    #allocation4 [shape = 's32[1]{0}', space=sflag, size = 0x4, scoped, tag = 'scoped memory for bert_forward.22']
    %11 = vsyncpa [#allocation4], 0
    // Predicated region
    $region2: #{bert_forward.22} parent=1 // pred_check
      _
    $region3: #{bert_forward.22} parent=1 // pred_check_branch
      %13 = sbr.rel (0) target = $region5
    $region4: #{bert_forward.22} parent=1 // pred_region
      _
    $region5: #{bert_forward.22} parent=1 // pred_fallthru
      _
    // Predicated region
    $region6: #{bert_forward.22} parent=1 // pred_check
      _
    $region7: #{bert_forward.22} parent=1 // pred_check_branch
      %15 = sbr.rel (0) target = $region9
    $region8: #{bert_forward.22} parent=1 // pred_region
      %17 = vsyncadd [#allocation4], 0
      %s18 = sshll.u32 %s1, 4
      %s19 = int_to_ptr.hbm [resolvable:$true] %s18
      %s20 = sshll.u32 [#allocation3], 4
      %s21 = int_to_ptr.vmem [resolvable:$true] %s20
      %26 = dma.hbm_to_vmem [thread:$0]  %s19, 2048, %s21, [#allocation4], 64, 64, 4
    $region9: #{bert_forward.22} parent=1 // pred_fallthru
      _
    // Predicated region
    $region10: #{bert_forward.22} parent=1 // pred_check
      _
    $region11: #{bert_forward.22} parent=1 // pred_check_branch
      %28 = sbr.rel (0) target = $region13
    $region12: #{bert_forward.22} parent=1 // pred_region
      _
    $region13: #{bert_forward.22} parent=1 // pred_fallthru
      _
    // Predicated region
    $region14: #{bert_forward.22} parent=1 // pred_check
      _
    $region15: #{bert_forward.22} parent=1 // pred_check_branch
      %30 = sbr.rel (0) target = $region17
    $region16: #{bert_forward.22} parent=1 // pred_region
      _
    $region17: #{bert_forward.22} parent=1 // pred_fallthru
      _
    // Predicated region
    $region18: #{bert_forward.22} parent=1 // pred_check
      _
    $region19: #{bert_forward.22} parent=1 // pred_check_branch
      %32 = sbr.rel (0) target = $region21
    $region20: #{bert_forward.22} parent=1 // pred_region
      _
    $region21: #{bert_forward.22} parent=1 // pred_fallthru
      _
    // Predicated region
    $region22: #{bert_forward.22} parent=1 // pred_check
      _
    $region23: #{bert_forward.22} parent=1 // pred_check_branch
      %34 = sbr.rel (0) target = $region25
    $region24: #{bert_forward.22} parent=1 // pred_region
      _
    $region25: #{bert_forward.22} parent=1 // pred_fallthru
      _
    // Predicated region
    $region26: #{bert_forward.22} parent=1 // pred_check
      _
    $region27: #{bert_forward.22} parent=1 // pred_check_branch
      %36 = sbr.rel (0) target = $region29
    $region28: #{bert_forward.22} parent=1 // pred_region
      %38 = dma.done [#allocation4], 2048
    $region29: #{bert_forward.22} parent=1 // pred_fallthru
      _
    %p39 = scmp.eq.s32.totalorder 0, 0
    // Predicated region
    $region30: #{bert_forward.22} parent=1 // pred_check
      %p40 = pneg %p39
    $region31: #{bert_forward.22} parent=1 // pred_check_branch
      %42 = sbr.rel (%p40) target = $region33
    $region32: #{bert_forward.22} parent=1 // pred_region
      %43 = vst [vmem:[#allocation2] sm:$0xff] 0.0
      %44 = vst [vmem:[#allocation2 + $0x8] sm:$0xff] 0.0
    $region33: #{bert_forward.22} parent=1 // pred_fallthru
      _
    %v45 = vld [vmem:[#allocation2] sm:$0xff]
    %v46 = vld [vmem:[#allocation2 + $0x8] sm:$0xff]
    %v47 = vld [vmem:[%s0] sm:$0xff]
    %v48 = vld [vmem:[%s0 + $0x8] sm:$0xff]
    %v49 = vld [vmem:[#allocation3] sm:$0xf]
    %v50 = vld [vmem:[#allocation3 + $0x4] sm:$0xf]
    %v51 = vld [vmem:[#allocation3 + $0x8] sm:$0xf]
    %v52 = vld [vmem:[#allocation3 + $0xc] sm:$0xf]
    %v53 = vld [vmem:[#allocation3 + $0x10] sm:$0xf]
    %v54 = vld [vmem:[#allocation3 + $0x14] sm:$0xf]
    %v55 = vld [vmem:[#allocation3 + $0x18] sm:$0xf]
    %v56 = vld [vmem:[#allocation3 + $0x1c] sm:$0xf]
    %v57 = vld [vmem:[#allocation3 + $0x20] sm:$0xf]
    %v58 = vld [vmem:[#allocation3 + $0x24] sm:$0xf]
    %v59 = vld [vmem:[#allocation3 + $0x28] sm:$0xf]
    %v60 = vld [vmem:[#allocation3 + $0x2c] sm:$0xf]
    %v61 = vld [vmem:[#allocation3 + $0x30] sm:$0xf]
    %v62 = vld [vmem:[#allocation3 + $0x34] sm:$0xf]
    %v63 = vld [vmem:[#allocation3 + $0x38] sm:$0xf]
    %v64 = vld [vmem:[#allocation3 + $0x3c] sm:$0xf]
    %v65 = vld [vmem:[#allocation3 + $0x40] sm:$0xf]
    %v66 = vld [vmem:[#allocation3 + $0x44] sm:$0xf]
    %v67 = vld [vmem:[#allocation3 + $0x48] sm:$0xf]
    %v68 = vld [vmem:[#allocation3 + $0x4c] sm:$0xf]
    %v69 = vld [vmem:[#allocation3 + $0x50] sm:$0xf]
    %v70 = vld [vmem:[#allocation3 + $0x54] sm:$0xf]
    %v71 = vld [vmem:[#allocation3 + $0x58] sm:$0xf]
    %v72 = vld [vmem:[#allocation3 + $0x5c] sm:$0xf]
    %v73 = vld [vmem:[#allocation3 + $0x60] sm:$0xf]
    %v74 = vld [vmem:[#allocation3 + $0x64] sm:$0xf]
    %v75 = vld [vmem:[#allocation3 + $0x68] sm:$0xf]
    %v76 = vld [vmem:[#allocation3 + $0x6c] sm:$0xf]
    %v77 = vld [vmem:[#allocation3 + $0x70] sm:$0xf]
    %v78 = vld [vmem:[#allocation3 + $0x74] sm:$0xf]
    %v79 = vld [vmem:[#allocation3 + $0x78] sm:$0xf]
    %v80 = vld [vmem:[#allocation3 + $0x7c] sm:$0xf]
    %v83 = vunpack.c.l.b16 %v47
    %v84 = vunpack.c.h.b16 %v47
    %v85 = vunpack.c.l.b16 %v48
    %v86 = vunpack.c.h.b16 %v48
    %v87 = vpack.c.b16 %v85, %v83
    %v88 = vpack.c.b16 %v86, %v84
    %v123 = vunpack.c.l.b16 %v49
    %v124 = vunpack.c.l.b16 %v50
    %v125 = vunpack.c.l.b16 %v51
    %v126 = vunpack.c.l.b16 %v52
    %v127 = vunpack.c.l.b16 %v53
    %v128 = vunpack.c.l.b16 %v54
    %v129 = vunpack.c.l.b16 %v55
    %v130 = vunpack.c.l.b16 %v56
    %v131 = vunpack.c.l.b16 %v57
    %v132 = vunpack.c.l.b16 %v58
    %v133 = vunpack.c.l.b16 %v59
    %v134 = vunpack.c.l.b16 %v60
    %v135 = vunpack.c.l.b16 %v61
    %v136 = vunpack.c.l.b16 %v62
    %v137 = vunpack.c.l.b16 %v63
    %v138 = vunpack.c.l.b16 %v64
    %v139 = vunpack.c.l.b16 %v65
    %v140 = vunpack.c.l.b16 %v66
    %v141 = vunpack.c.l.b16 %v67
    %v142 = vunpack.c.l.b16 %v68
    %v143 = vunpack.c.l.b16 %v69
    %v144 = vunpack.c.l.b16 %v70
    %v145 = vunpack.c.l.b16 %v71
    %v146 = vunpack.c.l.b16 %v72
    %v147 = vunpack.c.l.b16 %v73
    %v148 = vunpack.c.l.b16 %v74
    %v149 = vunpack.c.l.b16 %v75
    %v150 = vunpack.c.l.b16 %v76
    %v151 = vunpack.c.l.b16 %v77
    %v152 = vunpack.c.l.b16 %v78
    %v153 = vunpack.c.l.b16 %v79
    %v154 = vunpack.c.l.b16 %v80
    %v155 = vpack.c.b16 %v124, %v123
    %v156 = vpack.c.b16 %v126, %v125
    %v157 = vpack.c.b16 %v128, %v127
    %v158 = vpack.c.b16 %v130, %v129
    %v159 = vpack.c.b16 %v132, %v131
    %v160 = vpack.c.b16 %v134, %v133
    %v161 = vpack.c.b16 %v136, %v135
    %v162 = vpack.c.b16 %v138, %v137
    %v163 = vpack.c.b16 %v140, %v139
    %v164 = vpack.c.b16 %v142, %v141
    %v165 = vpack.c.b16 %v144, %v143
    %v166 = vpack.c.b16 %v146, %v145
    %v167 = vpack.c.b16 %v148, %v147
    %v168 = vpack.c.b16 %v150, %v149
    %v169 = vpack.c.b16 %v152, %v151
    %v170 = vpack.c.b16 %v154, %v153
    %187 = vmatpush.bf16.msra.mxu0 %v162
    %188 = vmatpush.bf16.msra.mxu0 %v161
    %189 = vmatpush.bf16.msra.mxu0 %v160
    %190 = vmatpush.bf16.msra.mxu0 %v159
    %191 = vmatpush.bf16.msra.mxu0 %v158
    %192 = vmatpush.bf16.msra.mxu0 %v157
    %193 = vmatpush.bf16.msra.mxu0 %v156
    %194 = vmatpush.bf16.msra.mxu0 %v155
    %195 = vmatmul.bf16.gmra.mxu0 %v87
    %v196 = vpop.f32.mrf.mxu0
    %v197 = vadd.f32 0.0, %v196
    %v198 = vpop.f32.mrf.mxu0
    %v199 = vadd.f32 0.0, %v198
    %200 = vdwg.mxu0
    %201 = vmatpush.bf16.msra.mxu0 %v170
    %202 = vmatpush.bf16.msra.mxu0 %v169
    %203 = vmatpush.bf16.msra.mxu0 %v168
    %204 = vmatpush.bf16.msra.mxu0 %v167
    %205 = vmatpush.bf16.msra.mxu0 %v166
    %206 = vmatpush.bf16.msra.mxu0 %v165
    %207 = vmatpush.bf16.msra.mxu0 %v164
    %208 = vmatpush.bf16.msra.mxu0 %v163
    %209 = vmatmul.bf16.gmra.mxu0 %v88
    %v210 = vpop.f32.mrf.mxu0
    %v211 = vadd.f32 %v197, %v210
    %v212 = vpop.f32.mrf.mxu0
    %v213 = vadd.f32 %v199, %v212
    %214 = vdwg.mxu0
    %v215 = vadd.f32 %v45, %v211
    %v216 = vadd.f32 %v46, %v213
    %217 = vst [vmem:[#allocation2] sm:$0xff] %v215
    %218 = vst [vmem:[#allocation2 + $0x8] sm:$0xff] %v216
    // Predicated region
    $region34: #{bert_forward.22} parent=1 // pred_check
      %p219 = pneg %p39
    $region35: #{bert_forward.22} parent=1 // pred_check_branch
      %221 = sbr.rel (%p219) target = $region37
    $region36: #{bert_forward.22} parent=1 // pred_region
      %v222 = vld [vmem:[#allocation2] sm:$0xff]
      %v223 = vld [vmem:[#allocation2 + $0x8] sm:$0xff]
      %v224 = vld [vmem:[%s2] sm:$0x1]
      %v226 = vperm.slane %v224, 0
      %v228 = vadd.f32 %v222, %v226
      %v229 = vadd.f32 %v223, %v226
      %v230 = vld [vmem:[%s3] sm:$0xff]
      %v231 = vld [vmem:[%s3 + $0x8] sm:$0xff]
      %v232 = vadd.f32 %v228, %v230
      %v233 = vadd.f32 %v229, %v231
      %234 = vadd.xlane.f32.xlu0 %v232
      %v235 = vpop.xlane.xlu0 %234
      %236 = vadd.xlane.f32.xlu0 %v233
      %v237 = vpop.xlane.xlu0 %236
      %v238 = vrcp.pop 128.0
      %v239 = vmul.f32 128.0, %v238
      %v240 = vsub.f32 1.0, %v239
      %v241 = vmul.f32 %v238, %v240
      %v242 = vadd.f32 %v238, %v241
      %vm243 = vweird.f32 %v238
      %v244 = vsel %vm243, %v238, %v242
      %v245 = vmul.f32 %v235, %v244
      %v246 = vmul.f32 %v237, %v244
      %v247 = vsub.f32 %v232, %v245
      %v248 = vsub.f32 %v233, %v246
      %v249 = vmul.f32 %v247, %v247
      %v250 = vmul.f32 %v248, %v248
      %251 = vadd.xlane.f32.xlu0 %v249
      %v252 = vpop.xlane.xlu0 %251
      %253 = vadd.xlane.f32.xlu0 %v250
      %v254 = vpop.xlane.xlu0 %253
      %v255 = vmul.f32 %v252, %v244
      %v256 = vmul.f32 %v254, %v244
      %v257 = vadd.f32 %v255, 1e-12
      %v258 = vadd.f32 %v256, 1e-12
      %v259 = vrsqrt.pop %v257
      %v260 = vmul.f32 %v259, %v257
      %v261 = vmul.f32 %v260, %v259
      %v262 = vmul.f32 0.5, %v261
      %v263 = vsub.f32 1.5, %v262
      %v264 = vmul.f32 %v259, %v263
      %vm265 = vweird.f32 %v257
      %vm266 = vweird.f32 %v259
      %vm267 = vmor %vm265, %vm266
      %v268 = vsel %vm267, %v259, %v264
      %v269 = vrsqrt.pop %v258
      %v270 = vmul.f32 %v269, %v258
      %v271 = vmul.f32 %v270, %v269
      %v272 = vmul.f32 0.5, %v271
      %v273 = vsub.f32 1.5, %v272
      %v274 = vmul.f32 %v269, %v273
      %vm275 = vweird.f32 %v258
      %vm276 = vweird.f32 %v269
      %vm277 = vmor %vm275, %vm276
      %v278 = vsel %vm277, %v269, %v274
      %v279 = vmul.f32 %v247, %v268
      %v280 = vmul.f32 %v248, %v278
      %v281 = vld [vmem:[%s4] sm:$0x1]
      %v283 = vperm.slane %v281, 0
      %v285 = vmul.f32 %v279, %v283
      %v286 = vmul.f32 %v280, %v283
      %v287 = vld [vmem:[%s5] sm:$0x1]
      %v289 = vperm.slane %v287, 0
      %v291 = vadd.f32 %v285, %v289
      %v292 = vadd.f32 %v286, %v289
      %293 = vst [vmem:[%s6] sm:$0xff] %v291
      %294 = vst [vmem:[%s6 + $0x8] sm:$0xff] %v292
    $region37: #{bert_forward.22} parent=1 // pred_fallthru
      _
    // Predicated region
    $region38: #{bert_forward.22} parent=1 // pred_check
      _
    $region39: #{bert_forward.22} parent=1 // pred_check_branch
      %296 = sbr.rel (0) target = $region41
    $region40: #{bert_forward.22} parent=1 // pred_region
      _
    $region41: #{bert_forward.22} parent=1 // pred_fallthru
      _
    // Predicated region
    $region42: #{bert_forward.22} parent=1 // pred_check
      _
    $region43: #{bert_forward.22} parent=1 // pred_check_branch
      %298 = sbr.rel (0) target = $region45
    $region44: #{bert_forward.22} parent=1 // pred_region
      _
    $region45: #{bert_forward.22} parent=1 // pred_fallthru
      _
    %299 = vsyncpa [#allocation4], 1

</llo_original>
